<compile_context>
chip_gen: v7x
topology: tpu7x:2x2x1
jax: 0.10.0
libtpu: 0.0.40
codegen_flags: <defaults>
</compile_context>

<pallas_src>
import math

import jax
import jax.numpy as jnp
from jax import lax
from jax.experimental import pallas as pl
from jax.experimental.pallas import tpu as pltpu

EPS = 1e-8
LN_EPS = 1e-5                       # nn.LayerNorm default eps
SINH_MAX = math.asinh(2 ** 15)
MIN_RADIUS = 0.1
ENTAIL_WEIGHT = 0.2
CURV_MIN = math.log(1.0 / 10.0)
CURV_MAX = math.log(1.0 * 10.0)
PROJ_DIM = 256                      # ProjectionHead default projection_dim
OUTPUT_DIM = 512                    # HyperBolic output_dim (used for alpha init)


# ----------------------------------------------------------------------------- elementwise helpers
def _erf(x):
    # Abramowitz & Stegun 7.1.26 rational approximation, |abs err| <= 1.5e-7.
    # Stays on primitives guaranteed to lower in Mosaic (exp, mul, add, abs, where).
    a1, a2, a3, a4, a5 = (0.254829592, -0.284496736, 1.421413741,
                          -1.453152027, 1.061405429)
    p = 0.3275911
    s = jnp.where(x < 0.0, -1.0, 1.0)
    ax = jnp.abs(x)
    t = 1.0 / (1.0 + p * ax)
    poly = ((((a5 * t + a4) * t + a3) * t + a2) * t + a1) * t
    return s * (1.0 - poly * jnp.exp(-ax * ax))


def _gelu_exact(x):
    # nn.GELU() default (erf-based) gelu.
    return 0.5 * x * (1.0 + _erf(x * (1.0 / math.sqrt(2.0))))


def _acos(x):
    # Abramowitz & Stegun 4.4.46: acos(y) ~= sqrt(1-y)*poly(y) for y in [0,1], |err| <= 2e-8.
    # Negative inputs via acos(x) = pi - acos(-x).  Only sqrt/mul/add/where -> lowers on Mosaic.
    ax = jnp.abs(x)
    p = -0.0012624911
    for c in (0.0066700901, -0.0170881256, 0.0308918810,
              -0.0501743046, 0.0889789874, -0.2145988016, 1.5707963050):
        p = p * ax + c
    r = jnp.sqrt(jnp.maximum(1.0 - ax, 0.0)) * p
    return jnp.where(x < 0.0, math.pi - r, r)


def _asin(x):
    return 0.5 * math.pi - _acos(x)


# ------------------------------------------------------------------ fused forward kernel
def fused_hyperbolic_kernel(scal_ref, img_emb_ref, txt_emb_ref,
                            iw1_ref, ib1_ref, iw2_ref, ib2_ref, ig_ref, ibt_ref,
                            tw1_ref, tb1_ref, tw2_ref, tb2_ref, tg_ref, tbt_ref,
                            loss_ref):
    curv = scal_ref[0]          # exp(clamped curv)
    exp_valpha = scal_ref[1]    # exp(clamped visual_alpha)
    exp_talpha = scal_ref[2]    # exp(clamped textual_alpha)
    scale = scal_ref[3]         # exp(clamped logit_scale)
    sqrt_c = jnp.sqrt(curv)

    # --------------------------- ProjectionHead (shared body, bf16 matmuls, f32 everything else)
    def proj_head(x_bf16, w1_ref, b1_ref, w2_ref, b2_ref, g_ref, beta_ref):
        projected = jnp.dot(x_bf16, w1_ref[...],
                            preferred_element_type=jnp.float32) + b1_ref[...]   # (B, P) f32
        h = _gelu_exact(projected)
        h = jnp.dot(h.astype(jnp.bfloat16), w2_ref[...],
                    preferred_element_type=jnp.float32) + b2_ref[...]
        # TODO(synk): nn.Dropout(0.1) treated as identity (inference semantics).
        h = h + projected                      # residual kept in vregs, no intermediate VMEM store
        mu = jnp.mean(h, axis=-1, keepdims=True)
        var = jnp.mean((h - mu) * (h - mu), axis=-1, keepdims=True)
        y = (h - mu) * lax.rsqrt(var + LN_EPS)
        return y * g_ref[...] + beta_ref[...]

    img_proj = proj_head(img_emb_ref[...], iw1_ref, ib1_ref, iw2_ref, ib2_ref, ig_ref, ibt_ref)
    txt_proj = proj_head(txt_emb_ref[...], tw1_ref, tb1_ref, tw2_ref, tb2_ref, tg_ref, tbt_ref)

    img = img_proj * exp_valpha               # (B, P)
    txt = txt_proj * exp_talpha               # (B, P)
    B = img.shape[0]

    # --------------------------- exp_map0: EUP work on (B,1) columns, cancellation-safe sinh
    def exp_map0(v):
        rc_xnorm = sqrt_c * jnp.sqrt(jnp.sum(v * v, axis=-1, keepdims=True))    # (B,1)
        sinh_in = jnp.clip(rc_xnorm, EPS, SINH_MAX)
        # exact exp form for x >= 1e-3; Taylor series below (avoids e - 1/e cancellation,
        # factor -> 1 as ||v|| -> 0, matching torch.sinh behaviour). Exact divisions only:
        # these are (B,1) columns, so the EUP/VPU cost is negligible.
        x_big = jnp.maximum(sinh_in, 1e-3)
        e = jnp.exp(x_big)
        sinh_big = 0.5 * (e - 1.0 / e)
        x2 = sinh_in * sinh_in
        sinh_small = sinh_in * (1.0 + x2 * (1.0 / 6.0 + x2 * (1.0 / 120.0)))
        sinh = jnp.where(sinh_in < 1e-3, sinh_small, sinh_big)
        factor = sinh / jnp.maximum(rc_xnorm, EPS)                               # (B,1)
        return factor * v

    img_h = exp_map0(img)                     # image_features on hyperboloid
    txt_h = exp_map0(txt)                     # text_features on hyperboloid

    # --------------------------- pairwise hyperbolic distance: text (rows) x image (cols)
    x_sq = jnp.sum(txt_h * txt_h, axis=-1, keepdims=True)        # (B,1)
    y_sq = jnp.sum(img_h * img_h, axis=-1, keepdims=True)        # (B,1)
    x_time = jnp.sqrt(1.0 / curv + x_sq)                         # (B,1)
    y_time = jnp.sqrt(1.0 / curv + y_sq)                         # (B,1)

    # real MXU matmul: txt_h @ img_h.T
    xy_space = lax.dot_general(txt_h, img_h, (((1,), (1,)), ((), ())),
                               preferred_element_type=jnp.float32)               # (B,B)
    # K=1 outer product done on the VPU (broadcast multiply), not the MXU
    time_comp = x_time * y_time.reshape(1, B)                                    # (B,B)

    def acosh_dist(z_arg):
        # acosh(z)/sqrt(c), cancellation-safe near z=1: t=z-1, acosh = log(1 + t + sqrt(t*(t+2)))
        z = jnp.maximum(z_arg, 1.0 + EPS)
        t = jnp.maximum(z - 1.0, 0.0)
        return jnp.log(1.0 + (t + jnp.sqrt(t * (t + 2.0)))) / sqrt_c

    logits = -acosh_dist(-curv * (xy_space - time_comp)) * scale                 # (B,B)

    # --------------------------- per-sample (diagonal / cone) quantities
    xy_inner = jnp.sum(txt_h * img_h, axis=-1, keepdims=True)    # (B,1)
    inner_diag = xy_inner - x_time * y_time                      # (B,1)
    diag_logits = -acosh_dist(-curv * inner_diag) * scale        # (B,1) == diag(logits)

    # --------------------------- contrastive CE (labels = arange(B)), diag taken analytically
    m_r = jnp.max(logits, axis=1, keepdims=True)                                 # (B,1)
    lse_r = jnp.log(jnp.sum(jnp.exp(logits - m_r), axis=1, keepdims=True)) + m_r
    m_c = jnp.max(logits, axis=0, keepdims=True)                                 # (1,B)
    lse_c = jnp.log(jnp.sum(jnp.exp(logits - m_c), axis=0, keepdims=True)) + m_c
    mean_diag = jnp.mean(diag_logits)
    contrastive = 0.5 * (jnp.mean(lse_r) + jnp.mean(lse_c)) - mean_diag

    # --------------------------- entailment cone: oxy_angle(text, image) & half_aperture(text)
    c_xyl = curv * inner_diag                                    # (B,1)
    acos_numer = y_time + c_xyl * x_time
    acos_denom = jnp.sqrt(jnp.maximum(c_xyl * c_xyl - 1.0, EPS))
    x_norm = jnp.sqrt(x_sq)
    acos_in = jnp.clip(acos_numer / (x_norm * acos_denom + EPS), -1.0 + EPS, 1.0 - EPS)
    angle = _acos(acos_in)                                       # (B,1)

    asin_in = jnp.clip(2.0 * MIN_RADIUS / (x_norm * sqrt_c + EPS), -1.0 + EPS, 1.0 - EPS)
    aperture = _asin(asin_in)                                    # (B,1)

    entailment = jnp.mean(jnp.maximum(angle - aperture, 0.0))

    total = contrastive + ENTAIL_WEIGHT * entailment
    loss_ref[0, 0] = total                    # scalar SMEM store, no padded VMEM tile


def _cost_estimate(B, img_dim, txt_dim, proj_dim):
    # Advisory hint so XLA can overlap this DMA/launch-bound custom call with neighbors.
    flops = 2 * B * (img_dim * proj_dim + proj_dim * proj_dim
                     + txt_dim * proj_dim + proj_dim * proj_dim
                     + B * proj_dim)
    transcendentals = 4 * B * proj_dim + 2 * B * B + 32 * B
    bytes_accessed = (2 * B * (img_dim + txt_dim)                                   # bf16 embeddings
                      + 2 * (img_dim * proj_dim + txt_dim * proj_dim
                             + 2 * proj_dim * proj_dim)                             # bf16 weights
                      + 4 * (8 * proj_dim)                                          # f32 bias/LN params
                      + 4 * 4 + 4)                                                  # scalars + loss
    return pl.CostEstimate(flops=flops, transcendentals=transcendentals,
                           bytes_accessed=bytes_accessed)


def hyperbolic_fused(scalars, image_emb, text_emb, ip, tp):
    B, img_dim = image_emb.shape
    txt_dim = text_emb.shape[1]
    proj_dim = ip['w1'].shape[1]
    vmem = pl.BlockSpec(memory_space=pltpu.MemorySpace.VMEM)
    smem = pl.BlockSpec(memory_space=pltpu.MemorySpace.SMEM)
    return pl.pallas_call(
        fused_hyperbolic_kernel,
        out_shape=jax.ShapeDtypeStruct((1, 1), jnp.float32),
        in_specs=[smem] + [vmem] * 14,
        out_specs=smem,
        cost_estimate=_cost_estimate(B, img_dim, txt_dim, proj_dim),
        compiler_params=pltpu.CompilerParams(vmem_limit_bytes=32 * 1024 * 1024),
    )(scalars, image_emb, text_emb,
      ip['w1'], ip['b1'], ip['w2'], ip['b2'], ip['gamma'], ip['beta'],
      tp['w1'], tp['b1'], tp['w2'], tp['b2'], tp['gamma'], tp['beta'])


# ------------------------------------------------------------------ parameter init / forward
def init_projection_params(key, emb_dim, proj_dim=PROJ_DIM):
    # Matches nn.Linear default init U(-1/sqrt(fan_in), 1/sqrt(fan_in)).
    # Weights stored (in, out) so the kernel computes x @ W (== PyTorch x @ W.T),
    # and stored in bf16 for MXU throughput / DMA bytes; biases/LN params stay f32.
    k1, k2, k3, k4 = jax.random.split(key, 4)
    lim1 = 1.0 / math.sqrt(emb_dim)
    lim2 = 1.0 / math.sqrt(proj_dim)
    return dict(
        w1=jax.random.uniform(k1, (emb_dim, proj_dim), jnp.float32, -lim1, lim1).astype(jnp.bfloat16),
        b1=jax.random.uniform(k2, (1, proj_dim), jnp.float32, -lim1, lim1),
        w2=jax.random.uniform(k3, (proj_dim, proj_dim), jnp.float32, -lim2, lim2).astype(jnp.bfloat16),
        b2=jax.random.uniform(k4, (1, proj_dim), jnp.float32, -lim2, lim2),
        gamma=jnp.ones((1, proj_dim), jnp.float32),
        beta=jnp.zeros((1, proj_dim), jnp.float32),
    )


@jax.jit
def hyperbolic_forward(image_emb, text_emb, params):
    # Parameter clamping done on .data in the PyTorch forward:
    _curv = jnp.exp(jnp.clip(params['curv'], CURV_MIN, CURV_MAX))
    exp_valpha = jnp.exp(jnp.minimum(params['visual_alpha'], 0.0))
    exp_talpha = jnp.exp(jnp.minimum(params['textual_alpha'], 0.0))
    _scale = jnp.exp(jnp.minimum(params['logit_scale'], 4.6052))
    scalars = jnp.stack([_curv, exp_valpha, exp_talpha, _scale]).astype(jnp.float32)

    # Embeddings are only ever consumed in bf16 by the MXU -> cast before the kernel
    # so the activation DMA moves half the bytes and the kernel does no wide relayout.
    loss = hyperbolic_fused(scalars,
                            image_emb.astype(jnp.bfloat16),
                            text_emb.astype(jnp.bfloat16),
                            params['image_projection'], params['text_projection'])
    return loss[0, 0]


if __name__ == "__main__":
    key = jax.random.PRNGKey(0)
    k_img, k_txt, k_ip, k_tp = jax.random.split(key, 4)
    B = 8  # multiple of 8 (f32 sublane); raise B to amortize launch + weight DMA in real training
    image_emb = jax.random.normal(k_img, (B, 2048), jnp.float32)   # pooled ResNet50 features
    text_emb = jax.random.normal(k_txt, (B, 1024), jnp.float32)    # BERT CLS embeddings

    params = {
        'image_projection': init_projection_params(k_ip, 2048),
        'text_projection': init_projection_params(k_tp, 1024),
        'curv': jnp.log(jnp.asarray(1.0, jnp.float32)),
        'visual_alpha': jnp.log(jnp.asarray(OUTPUT_DIM ** (-0.5), jnp.float32)),
        'textual_alpha': jnp.log(jnp.asarray(OUTPUT_DIM ** (-0.5), jnp.float32)),
        'logit_scale': jnp.log(jnp.asarray(1.0 / 0.07, jnp.float32)),
    }

    loss = hyperbolic_forward(image_emb, text_emb, params)
    jax.block_until_ready(loss)
    assert jnp.isfinite(loss), "loss is not finite"
    print("KERNEL_OK")
</pallas_src>

<mosaic_0001>
module attributes {stable_mosaic.version = 11 : i64} {
  func.func @fused_hyperbolic_kernel(%arg0: memref<4xf32, #tpu.memory_space<smem>>, %arg1: memref<8x2048xbf16, #tpu.memory_space<vmem>>, %arg2: memref<8x1024xbf16, #tpu.memory_space<vmem>>, %arg3: memref<2048x256xbf16, #tpu.memory_space<vmem>>, %arg4: memref<1x256xf32, #tpu.memory_space<vmem>>, %arg5: memref<256x256xbf16, #tpu.memory_space<vmem>>, %arg6: memref<1x256xf32, #tpu.memory_space<vmem>>, %arg7: memref<1x256xf32, #tpu.memory_space<vmem>>, %arg8: memref<1x256xf32, #tpu.memory_space<vmem>>, %arg9: memref<1024x256xbf16, #tpu.memory_space<vmem>>, %arg10: memref<1x256xf32, #tpu.memory_space<vmem>>, %arg11: memref<256x256xbf16, #tpu.memory_space<vmem>>, %arg12: memref<1x256xf32, #tpu.memory_space<vmem>>, %arg13: memref<1x256xf32, #tpu.memory_space<vmem>>, %arg14: memref<1x256xf32, #tpu.memory_space<vmem>>, %arg15: memref<1x1xf32, #tpu.memory_space<smem>>) attributes {dimension_semantics = [], scalar_prefetch = 0 : i64, scratch_operands = 0 : i64, tpu.core_type = #tpu.core_type<tc>} {
    %c0 = arith.constant 0 : index
    %0 = memref.load %arg0[%c0] : memref<4xf32, #tpu.memory_space<smem>>
    %c1 = arith.constant 1 : index
    %1 = memref.load %arg0[%c1] : memref<4xf32, #tpu.memory_space<smem>>
    %c2 = arith.constant 2 : index
    %2 = memref.load %arg0[%c2] : memref<4xf32, #tpu.memory_space<smem>>
    %c3 = arith.constant 3 : index
    %3 = memref.load %arg0[%c3] : memref<4xf32, #tpu.memory_space<smem>>
    %4 = math.sqrt %0 : f32
    %c0_0 = arith.constant 0 : index
    %c0_1 = arith.constant 0 : index
    %5 = vector.load %arg1[%c0_0, %c0_1] : memref<8x2048xbf16, #tpu.memory_space<vmem>>, vector<8x2048xbf16>
    %c0_2 = arith.constant 0 : index
    %c0_3 = arith.constant 0 : index
    %6 = vector.load %arg3[%c0_2, %c0_3] : memref<2048x256xbf16, #tpu.memory_space<vmem>>, vector<2048x256xbf16>
    %cst = arith.constant dense<0.000000e+00> : vector<8x256xf32>
    %7 = tpu.matmul %5, %6, %cst {dimension_numbers = #tpu.dot_dimension_numbers<[1], [0], [0], [1], [0, 0, 1, 1], [], []>} : vector<8x2048xbf16>, vector<2048x256xbf16>, vector<8x256xf32> -> vector<8x256xf32>
    %c0_4 = arith.constant 0 : index
    %c0_5 = arith.constant 0 : index
    %8 = vector.load %arg4[%c0_4, %c0_5] : memref<1x256xf32, #tpu.memory_space<vmem>>, vector<1x256xf32>
    %9 = vector.broadcast %8 : vector<1x256xf32> to vector<8x256xf32>
    %10 = arith.addf %7, %9 : vector<8x256xf32>
    %cst_6 = arith.constant 5.000000e-01 : f32
    %11 = vector.broadcast %cst_6 : f32 to vector<8x256xf32>
    %12 = arith.mulf %11, %10 : vector<8x256xf32>
    %cst_7 = arith.constant 0.707106769 : f32
    %13 = vector.broadcast %cst_7 : f32 to vector<8x256xf32>
    %14 = arith.mulf %10, %13 : vector<8x256xf32>
    %cst_8 = arith.constant 0.000000e+00 : f32
    %15 = vector.broadcast %cst_8 : f32 to vector<8x256xf32>
    %16 = arith.cmpf olt, %14, %15 : vector<8x256xf32>
    %cst_9 = arith.constant -1.000000e+00 : f32
    %cst_10 = arith.constant 1.000000e+00 : f32
    %17 = vector.broadcast %cst_9 : f32 to vector<8x256xf32>
    %18 = vector.broadcast %cst_10 : f32 to vector<8x256xf32>
    %19 = arith.select %16, %17, %18 : vector<8x256xi1>, vector<8x256xf32>
    %20 = math.absf %14 : vector<8x256xf32>
    %cst_11 = arith.constant 0.327591091 : f32
    %21 = vector.broadcast %cst_11 : f32 to vector<8x256xf32>
    %22 = arith.mulf %21, %20 : vector<8x256xf32>
    %cst_12 = arith.constant 1.000000e+00 : f32
    %23 = vector.broadcast %cst_12 : f32 to vector<8x256xf32>
    %24 = arith.addf %23, %22 : vector<8x256xf32>
    %cst_13 = arith.constant 1.000000e+00 : f32
    %25 = vector.broadcast %cst_13 : f32 to vector<8x256xf32>
    %26 = arith.divf %25, %24 : vector<8x256xf32>
    %cst_14 = arith.constant 1.06140542 : f32
    %27 = vector.broadcast %cst_14 : f32 to vector<8x256xf32>
    %28 = arith.mulf %27, %26 : vector<8x256xf32>
    %cst_15 = arith.constant -1.45315206 : f32
    %29 = vector.broadcast %cst_15 : f32 to vector<8x256xf32>
    %30 = arith.addf %28, %29 : vector<8x256xf32>
    %31 = arith.mulf %30, %26 : vector<8x256xf32>
    %cst_16 = arith.constant 1.42141378 : f32
    %32 = vector.broadcast %cst_16 : f32 to vector<8x256xf32>
    %33 = arith.addf %31, %32 : vector<8x256xf32>
    %34 = arith.mulf %33, %26 : vector<8x256xf32>
    %cst_17 = arith.constant -0.284496725 : f32
    %35 = vector.broadcast %cst_17 : f32 to vector<8x256xf32>
    %36 = arith.addf %34, %35 : vector<8x256xf32>
    %37 = arith.mulf %36, %26 : vector<8x256xf32>
    %cst_18 = arith.constant 0.254829586 : f32
    %38 = vector.broadcast %cst_18 : f32 to vector<8x256xf32>
    %39 = arith.addf %37, %38 : vector<8x256xf32>
    %40 = arith.mulf %39, %26 : vector<8x256xf32>
    %cst_19 = arith.constant 0.000000e+00 : f32
    %41 = vector.broadcast %cst_19 : f32 to vector<8x256xf32>
    %42 = arith.subf %41, %20 : vector<8x256xf32>
    %43 = arith.mulf %42, %20 : vector<8x256xf32>
    %44 = math.exp %43 : vector<8x256xf32>
    %45 = arith.mulf %40, %44 : vector<8x256xf32>
    %cst_20 = arith.constant 1.000000e+00 : f32
    %46 = vector.broadcast %cst_20 : f32 to vector<8x256xf32>
    %47 = arith.subf %46, %45 : vector<8x256xf32>
    %48 = arith.mulf %19, %47 : vector<8x256xf32>
    %cst_21 = arith.constant 1.000000e+00 : f32
    %49 = vector.broadcast %cst_21 : f32 to vector<8x256xf32>
    %50 = arith.addf %49, %48 : vector<8x256xf32>
    %51 = arith.mulf %12, %50 : vector<8x256xf32>
    %52 = arith.truncf %51 : vector<8x256xf32> to vector<8x256xbf16>
    %c0_22 = arith.constant 0 : index
    %c0_23 = arith.constant 0 : index
    %53 = vector.load %arg5[%c0_22, %c0_23] : memref<256x256xbf16, #tpu.memory_space<vmem>>, vector<256x256xbf16>
    %cst_24 = arith.constant dense<0.000000e+00> : vector<8x256xf32>
    %54 = tpu.matmul %52, %53, %cst_24 {dimension_numbers = #tpu.dot_dimension_numbers<[1], [0], [0], [1], [0, 0, 1, 1], [], []>} : vector<8x256xbf16>, vector<256x256xbf16>, vector<8x256xf32> -> vector<8x256xf32>
    %c0_25 = arith.constant 0 : index
    %c0_26 = arith.constant 0 : index
    %55 = vector.load %arg6[%c0_25, %c0_26] : memref<1x256xf32, #tpu.memory_space<vmem>>, vector<1x256xf32>
    %56 = vector.broadcast %55 : vector<1x256xf32> to vector<8x256xf32>
    %57 = arith.addf %54, %56 : vector<8x256xf32>
    %58 = arith.addf %57, %10 : vector<8x256xf32>
    %cst_27 = arith.constant dense<0.000000e+00> : vector<8xf32>
    %59 = vector.multi_reduction <add>, %58, %cst_27 [1] : vector<8x256xf32> to vector<8xf32>
    %60 = vector.shape_cast %59 : vector<8xf32> to vector<8x1xf32>
    %cst_28 = arith.constant 2.560000e+02 : f32
    %61 = vector.broadcast %cst_28 : f32 to vector<8x1xf32>
    %62 = arith.divf %60, %61 : vector<8x1xf32>
    %63 = vector.broadcast %62 : vector<8x1xf32> to vector<8x256xf32>
    %64 = arith.subf %58, %63 : vector<8x256xf32>
    %65 = vector.broadcast %62 : vector<8x1xf32> to vector<8x256xf32>
    %66 = arith.subf %58, %65 : vector<8x256xf32>
    %67 = arith.mulf %64, %66 : vector<8x256xf32>
    %cst_29 = arith.constant dense<0.000000e+00> : vector<8xf32>
    %68 = vector.multi_reduction <add>, %67, %cst_29 [1] : vector<8x256xf32> to vector<8xf32>
    %69 = vector.shape_cast %68 : vector<8xf32> to vector<8x1xf32>
    %cst_30 = arith.constant 2.560000e+02 : f32
    %70 = vector.broadcast %cst_30 : f32 to vector<8x1xf32>
    %71 = arith.divf %69, %70 : vector<8x1xf32>
    %72 = vector.broadcast %62 : vector<8x1xf32> to vector<8x256xf32>
    %73 = arith.subf %58, %72 : vector<8x256xf32>
    %cst_31 = arith.constant 9.99999974E-6 : f32
    %74 = vector.broadcast %cst_31 : f32 to vector<8x1xf32>
    %75 = arith.addf %71, %74 : vector<8x1xf32>
    %76 = math.rsqrt %75 : vector<8x1xf32>
    %77 = vector.broadcast %76 : vector<8x1xf32> to vector<8x256xf32>
    %78 = arith.mulf %73, %77 : vector<8x256xf32>
    %c0_32 = arith.constant 0 : index
    %c0_33 = arith.constant 0 : index
    %79 = vector.load %arg7[%c0_32, %c0_33] : memref<1x256xf32, #tpu.memory_space<vmem>>, vector<1x256xf32>
    %80 = vector.broadcast %79 : vector<1x256xf32> to vector<8x256xf32>
    %81 = arith.mulf %78, %80 : vector<8x256xf32>
    %c0_34 = arith.constant 0 : index
    %c0_35 = arith.constant 0 : index
    %82 = vector.load %arg8[%c0_34, %c0_35] : memref<1x256xf32, #tpu.memory_space<vmem>>, vector<1x256xf32>
    %83 = vector.broadcast %82 : vector<1x256xf32> to vector<8x256xf32>
    %84 = arith.addf %81, %83 : vector<8x256xf32>
    %c0_36 = arith.constant 0 : index
    %c0_37 = arith.constant 0 : index
    %85 = vector.load %arg2[%c0_36, %c0_37] : memref<8x1024xbf16, #tpu.memory_space<vmem>>, vector<8x1024xbf16>
    %c0_38 = arith.constant 0 : index
    %c0_39 = arith.constant 0 : index
    %86 = vector.load %arg9[%c0_38, %c0_39] : memref<1024x256xbf16, #tpu.memory_space<vmem>>, vector<1024x256xbf16>
    %cst_40 = arith.constant dense<0.000000e+00> : vector<8x256xf32>
    %87 = tpu.matmul %85, %86, %cst_40 {dimension_numbers = #tpu.dot_dimension_numbers<[1], [0], [0], [1], [0, 0, 1, 1], [], []>} : vector<8x1024xbf16>, vector<1024x256xbf16>, vector<8x256xf32> -> vector<8x256xf32>
    %c0_41 = arith.constant 0 : index
    %c0_42 = arith.constant 0 : index
    %88 = vector.load %arg10[%c0_41, %c0_42] : memref<1x256xf32, #tpu.memory_space<vmem>>, vector<1x256xf32>
    %89 = vector.broadcast %88 : vector<1x256xf32> to vector<8x256xf32>
    %90 = arith.addf %87, %89 : vector<8x256xf32>
    %cst_43 = arith.constant 5.000000e-01 : f32
    %91 = vector.broadcast %cst_43 : f32 to vector<8x256xf32>
    %92 = arith.mulf %91, %90 : vector<8x256xf32>
    %cst_44 = arith.constant 0.707106769 : f32
    %93 = vector.broadcast %cst_44 : f32 to vector<8x256xf32>
    %94 = arith.mulf %90, %93 : vector<8x256xf32>
    %cst_45 = arith.constant 0.000000e+00 : f32
    %95 = vector.broadcast %cst_45 : f32 to vector<8x256xf32>
    %96 = arith.cmpf olt, %94, %95 : vector<8x256xf32>
    %cst_46 = arith.constant -1.000000e+00 : f32
    %cst_47 = arith.constant 1.000000e+00 : f32
    %97 = vector.broadcast %cst_46 : f32 to vector<8x256xf32>
    %98 = vector.broadcast %cst_47 : f32 to vector<8x256xf32>
    %99 = arith.select %96, %97, %98 : vector<8x256xi1>, vector<8x256xf32>
    %100 = math.absf %94 : vector<8x256xf32>
    %cst_48 = arith.constant 0.327591091 : f32
    %101 = vector.broadcast %cst_48 : f32 to vector<8x256xf32>
    %102 = arith.mulf %101, %100 : vector<8x256xf32>
    %cst_49 = arith.constant 1.000000e+00 : f32
    %103 = vector.broadcast %cst_49 : f32 to vector<8x256xf32>
    %104 = arith.addf %103, %102 : vector<8x256xf32>
    %cst_50 = arith.constant 1.000000e+00 : f32
    %105 = vector.broadcast %cst_50 : f32 to vector<8x256xf32>
    %106 = arith.divf %105, %104 : vector<8x256xf32>
    %cst_51 = arith.constant 1.06140542 : f32
    %107 = vector.broadcast %cst_51 : f32 to vector<8x256xf32>
    %108 = arith.mulf %107, %106 : vector<8x256xf32>
    %cst_52 = arith.constant -1.45315206 : f32
    %109 = vector.broadcast %cst_52 : f32 to vector<8x256xf32>
    %110 = arith.addf %108, %109 : vector<8x256xf32>
    %111 = arith.mulf %110, %106 : vector<8x256xf32>
    %cst_53 = arith.constant 1.42141378 : f32
    %112 = vector.broadcast %cst_53 : f32 to vector<8x256xf32>
    %113 = arith.addf %111, %112 : vector<8x256xf32>
    %114 = arith.mulf %113, %106 : vector<8x256xf32>
    %cst_54 = arith.constant -0.284496725 : f32
    %115 = vector.broadcast %cst_54 : f32 to vector<8x256xf32>
    %116 = arith.addf %114, %115 : vector<8x256xf32>
    %117 = arith.mulf %116, %106 : vector<8x256xf32>
    %cst_55 = arith.constant 0.254829586 : f32
    %118 = vector.broadcast %cst_55 : f32 to vector<8x256xf32>
    %119 = arith.addf %117, %118 : vector<8x256xf32>
    %120 = arith.mulf %119, %106 : vector<8x256xf32>
    %cst_56 = arith.constant 0.000000e+00 : f32
    %121 = vector.broadcast %cst_56 : f32 to vector<8x256xf32>
    %122 = arith.subf %121, %100 : vector<8x256xf32>
    %123 = arith.mulf %122, %100 : vector<8x256xf32>
    %124 = math.exp %123 : vector<8x256xf32>
    %125 = arith.mulf %120, %124 : vector<8x256xf32>
    %cst_57 = arith.constant 1.000000e+00 : f32
    %126 = vector.broadcast %cst_57 : f32 to vector<8x256xf32>
    %127 = arith.subf %126, %125 : vector<8x256xf32>
    %128 = arith.mulf %99, %127 : vector<8x256xf32>
    %cst_58 = arith.constant 1.000000e+00 : f32
    %129 = vector.broadcast %cst_58 : f32 to vector<8x256xf32>
    %130 = arith.addf %129, %128 : vector<8x256xf32>
    %131 = arith.mulf %92, %130 : vector<8x256xf32>
    %132 = arith.truncf %131 : vector<8x256xf32> to vector<8x256xbf16>
    %c0_59 = arith.constant 0 : index
    %c0_60 = arith.constant 0 : index
    %133 = vector.load %arg11[%c0_59, %c0_60] : memref<256x256xbf16, #tpu.memory_space<vmem>>, vector<256x256xbf16>
    %cst_61 = arith.constant dense<0.000000e+00> : vector<8x256xf32>
    %134 = tpu.matmul %132, %133, %cst_61 {dimension_numbers = #tpu.dot_dimension_numbers<[1], [0], [0], [1], [0, 0, 1, 1], [], []>} : vector<8x256xbf16>, vector<256x256xbf16>, vector<8x256xf32> -> vector<8x256xf32>
    %c0_62 = arith.constant 0 : index
    %c0_63 = arith.constant 0 : index
    %135 = vector.load %arg12[%c0_62, %c0_63] : memref<1x256xf32, #tpu.memory_space<vmem>>, vector<1x256xf32>
    %136 = vector.broadcast %135 : vector<1x256xf32> to vector<8x256xf32>
    %137 = arith.addf %134, %136 : vector<8x256xf32>
    %138 = arith.addf %137, %90 : vector<8x256xf32>
    %cst_64 = arith.constant dense<0.000000e+00> : vector<8xf32>
    %139 = vector.multi_reduction <add>, %138, %cst_64 [1] : vector<8x256xf32> to vector<8xf32>
    %140 = vector.shape_cast %139 : vector<8xf32> to vector<8x1xf32>
    %cst_65 = arith.constant 2.560000e+02 : f32
    %141 = vector.broadcast %cst_65 : f32 to vector<8x1xf32>
    %142 = arith.divf %140, %141 : vector<8x1xf32>
    %143 = vector.broadcast %142 : vector<8x1xf32> to vector<8x256xf32>
    %144 = arith.subf %138, %143 : vector<8x256xf32>
    %145 = vector.broadcast %142 : vector<8x1xf32> to vector<8x256xf32>
    %146 = arith.subf %138, %145 : vector<8x256xf32>
    %147 = arith.mulf %144, %146 : vector<8x256xf32>
    %cst_66 = arith.constant dense<0.000000e+00> : vector<8xf32>
    %148 = vector.multi_reduction <add>, %147, %cst_66 [1] : vector<8x256xf32> to vector<8xf32>
    %149 = vector.shape_cast %148 : vector<8xf32> to vector<8x1xf32>
    %cst_67 = arith.constant 2.560000e+02 : f32
    %150 = vector.broadcast %cst_67 : f32 to vector<8x1xf32>
    %151 = arith.divf %149, %150 : vector<8x1xf32>
    %152 = vector.broadcast %142 : vector<8x1xf32> to vector<8x256xf32>
    %153 = arith.subf %138, %152 : vector<8x256xf32>
    %cst_68 = arith.constant 9.99999974E-6 : f32
    %154 = vector.broadcast %cst_68 : f32 to vector<8x1xf32>
    %155 = arith.addf %151, %154 : vector<8x1xf32>
    %156 = math.rsqrt %155 : vector<8x1xf32>
    %157 = vector.broadcast %156 : vector<8x1xf32> to vector<8x256xf32>
    %158 = arith.mulf %153, %157 : vector<8x256xf32>
    %c0_69 = arith.constant 0 : index
    %c0_70 = arith.constant 0 : index
    %159 = vector.load %arg13[%c0_69, %c0_70] : memref<1x256xf32, #tpu.memory_space<vmem>>, vector<1x256xf32>
    %160 = vector.broadcast %159 : vector<1x256xf32> to vector<8x256xf32>
    %161 = arith.mulf %158, %160 : vector<8x256xf32>
    %c0_71 = arith.constant 0 : index
    %c0_72 = arith.constant 0 : index
    %162 = vector.load %arg14[%c0_71, %c0_72] : memref<1x256xf32, #tpu.memory_space<vmem>>, vector<1x256xf32>
    %163 = vector.broadcast %162 : vector<1x256xf32> to vector<8x256xf32>
    %164 = arith.addf %161, %163 : vector<8x256xf32>
    %165 = vector.broadcast %1 : f32 to vector<8x256xf32>
    %166 = arith.mulf %84, %165 : vector<8x256xf32>
    %167 = vector.broadcast %2 : f32 to vector<8x256xf32>
    %168 = arith.mulf %164, %167 : vector<8x256xf32>
    %169 = arith.mulf %166, %166 : vector<8x256xf32>
    %cst_73 = arith.constant dense<0.000000e+00> : vector<8xf32>
    %170 = vector.multi_reduction <add>, %169, %cst_73 [1] : vector<8x256xf32> to vector<8xf32>
    %171 = vector.shape_cast %170 : vector<8xf32> to vector<8x1xf32>
    %172 = math.sqrt %171 : vector<8x1xf32>
    %173 = vector.broadcast %4 : f32 to vector<8x1xf32>
    %174 = arith.mulf %173, %172 : vector<8x1xf32>
    %cst_74 = arith.constant 9.99999993E-9 : f32
    %cst_75 = arith.constant 11.0903549 : f32
    %175 = vector.broadcast %cst_74 : f32 to vector<8x1xf32>
    %176 = arith.maximumf %175, %174 : vector<8x1xf32>
    %177 = vector.broadcast %cst_75 : f32 to vector<8x1xf32>
    %178 = arith.minimumf %177, %176 : vector<8x1xf32>
    %cst_76 = arith.constant 1.000000e-03 : f32
    %179 = vector.broadcast %cst_76 : f32 to vector<8x1xf32>
    %180 = arith.maximumf %178, %179 : vector<8x1xf32>
    %181 = math.exp %180 : vector<8x1xf32>
    %cst_77 = arith.constant 1.000000e+00 : f32
    %182 = vector.broadcast %cst_77 : f32 to vector<8x1xf32>
    %183 = arith.divf %182, %181 : vector<8x1xf32>
    %184 = arith.subf %181, %183 : vector<8x1xf32>
    %cst_78 = arith.constant 5.000000e-01 : f32
    %185 = vector.broadcast %cst_78 : f32 to vector<8x1xf32>
    %186 = arith.mulf %185, %184 : vector<8x1xf32>
    %187 = arith.mulf %178, %178 : vector<8x1xf32>
    %cst_79 = arith.constant 0.00833333377 : f32
    %188 = vector.broadcast %cst_79 : f32 to vector<8x1xf32>
    %189 = arith.mulf %187, %188 : vector<8x1xf32>
    %cst_80 = arith.constant 0.166666672 : f32
    %190 = vector.broadcast %cst_80 : f32 to vector<8x1xf32>
    %191 = arith.addf %190, %189 : vector<8x1xf32>
    %192 = arith.mulf %187, %191 : vector<8x1xf32>
    %cst_81 = arith.constant 1.000000e+00 : f32
    %193 = vector.broadcast %cst_81 : f32 to vector<8x1xf32>
    %194 = arith.addf %193, %192 : vector<8x1xf32>
    %195 = arith.mulf %178, %194 : vector<8x1xf32>
    %cst_82 = arith.constant 1.000000e-03 : f32
    %196 = vector.broadcast %cst_82 : f32 to vector<8x1xf32>
    %197 = arith.cmpf olt, %178, %196 : vector<8x1xf32>
    %198 = arith.select %197, %195, %186 : vector<8x1xi1>, vector<8x1xf32>
    %cst_83 = arith.constant 9.99999993E-9 : f32
    %199 = vector.broadcast %cst_83 : f32 to vector<8x1xf32>
    %200 = arith.maximumf %174, %199 : vector<8x1xf32>
    %201 = arith.divf %198, %200 : vector<8x1xf32>
    %202 = vector.broadcast %201 : vector<8x1xf32> to vector<8x256xf32>
    %203 = arith.mulf %202, %166 : vector<8x256xf32>
    %204 = arith.mulf %168, %168 : vector<8x256xf32>
    %cst_84 = arith.constant dense<0.000000e+00> : vector<8xf32>
    %205 = vector.multi_reduction <add>, %204, %cst_84 [1] : vector<8x256xf32> to vector<8xf32>
    %206 = vector.shape_cast %205 : vector<8xf32> to vector<8x1xf32>
    %207 = math.sqrt %206 : vector<8x1xf32>
    %208 = vector.broadcast %4 : f32 to vector<8x1xf32>
    %209 = arith.mulf %208, %207 : vector<8x1xf32>
    %cst_85 = arith.constant 9.99999993E-9 : f32
    %cst_86 = arith.constant 11.0903549 : f32
    %210 = vector.broadcast %cst_85 : f32 to vector<8x1xf32>
    %211 = arith.maximumf %210, %209 : vector<8x1xf32>
    %212 = vector.broadcast %cst_86 : f32 to vector<8x1xf32>
    %213 = arith.minimumf %212, %211 : vector<8x1xf32>
    %cst_87 = arith.constant 1.000000e-03 : f32
    %214 = vector.broadcast %cst_87 : f32 to vector<8x1xf32>
    %215 = arith.maximumf %213, %214 : vector<8x1xf32>
    %216 = math.exp %215 : vector<8x1xf32>
    %cst_88 = arith.constant 1.000000e+00 : f32
    %217 = vector.broadcast %cst_88 : f32 to vector<8x1xf32>
    %218 = arith.divf %217, %216 : vector<8x1xf32>
    %219 = arith.subf %216, %218 : vector<8x1xf32>
    %cst_89 = arith.constant 5.000000e-01 : f32
    %220 = vector.broadcast %cst_89 : f32 to vector<8x1xf32>
    %221 = arith.mulf %220, %219 : vector<8x1xf32>
    %222 = arith.mulf %213, %213 : vector<8x1xf32>
    %cst_90 = arith.constant 0.00833333377 : f32
    %223 = vector.broadcast %cst_90 : f32 to vector<8x1xf32>
    %224 = arith.mulf %222, %223 : vector<8x1xf32>
    %cst_91 = arith.constant 0.166666672 : f32
    %225 = vector.broadcast %cst_91 : f32 to vector<8x1xf32>
    %226 = arith.addf %225, %224 : vector<8x1xf32>
    %227 = arith.mulf %222, %226 : vector<8x1xf32>
    %cst_92 = arith.constant 1.000000e+00 : f32
    %228 = vector.broadcast %cst_92 : f32 to vector<8x1xf32>
    %229 = arith.addf %228, %227 : vector<8x1xf32>
    %230 = arith.mulf %213, %229 : vector<8x1xf32>
    %cst_93 = arith.constant 1.000000e-03 : f32
    %231 = vector.broadcast %cst_93 : f32 to vector<8x1xf32>
    %232 = arith.cmpf olt, %213, %231 : vector<8x1xf32>
    %233 = arith.select %232, %230, %221 : vector<8x1xi1>, vector<8x1xf32>
    %cst_94 = arith.constant 9.99999993E-9 : f32
    %234 = vector.broadcast %cst_94 : f32 to vector<8x1xf32>
    %235 = arith.maximumf %209, %234 : vector<8x1xf32>
    %236 = arith.divf %233, %235 : vector<8x1xf32>
    %237 = vector.broadcast %236 : vector<8x1xf32> to vector<8x256xf32>
    %238 = arith.mulf %237, %168 : vector<8x256xf32>
    %239 = arith.mulf %238, %238 : vector<8x256xf32>
    %cst_95 = arith.constant dense<0.000000e+00> : vector<8xf32>
    %240 = vector.multi_reduction <add>, %239, %cst_95 [1] : vector<8x256xf32> to vector<8xf32>
    %241 = vector.shape_cast %240 : vector<8xf32> to vector<8x1xf32>
    %242 = arith.mulf %203, %203 : vector<8x256xf32>
    %cst_96 = arith.constant dense<0.000000e+00> : vector<8xf32>
    %243 = vector.multi_reduction <add>, %242, %cst_96 [1] : vector<8x256xf32> to vector<8xf32>
    %244 = vector.shape_cast %243 : vector<8xf32> to vector<8x1xf32>
    %cst_97 = arith.constant 1.000000e+00 : f32
    %245 = arith.divf %cst_97, %0 : f32
    %246 = vector.broadcast %245 : f32 to vector<8x1xf32>
    %247 = arith.addf %246, %241 : vector<8x1xf32>
    %248 = math.sqrt %247 : vector<8x1xf32>
    %cst_98 = arith.constant 1.000000e+00 : f32
    %249 = arith.divf %cst_98, %0 : f32
    %250 = vector.broadcast %249 : f32 to vector<8x1xf32>
    %251 = arith.addf %250, %244 : vector<8x1xf32>
    %252 = math.sqrt %251 : vector<8x1xf32>
    %cst_99 = arith.constant dense<0.000000e+00> : vector<8x8xf32>
    %253 = tpu.matmul %238, %203, %cst_99 {dimension_numbers = #tpu.dot_dimension_numbers<[1], [1], [0], [0], [0, 0, 1, 0], [], []>} : vector<8x256xf32>, vector<8x256xf32>, vector<8x8xf32> -> vector<8x8xf32>
    %254 = vector.shape_cast %252 : vector<8x1xf32> to vector<1x8xf32>
    %255 = vector.broadcast %248 : vector<8x1xf32> to vector<8x8xf32>
    %256 = vector.broadcast %254 : vector<1x8xf32> to vector<8x8xf32>
    %257 = arith.mulf %255, %256 : vector<8x8xf32>
    %cst_100 = arith.constant 0.000000e+00 : f32
    %258 = arith.subf %cst_100, %0 : f32
    %259 = arith.subf %253, %257 : vector<8x8xf32>
    %260 = vector.broadcast %258 : f32 to vector<8x8xf32>
    %261 = arith.mulf %260, %259 : vector<8x8xf32>
    %cst_101 = arith.constant 1.000000e+00 : f32
    %262 = vector.broadcast %cst_101 : f32 to vector<8x8xf32>
    %263 = arith.maximumf %261, %262 : vector<8x8xf32>
    %cst_102 = arith.constant 1.000000e+00 : f32
    %264 = vector.broadcast %cst_102 : f32 to vector<8x8xf32>
    %265 = arith.subf %263, %264 : vector<8x8xf32>
    %cst_103 = arith.constant 0.000000e+00 : f32
    %266 = vector.broadcast %cst_103 : f32 to vector<8x8xf32>
    %267 = arith.maximumf %265, %266 : vector<8x8xf32>
    %cst_104 = arith.constant 2.000000e+00 : f32
    %268 = vector.broadcast %cst_104 : f32 to vector<8x8xf32>
    %269 = arith.addf %267, %268 : vector<8x8xf32>
    %270 = arith.mulf %267, %269 : vector<8x8xf32>
    %271 = math.sqrt %270 : vector<8x8xf32>
    %272 = arith.addf %267, %271 : vector<8x8xf32>
    %cst_105 = arith.constant 1.000000e+00 : f32
    %273 = vector.broadcast %cst_105 : f32 to vector<8x8xf32>
    %274 = arith.addf %273, %272 : vector<8x8xf32>
    %275 = math.log %274 : vector<8x8xf32>
    %276 = vector.broadcast %4 : f32 to vector<8x8xf32>
    %277 = arith.divf %275, %276 : vector<8x8xf32>
    %cst_106 = arith.constant 0.000000e+00 : f32
    %278 = vector.broadcast %cst_106 : f32 to vector<8x8xf32>
    %279 = arith.subf %278, %277 : vector<8x8xf32>
    %280 = vector.broadcast %3 : f32 to vector<8x8xf32>
    %281 = arith.mulf %279, %280 : vector<8x8xf32>
    %282 = arith.mulf %238, %203 : vector<8x256xf32>
    %cst_107 = arith.constant dense<0.000000e+00> : vector<8xf32>
    %283 = vector.multi_reduction <add>, %282, %cst_107 [1] : vector<8x256xf32> to vector<8xf32>
    %284 = vector.shape_cast %283 : vector<8xf32> to vector<8x1xf32>
    %285 = arith.mulf %248, %252 : vector<8x1xf32>
    %286 = arith.subf %284, %285 : vector<8x1xf32>
    %cst_108 = arith.constant 0.000000e+00 : f32
    %287 = arith.subf %cst_108, %0 : f32
    %288 = vector.broadcast %287 : f32 to vector<8x1xf32>
    %289 = arith.mulf %288, %286 : vector<8x1xf32>
    %cst_109 = arith.constant 1.000000e+00 : f32
    %290 = vector.broadcast %cst_109 : f32 to vector<8x1xf32>
    %291 = arith.maximumf %289, %290 : vector<8x1xf32>
    %cst_110 = arith.constant 1.000000e+00 : f32
    %292 = vector.broadcast %cst_110 : f32 to vector<8x1xf32>
    %293 = arith.subf %291, %292 : vector<8x1xf32>
    %cst_111 = arith.constant 0.000000e+00 : f32
    %294 = vector.broadcast %cst_111 : f32 to vector<8x1xf32>
    %295 = arith.maximumf %293, %294 : vector<8x1xf32>
    %cst_112 = arith.constant 2.000000e+00 : f32
    %296 = vector.broadcast %cst_112 : f32 to vector<8x1xf32>
    %297 = arith.addf %295, %296 : vector<8x1xf32>
    %298 = arith.mulf %295, %297 : vector<8x1xf32>
    %299 = math.sqrt %298 : vector<8x1xf32>
    %300 = arith.addf %295, %299 : vector<8x1xf32>
    %cst_113 = arith.constant 1.000000e+00 : f32
    %301 = vector.broadcast %cst_113 : f32 to vector<8x1xf32>
    %302 = arith.addf %301, %300 : vector<8x1xf32>
    %303 = math.log %302 : vector<8x1xf32>
    %304 = vector.broadcast %4 : f32 to vector<8x1xf32>
    %305 = arith.divf %303, %304 : vector<8x1xf32>
    %cst_114 = arith.constant 0.000000e+00 : f32
    %306 = vector.broadcast %cst_114 : f32 to vector<8x1xf32>
    %307 = arith.subf %306, %305 : vector<8x1xf32>
    %308 = vector.broadcast %3 : f32 to vector<8x1xf32>
    %309 = arith.mulf %307, %308 : vector<8x1xf32>
    %cst_115 = arith.constant dense<0xFF800000> : vector<8xf32>
    %310 = vector.multi_reduction <maximumf>, %281, %cst_115 [1] : vector<8x8xf32> to vector<8xf32>
    %311 = vector.shape_cast %310 : vector<8xf32> to vector<8x1xf32>
    %312 = vector.broadcast %311 : vector<8x1xf32> to vector<8x8xf32>
    %313 = arith.subf %281, %312 : vector<8x8xf32>
    %314 = math.exp %313 : vector<8x8xf32>
    %cst_116 = arith.constant dense<0.000000e+00> : vector<8xf32>
    %315 = vector.multi_reduction <add>, %314, %cst_116 [1] : vector<8x8xf32> to vector<8xf32>
    %316 = vector.shape_cast %315 : vector<8xf32> to vector<8x1xf32>
    %317 = math.log %316 : vector<8x1xf32>
    %318 = arith.addf %317, %311 : vector<8x1xf32>
    %cst_117 = arith.constant dense<0xFF800000> : vector<8xf32>
    %319 = vector.multi_reduction <maximumf>, %281, %cst_117 [0] : vector<8x8xf32> to vector<8xf32>
    %320 = vector.shape_cast %319 : vector<8xf32> to vector<1x8xf32>
    %321 = vector.broadcast %320 : vector<1x8xf32> to vector<8x8xf32>
    %322 = arith.subf %281, %321 : vector<8x8xf32>
    %323 = math.exp %322 : vector<8x8xf32>
    %cst_118 = arith.constant dense<0.000000e+00> : vector<8xf32>
    %324 = vector.multi_reduction <add>, %323, %cst_118 [0] : vector<8x8xf32> to vector<8xf32>
    %325 = vector.shape_cast %324 : vector<8xf32> to vector<1x8xf32>
    %326 = math.log %325 : vector<1x8xf32>
    %327 = arith.addf %326, %320 : vector<1x8xf32>
    %328 = vector.shape_cast %309 : vector<8x1xf32> to vector<1x8x1xf32>
    %cst_119 = arith.constant dense<0.000000e+00> : vector<1xf32>
    %329 = vector.multi_reduction <add>, %328, %cst_119 [1, 2] : vector<1x8x1xf32> to vector<1xf32>
    %330 = vector.shape_cast %329 : vector<1xf32> to vector<1x1x1xf32>
    %331 = vector.extract %330[0, 0, 0] : f32 from vector<1x1x1xf32>
    %cst_120 = arith.constant 8.000000e+00 : f32
    %332 = arith.divf %331, %cst_120 : f32
    %333 = vector.shape_cast %318 : vector<8x1xf32> to vector<1x8x1xf32>
    %cst_121 = arith.constant dense<0.000000e+00> : vector<1xf32>
    %334 = vector.multi_reduction <add>, %333, %cst_121 [1, 2] : vector<1x8x1xf32> to vector<1xf32>
    %335 = vector.shape_cast %334 : vector<1xf32> to vector<1x1x1xf32>
    %336 = vector.extract %335[0, 0, 0] : f32 from vector<1x1x1xf32>
    %cst_122 = arith.constant 8.000000e+00 : f32
    %337 = arith.divf %336, %cst_122 : f32
    %338 = vector.shape_cast %327 : vector<1x8xf32> to vector<1x1x8xf32>
    %cst_123 = arith.constant dense<0.000000e+00> : vector<1xf32>
    %339 = vector.multi_reduction <add>, %338, %cst_123 [1, 2] : vector<1x1x8xf32> to vector<1xf32>
    %340 = vector.shape_cast %339 : vector<1xf32> to vector<1x1x1xf32>
    %341 = vector.extract %340[0, 0, 0] : f32 from vector<1x1x1xf32>
    %cst_124 = arith.constant 8.000000e+00 : f32
    %342 = arith.divf %341, %cst_124 : f32
    %343 = arith.addf %337, %342 : f32
    %cst_125 = arith.constant 5.000000e-01 : f32
    %344 = arith.mulf %cst_125, %343 : f32
    %345 = arith.subf %344, %332 : f32
    %346 = vector.broadcast %0 : f32 to vector<8x1xf32>
    %347 = arith.mulf %346, %286 : vector<8x1xf32>
    %348 = arith.mulf %347, %248 : vector<8x1xf32>
    %349 = arith.addf %252, %348 : vector<8x1xf32>
    %350 = arith.mulf %347, %347 : vector<8x1xf32>
    %cst_126 = arith.constant 1.000000e+00 : f32
    %351 = vector.broadcast %cst_126 : f32 to vector<8x1xf32>
    %352 = arith.subf %350, %351 : vector<8x1xf32>
    %cst_127 = arith.constant 9.99999993E-9 : f32
    %353 = vector.broadcast %cst_127 : f32 to vector<8x1xf32>
    %354 = arith.maximumf %352, %353 : vector<8x1xf32>
    %355 = math.sqrt %354 : vector<8x1xf32>
    %356 = math.sqrt %241 : vector<8x1xf32>
    %357 = arith.mulf %356, %355 : vector<8x1xf32>
    %cst_128 = arith.constant 9.99999993E-9 : f32
    %358 = vector.broadcast %cst_128 : f32 to vector<8x1xf32>
    %359 = arith.addf %357, %358 : vector<8x1xf32>
    %360 = arith.divf %349, %359 : vector<8x1xf32>
    %cst_129 = arith.constant -1.000000e+00 : f32
    %cst_130 = arith.constant 1.000000e+00 : f32
    %361 = vector.broadcast %cst_129 : f32 to vector<8x1xf32>
    %362 = arith.maximumf %361, %360 : vector<8x1xf32>
    %363 = vector.broadcast %cst_130 : f32 to vector<8x1xf32>
    %364 = arith.minimumf %363, %362 : vector<8x1xf32>
    %365 = math.absf %364 : vector<8x1xf32>
    %cst_131 = arith.constant -0.0012624911 : f32
    %366 = vector.broadcast %cst_131 : f32 to vector<8x1xf32>
    %367 = arith.mulf %366, %365 : vector<8x1xf32>
    %cst_132 = arith.constant 6.670090e-03 : f32
    %368 = vector.broadcast %cst_132 : f32 to vector<8x1xf32>
    %369 = arith.addf %367, %368 : vector<8x1xf32>
    %370 = arith.mulf %369, %365 : vector<8x1xf32>
    %cst_133 = arith.constant -0.0170881264 : f32
    %371 = vector.broadcast %cst_133 : f32 to vector<8x1xf32>
    %372 = arith.addf %370, %371 : vector<8x1xf32>
    %373 = arith.mulf %372, %365 : vector<8x1xf32>
    %cst_134 = arith.constant 0.0308918804 : f32
    %374 = vector.broadcast %cst_134 : f32 to vector<8x1xf32>
    %375 = arith.addf %373, %374 : vector<8x1xf32>
    %376 = arith.mulf %375, %365 : vector<8x1xf32>
    %cst_135 = arith.constant -0.0501743034 : f32
    %377 = vector.broadcast %cst_135 : f32 to vector<8x1xf32>
    %378 = arith.addf %376, %377 : vector<8x1xf32>
    %379 = arith.mulf %378, %365 : vector<8x1xf32>
    %cst_136 = arith.constant 0.0889789909 : f32
    %380 = vector.broadcast %cst_136 : f32 to vector<8x1xf32>
    %381 = arith.addf %379, %380 : vector<8x1xf32>
    %382 = arith.mulf %381, %365 : vector<8x1xf32>
    %cst_137 = arith.constant -0.214598805 : f32
    %383 = vector.broadcast %cst_137 : f32 to vector<8x1xf32>
    %384 = arith.addf %382, %383 : vector<8x1xf32>
    %385 = arith.mulf %384, %365 : vector<8x1xf32>
    %cst_138 = arith.constant 1.57079625 : f32
    %386 = vector.broadcast %cst_138 : f32 to vector<8x1xf32>
    %387 = arith.addf %385, %386 : vector<8x1xf32>
    %cst_139 = arith.constant 1.000000e+00 : f32
    %388 = vector.broadcast %cst_139 : f32 to vector<8x1xf32>
    %389 = arith.subf %388, %365 : vector<8x1xf32>
    %cst_140 = arith.constant 0.000000e+00 : f32
    %390 = vector.broadcast %cst_140 : f32 to vector<8x1xf32>
    %391 = arith.maximumf %389, %390 : vector<8x1xf32>
    %392 = math.sqrt %391 : vector<8x1xf32>
    %393 = arith.mulf %392, %387 : vector<8x1xf32>
    %cst_141 = arith.constant 0.000000e+00 : f32
    %394 = vector.broadcast %cst_141 : f32 to vector<8x1xf32>
    %395 = arith.cmpf olt, %364, %394 : vector<8x1xf32>
    %cst_142 = arith.constant 3.14159274 : f32
    %396 = vector.broadcast %cst_142 : f32 to vector<8x1xf32>
    %397 = arith.subf %396, %393 : vector<8x1xf32>
    %398 = arith.select %395, %397, %393 : vector<8x1xi1>, vector<8x1xf32>
    %399 = vector.broadcast %4 : f32 to vector<8x1xf32>
    %400 = arith.mulf %356, %399 : vector<8x1xf32>
    %cst_143 = arith.constant 9.99999993E-9 : f32
    %401 = vector.broadcast %cst_143 : f32 to vector<8x1xf32>
    %402 = arith.addf %400, %401 : vector<8x1xf32>
    %cst_144 = arith.constant 2.000000e-01 : f32
    %403 = vector.broadcast %cst_144 : f32 to vector<8x1xf32>
    %404 = arith.divf %403, %402 : vector<8x1xf32>
    %cst_145 = arith.constant -1.000000e+00 : f32
    %cst_146 = arith.constant 1.000000e+00 : f32
    %405 = vector.broadcast %cst_145 : f32 to vector<8x1xf32>
    %406 = arith.maximumf %405, %404 : vector<8x1xf32>
    %407 = vector.broadcast %cst_146 : f32 to vector<8x1xf32>
    %408 = arith.minimumf %407, %406 : vector<8x1xf32>
    %409 = math.absf %408 : vector<8x1xf32>
    %cst_147 = arith.constant -0.0012624911 : f32
    %410 = vector.broadcast %cst_147 : f32 to vector<8x1xf32>
    %411 = arith.mulf %410, %409 : vector<8x1xf32>
    %cst_148 = arith.constant 6.670090e-03 : f32
    %412 = vector.broadcast %cst_148 : f32 to vector<8x1xf32>
    %413 = arith.addf %411, %412 : vector<8x1xf32>
    %414 = arith.mulf %413, %409 : vector<8x1xf32>
    %cst_149 = arith.constant -0.0170881264 : f32
    %415 = vector.broadcast %cst_149 : f32 to vector<8x1xf32>
    %416 = arith.addf %414, %415 : vector<8x1xf32>
    %417 = arith.mulf %416, %409 : vector<8x1xf32>
    %cst_150 = arith.constant 0.0308918804 : f32
    %418 = vector.broadcast %cst_150 : f32 to vector<8x1xf32>
    %419 = arith.addf %417, %418 : vector<8x1xf32>
    %420 = arith.mulf %419, %409 : vector<8x1xf32>
    %cst_151 = arith.constant -0.0501743034 : f32
    %421 = vector.broadcast %cst_151 : f32 to vector<8x1xf32>
    %422 = arith.addf %420, %421 : vector<8x1xf32>
    %423 = arith.mulf %422, %409 : vector<8x1xf32>
    %cst_152 = arith.constant 0.0889789909 : f32
    %424 = vector.broadcast %cst_152 : f32 to vector<8x1xf32>
    %425 = arith.addf %423, %424 : vector<8x1xf32>
    %426 = arith.mulf %425, %409 : vector<8x1xf32>
    %cst_153 = arith.constant -0.214598805 : f32
    %427 = vector.broadcast %cst_153 : f32 to vector<8x1xf32>
    %428 = arith.addf %426, %427 : vector<8x1xf32>
    %429 = arith.mulf %428, %409 : vector<8x1xf32>
    %cst_154 = arith.constant 1.57079625 : f32
    %430 = vector.broadcast %cst_154 : f32 to vector<8x1xf32>
    %431 = arith.addf %429, %430 : vector<8x1xf32>
    %cst_155 = arith.constant 1.000000e+00 : f32
    %432 = vector.broadcast %cst_155 : f32 to vector<8x1xf32>
    %433 = arith.subf %432, %409 : vector<8x1xf32>
    %cst_156 = arith.constant 0.000000e+00 : f32
    %434 = vector.broadcast %cst_156 : f32 to vector<8x1xf32>
    %435 = arith.maximumf %433, %434 : vector<8x1xf32>
    %436 = math.sqrt %435 : vector<8x1xf32>
    %437 = arith.mulf %436, %431 : vector<8x1xf32>
    %cst_157 = arith.constant 0.000000e+00 : f32
    %438 = vector.broadcast %cst_157 : f32 to vector<8x1xf32>
    %439 = arith.cmpf olt, %408, %438 : vector<8x1xf32>
    %cst_158 = arith.constant 3.14159274 : f32
    %440 = vector.broadcast %cst_158 : f32 to vector<8x1xf32>
    %441 = arith.subf %440, %437 : vector<8x1xf32>
    %442 = arith.select %439, %441, %437 : vector<8x1xi1>, vector<8x1xf32>
    %cst_159 = arith.constant 1.57079637 : f32
    %443 = vector.broadcast %cst_159 : f32 to vector<8x1xf32>
    %444 = arith.subf %443, %442 : vector<8x1xf32>
    %445 = arith.subf %398, %444 : vector<8x1xf32>
    %cst_160 = arith.constant 0.000000e+00 : f32
    %446 = vector.broadcast %cst_160 : f32 to vector<8x1xf32>
    %447 = arith.maximumf %445, %446 : vector<8x1xf32>
    %448 = vector.shape_cast %447 : vector<8x1xf32> to vector<1x8x1xf32>
    %cst_161 = arith.constant dense<0.000000e+00> : vector<1xf32>
    %449 = vector.multi_reduction <add>, %448, %cst_161 [1, 2] : vector<1x8x1xf32> to vector<1xf32>
    %450 = vector.shape_cast %449 : vector<1xf32> to vector<1x1x1xf32>
    %451 = vector.extract %450[0, 0, 0] : f32 from vector<1x1x1xf32>
    %cst_162 = arith.constant 8.000000e+00 : f32
    %452 = arith.divf %451, %cst_162 : f32
    %cst_163 = arith.constant 2.000000e-01 : f32
    %453 = arith.mulf %cst_163, %452 : f32
    %454 = arith.addf %345, %453 : f32
    %c0_164 = arith.constant 0 : index
    %c0_165 = arith.constant 0 : index
    %455 = memref.load %arg15[%c0_164, %c0_165] : memref<1x1xf32, #tpu.memory_space<smem>>
    memref.store %454, %arg15[%c0_164, %c0_165] : memref<1x1xf32, #tpu.memory_space<smem>>
    return
  }
}

</mosaic_0001>

<llo_original>
// kernel: hyperbolic_forward.1
$region0: #{hyperbolic_forward.1}
  #allocation0 [shape = 'u32[]', space=smem, size = 0x4, offset = 0x4, fixed_abs, tag = 'smem constant byte address 0x4 - core index']
  #allocation1 [shape = 'u32[144,128]{1,0:T(1,128)}', space=vmem, size = 0x12000, scoped, tag = 'internal scratch']
  %s0 = inlined_call_operand.vmem [shape: f32[4], index: 0, kind: input, shape index: {}]
  %s1 = inlined_call_operand.vmem [shape: bf16[8,2048], index: 1, kind: input, shape index: {}]
  %s2 = inlined_call_operand.vmem [shape: bf16[8,1024], index: 2, kind: input, shape index: {}]
  %s3 = inlined_call_operand.hbm [shape: bf16[2048,256], index: 3, kind: input, shape index: {}]
  %s4 = inlined_call_operand.vmem [shape: f32[1,256], index: 4, kind: input, shape index: {}]
  %s5 = inlined_call_operand.vmem [shape: bf16[256,256], index: 5, kind: input, shape index: {}]
  %s6 = inlined_call_operand.vmem [shape: f32[1,256], index: 6, kind: input, shape index: {}]
  %s7 = inlined_call_operand.vmem [shape: f32[1,256], index: 7, kind: input, shape index: {}]
  %s8 = inlined_call_operand.vmem [shape: f32[1,256], index: 8, kind: input, shape index: {}]
  %s9 = inlined_call_operand.hbm [shape: bf16[1024,256], index: 9, kind: input, shape index: {}]
  %s10 = inlined_call_operand.vmem [shape: f32[1,256], index: 10, kind: input, shape index: {}]
  %s11 = inlined_call_operand.hbm [shape: bf16[256,256], index: 11, kind: input, shape index: {}]
  %s12 = inlined_call_operand.vmem [shape: f32[1,256], index: 12, kind: input, shape index: {}]
  %s13 = inlined_call_operand.vmem [shape: f32[1,256], index: 13, kind: input, shape index: {}]
  %s14 = inlined_call_operand.vmem [shape: f32[1,256], index: 14, kind: input, shape index: {}]
  %s15 = inlined_call_operand.hbm [shape: f32[1,1], index: 15, kind: output, shape index: {}]
  %s16 = sld [smem:[#allocation0]]
  $region86: #{hyperbolic_forward.1} parent=0
    _
  %s18 = ssub.s32 1, %s16
  %s19 = scalar_select 0, %s18, %s16
  $region1: #{hyperbolic_forward.1} parent=0
    #allocation2 [shape = 'u8[512]{0}', space=smem, size = 0x200, scoped, tag = 'input window, operand 0, single buffered']
    #allocation3 [shape = 's32[1]{0}', space=sflag, size = 0x4, scoped, tag = 'scoped memory for hyperbolic_forward.1']
    #allocation4 [shape = 's32[1]{0}', space=sflag, size = 0x4, scoped, tag = 'scoped memory for hyperbolic_forward.1']
    #allocation5 [shape = 's32[1]{0}', space=sflag, size = 0x4, scoped, tag = 'scoped memory for hyperbolic_forward.1']
    #allocation6 [shape = 'u8[1048576]{0}', space=vmem, size = 0x100000, scoped, tag = 'input window, operand 3, single buffered']
    #allocation7 [shape = 'u8[524288]{0}', space=vmem, size = 0x80000, scoped, tag = 'input window, operand 9, single buffered']
    #allocation8 [shape = 's32[1]{0}', space=sflag, size = 0x4, scoped, tag = 'scoped memory for hyperbolic_forward.1']
    #allocation9 [shape = 'u8[131072]{0}', space=vmem, size = 0x20000, scoped, tag = 'input window, operand 11, single buffered']
    #allocation10 [shape = 'u8[512]{0}', space=smem, size = 0x200, scoped, tag = 'output window, operand 0, single buffered']
    %20 = vsyncpa [#allocation5], 0
    %21 = vsyncpa [#allocation3], 0
    %22 = vsyncpa [#allocation8], 0
    %23 = vsyncpa [#allocation4], 0
    // Predicated region
    $region2: #{hyperbolic_forward.1} parent=1 // pred_check
      _
    $region3: #{hyperbolic_forward.1} parent=1 // pred_check_branch
      %25 = sbr.rel (0) target = $region5
    $region4: #{hyperbolic_forward.1} parent=1 // pred_region
      %s27 = ssub.s32 16, 16
      %28 = vsyncadd [#allocation5], %s27
      %s30 = sshll.u32 %s0, 4
      %s31 = int_to_ptr.vmem [resolvable:$true] %s30
      %33 = dma.vmem_to_smem %s31, 16, [#allocation2], [#allocation5]
    $region5: #{hyperbolic_forward.1} parent=1 // pred_fallthru
      _
    // Predicated region
    $region6: #{hyperbolic_forward.1} parent=1 // pred_check
      _
    $region7: #{hyperbolic_forward.1} parent=1 // pred_check_branch
      %35 = sbr.rel (0) target = $region9
    $region8: #{hyperbolic_forward.1} parent=1 // pred_region
      _
    $region9: #{hyperbolic_forward.1} parent=1 // pred_fallthru
      _
    // Predicated region
    $region10: #{hyperbolic_forward.1} parent=1 // pred_check
      _
    $region11: #{hyperbolic_forward.1} parent=1 // pred_check_branch
      %37 = sbr.rel (0) target = $region13
    $region12: #{hyperbolic_forward.1} parent=1 // pred_region
      _
    $region13: #{hyperbolic_forward.1} parent=1 // pred_fallthru
      _
    // Predicated region
    $region14: #{hyperbolic_forward.1} parent=1 // pred_check
      _
    $region15: #{hyperbolic_forward.1} parent=1 // pred_check_branch
      %39 = sbr.rel (0) target = $region17
    $region16: #{hyperbolic_forward.1} parent=1 // pred_region
      %s41 = ssub.s32 32768, 32768
      %42 = vsyncadd [#allocation3], %s41
      %s43 = sshll.u32 [#allocation6], 4
      %s44 = int_to_ptr.vmem [resolvable:$true] %s43
      %49 = dma.hbm_to_vmem [thread:$0]  %s3, 32768, %s44, [#allocation3], 128, 128, 8
    $region17: #{hyperbolic_forward.1} parent=1 // pred_fallthru
      _
    // Predicated region
    $region18: #{hyperbolic_forward.1} parent=1 // pred_check
      _
    $region19: #{hyperbolic_forward.1} parent=1 // pred_check_branch
      %51 = sbr.rel (0) target = $region21
    $region20: #{hyperbolic_forward.1} parent=1 // pred_region
      _
    $region21: #{hyperbolic_forward.1} parent=1 // pred_fallthru
      _
    // Predicated region
    $region22: #{hyperbolic_forward.1} parent=1 // pred_check
      _
    $region23: #{hyperbolic_forward.1} parent=1 // pred_check_branch
      %53 = sbr.rel (0) target = $region25
    $region24: #{hyperbolic_forward.1} parent=1 // pred_region
      _
    $region25: #{hyperbolic_forward.1} parent=1 // pred_fallthru
      _
    // Predicated region
    $region26: #{hyperbolic_forward.1} parent=1 // pred_check
      _
    $region27: #{hyperbolic_forward.1} parent=1 // pred_check_branch
      %55 = sbr.rel (0) target = $region29
    $region28: #{hyperbolic_forward.1} parent=1 // pred_region
      _
    $region29: #{hyperbolic_forward.1} parent=1 // pred_fallthru
      _
    // Predicated region
    $region30: #{hyperbolic_forward.1} parent=1 // pred_check
      _
    $region31: #{hyperbolic_forward.1} parent=1 // pred_check_branch
      %57 = sbr.rel (0) target = $region33
    $region32: #{hyperbolic_forward.1} parent=1 // pred_region
      _
    $region33: #{hyperbolic_forward.1} parent=1 // pred_fallthru
      _
    // Predicated region
    $region34: #{hyperbolic_forward.1} parent=1 // pred_check
      _
    $region35: #{hyperbolic_forward.1} parent=1 // pred_check_branch
      %59 = sbr.rel (0) target = $region37
    $region36: #{hyperbolic_forward.1} parent=1 // pred_region
      _
    $region37: #{hyperbolic_forward.1} parent=1 // pred_fallthru
      _
    // Predicated region
    $region38: #{hyperbolic_forward.1} parent=1 // pred_check
      _
    $region39: #{hyperbolic_forward.1} parent=1 // pred_check_branch
      %61 = sbr.rel (0) target = $region41
    $region40: #{hyperbolic_forward.1} parent=1 // pred_region
      %s63 = ssub.s32 16384, 16384
      %64 = vsyncadd [#allocation8], %s63
      %s65 = sshll.u32 [#allocation7], 4
      %s66 = int_to_ptr.vmem [resolvable:$true] %s65
      %71 = dma.hbm_to_vmem [thread:$0]  %s9, 16384, %s66, [#allocation8], 128, 128, 8
    $region41: #{hyperbolic_forward.1} parent=1 // pred_fallthru
      _
    // Predicated region
    $region42: #{hyperbolic_forward.1} parent=1 // pred_check
      _
    $region43: #{hyperbolic_forward.1} parent=1 // pred_check_branch
      %73 = sbr.rel (0) target = $region45
    $region44: #{hyperbolic_forward.1} parent=1 // pred_region
      _
    $region45: #{hyperbolic_forward.1} parent=1 // pred_fallthru
      _
    // Predicated region
    $region46: #{hyperbolic_forward.1} parent=1 // pred_check
      _
    $region47: #{hyperbolic_forward.1} parent=1 // pred_check_branch
      %75 = sbr.rel (0) target = $region49
    $region48: #{hyperbolic_forward.1} parent=1 // pred_region
      %s77 = ssub.s32 4096, 4096
      %78 = vsyncadd [#allocation8], %s77
      %s79 = sshll.u32 [#allocation9], 4
      %s80 = int_to_ptr.vmem [resolvable:$true] %s79
      %85 = dma.hbm_to_vmem [thread:$0]  %s11, 4096, %s80, [#allocation8], 128, 128, 8
    $region49: #{hyperbolic_forward.1} parent=1 // pred_fallthru
      _
    // Predicated region
    $region50: #{hyperbolic_forward.1} parent=1 // pred_check
      _
    $region51: #{hyperbolic_forward.1} parent=1 // pred_check_branch
      %87 = sbr.rel (0) target = $region53
    $region52: #{hyperbolic_forward.1} parent=1 // pred_region
      _
    $region53: #{hyperbolic_forward.1} parent=1 // pred_fallthru
      _
    // Predicated region
    $region54: #{hyperbolic_forward.1} parent=1 // pred_check
      _
    $region55: #{hyperbolic_forward.1} parent=1 // pred_check_branch
      %89 = sbr.rel (0) target = $region57
    $region56: #{hyperbolic_forward.1} parent=1 // pred_region
      _
    $region57: #{hyperbolic_forward.1} parent=1 // pred_fallthru
      _
    // Predicated region
    $region58: #{hyperbolic_forward.1} parent=1 // pred_check
      _
    $region59: #{hyperbolic_forward.1} parent=1 // pred_check_branch
      %91 = sbr.rel (0) target = $region61
    $region60: #{hyperbolic_forward.1} parent=1 // pred_region
      _
    $region61: #{hyperbolic_forward.1} parent=1 // pred_fallthru
      _
    // Predicated region
    $region62: #{hyperbolic_forward.1} parent=1 // pred_check
      _
    $region63: #{hyperbolic_forward.1} parent=1 // pred_check_branch
      %93 = sbr.rel (0) target = $region65
    $region64: #{hyperbolic_forward.1} parent=1 // pred_region
      %94 = dma.done [#allocation5], 16
    $region65: #{hyperbolic_forward.1} parent=1 // pred_fallthru
      _
    // Predicated region
    $region66: #{hyperbolic_forward.1} parent=1 // pred_check
      _
    $region67: #{hyperbolic_forward.1} parent=1 // pred_check_branch
      %96 = sbr.rel (0) target = $region69
    $region68: #{hyperbolic_forward.1} parent=1 // pred_region
      %97 = dma.done [#allocation3], 32768
    $region69: #{hyperbolic_forward.1} parent=1 // pred_fallthru
      _
    // Predicated region
    $region70: #{hyperbolic_forward.1} parent=1 // pred_check
      _
    $region71: #{hyperbolic_forward.1} parent=1 // pred_check_branch
      %99 = sbr.rel (0) target = $region73
    $region72: #{hyperbolic_forward.1} parent=1 // pred_region
      %100 = dma.done [#allocation8], 16384
    $region73: #{hyperbolic_forward.1} parent=1 // pred_fallthru
      _
    // Predicated region
    $region74: #{hyperbolic_forward.1} parent=1 // pred_check
      _
    $region75: #{hyperbolic_forward.1} parent=1 // pred_check_branch
      %102 = sbr.rel (0) target = $region77
    $region76: #{hyperbolic_forward.1} parent=1 // pred_region
      %103 = dma.done [#allocation8], 4096
    $region77: #{hyperbolic_forward.1} parent=1 // pred_fallthru
      _
    %104 = sfence
    %s105 = sld [smem:[#allocation2]]
    %s106 = sld [smem:[#allocation2 + $0x1]]
    %s107 = sld [smem:[#allocation2 + $0x2]]
    %s108 = sld [smem:[#allocation2 + $0x3]]
    %v109 = vstv %s105
    %v110 = vrsqrt.pop %v109
    %v111 = vmul.f32 %v109, %v110
    %vm112 = vcmp.eq.f32.partialorder %v109, inf
    %v113 = vsel %vm112, %v109, %v111
    %vm114 = vcmp.eq.f32.partialorder %v109, 0.0
    %v115 = vand.u32 %v109, 2147483648
    %v116 = vsel %vm114, %v115, %v113
    %s117 = vtos %v116
    %v118 = vld [vmem:[%s1] sm:$0xff]
    %v119 = vld [vmem:[%s1 + $0x8] sm:$0xff]
    %v120 = vld [vmem:[%s1 + $0x10] sm:$0xff]
    %v121 = vld [vmem:[%s1 + $0x18] sm:$0xff]
    %v122 = vld [vmem:[%s1 + $0x20] sm:$0xff]
    %v123 = vld [vmem:[%s1 + $0x28] sm:$0xff]
    %v124 = vld [vmem:[%s1 + $0x30] sm:$0xff]
    %v125 = vld [vmem:[%s1 + $0x38] sm:$0xff]
    %v126 = vld [vmem:[#allocation6] sm:$0xff]
    %v127 = vld [vmem:[#allocation6 + $0x8] sm:$0xff]
    %v128 = vld [vmem:[#allocation6 + $0x10] sm:$0xff]
    %v129 = vld [vmem:[#allocation6 + $0x18] sm:$0xff]
    %v130 = vld [vmem:[#allocation6 + $0x20] sm:$0xff]
    %v131 = vld [vmem:[#allocation6 + $0x28] sm:$0xff]
    %v132 = vld [vmem:[#allocation6 + $0x30] sm:$0xff]
    %v133 = vld [vmem:[#allocation6 + $0x38] sm:$0xff]
    %v134 = vld [vmem:[#allocation6 + $0x40] sm:$0xff]
    %v135 = vld [vmem:[#allocation6 + $0x48] sm:$0xff]
    %v136 = vld [vmem:[#allocation6 + $0x50] sm:$0xff]
    %v137 = vld [vmem:[#allocation6 + $0x58] sm:$0xff]
    %v138 = vld [vmem:[#allocation6 + $0x60] sm:$0xff]
    %v139 = vld [vmem:[#allocation6 + $0x68] sm:$0xff]
    %v140 = vld [vmem:[#allocation6 + $0x70] sm:$0xff]
    %v141 = vld [vmem:[#allocation6 + $0x78] sm:$0xff]
    %v142 = vld [vmem:[#allocation6 + $0x80] sm:$0xff]
    %v143 = vld [vmem:[#allocation6 + $0x88] sm:$0xff]
    %v144 = vld [vmem:[#allocation6 + $0x90] sm:$0xff]
    %v145 = vld [vmem:[#allocation6 + $0x98] sm:$0xff]
    %v146 = vld [vmem:[#allocation6 + $0xa0] sm:$0xff]
    %v147 = vld [vmem:[#allocation6 + $0xa8] sm:$0xff]
    %v148 = vld [vmem:[#allocation6 + $0xb0] sm:$0xff]
    %v149 = vld [vmem:[#allocation6 + $0xb8] sm:$0xff]
    %v150 = vld [vmem:[#allocation6 + $0xc0] sm:$0xff]
    %v151 = vld [vmem:[#allocation6 + $0xc8] sm:$0xff]
    %v152 = vld [vmem:[#allocation6 + $0xd0] sm:$0xff]
    %v153 = vld [vmem:[#allocation6 + $0xd8] sm:$0xff]
    %v154 = vld [vmem:[#allocation6 + $0xe0] sm:$0xff]
    %v155 = vld [vmem:[#allocation6 + $0xe8] sm:$0xff]
    %v156 = vld [vmem:[#allocation6 + $0xf0] sm:$0xff]
    %v157 = vld [vmem:[#allocation6 + $0xf8] sm:$0xff]
    %v158 = vld [vmem:[#allocation6 + $0x100] sm:$0xff]
    %v159 = vld [vmem:[#allocation6 + $0x108] sm:$0xff]
    %v160 = vld [vmem:[#allocation6 + $0x110] sm:$0xff]
    %v161 = vld [vmem:[#allocation6 + $0x118] sm:$0xff]
    %v162 = vld [vmem:[#allocation6 + $0x120] sm:$0xff]
    %v163 = vld [vmem:[#allocation6 + $0x128] sm:$0xff]
    %v164 = vld [vmem:[#allocation6 + $0x130] sm:$0xff]
    %v165 = vld [vmem:[#allocation6 + $0x138] sm:$0xff]
    %v166 = vld [vmem:[#allocation6 + $0x140] sm:$0xff]
    %v167 = vld [vmem:[#allocation6 + $0x148] sm:$0xff]
    %v168 = vld [vmem:[#allocation6 + $0x150] sm:$0xff]
    %v169 = vld [vmem:[#allocation6 + $0x158] sm:$0xff]
    %v170 = vld [vmem:[#allocation6 + $0x160] sm:$0xff]
    %v171 = vld [vmem:[#allocation6 + $0x168] sm:$0xff]
    %v172 = vld [vmem:[#allocation6 + $0x170] sm:$0xff]
    %v173 = vld [vmem:[#allocation6 + $0x178] sm:$0xff]
    %v174 = vld [vmem:[#allocation6 + $0x180] sm:$0xff]
    %v175 = vld [vmem:[#allocation6 + $0x188] sm:$0xff]
    %v176 = vld [vmem:[#allocation6 + $0x190] sm:$0xff]
    %v177 = vld [vmem:[#allocation6 + $0x198] sm:$0xff]
    %v178 = vld [vmem:[#allocation6 + $0x1a0] sm:$0xff]
    %v179 = vld [vmem:[#allocation6 + $0x1a8] sm:$0xff]
    %v180 = vld [vmem:[#allocation6 + $0x1b0] sm:$0xff]
    %v181 = vld [vmem:[#allocation6 + $0x1b8] sm:$0xff]
    %v182 = vld [vmem:[#allocation6 + $0x1c0] sm:$0xff]
    %v183 = vld [vmem:[#allocation6 + $0x1c8] sm:$0xff]
    %v184 = vld [vmem:[#allocation6 + $0x1d0] sm:$0xff]
    %v185 = vld [vmem:[#allocation6 + $0x1d8] sm:$0xff]
    %v186 = vld [vmem:[#allocation6 + $0x1e0] sm:$0xff]
    %v187 = vld [vmem:[#allocation6 + $0x1e8] sm:$0xff]
    %v188 = vld [vmem:[#allocation6 + $0x1f0] sm:$0xff]
    %v189 = vld [vmem:[#allocation6 + $0x1f8] sm:$0xff]
    %v190 = vld [vmem:[#allocation6 + $0x200] sm:$0xff]
    %v191 = vld [vmem:[#allocation6 + $0x208] sm:$0xff]
    %v192 = vld [vmem:[#allocation6 + $0x210] sm:$0xff]
    %v193 = vld [vmem:[#allocation6 + $0x218] sm:$0xff]
    %v194 = vld [vmem:[#allocation6 + $0x220] sm:$0xff]
    %v195 = vld [vmem:[#allocation6 + $0x228] sm:$0xff]
    %v196 = vld [vmem:[#allocation6 + $0x230] sm:$0xff]
    %v197 = vld [vmem:[#allocation6 + $0x238] sm:$0xff]
    %v198 = vld [vmem:[#allocation6 + $0x240] sm:$0xff]
    %v199 = vld [vmem:[#allocation6 + $0x248] sm:$0xff]
    %v200 = vld [vmem:[#allocation6 + $0x250] sm:$0xff]
    %v201 = vld [vmem:[#allocation6 + $0x258] sm:$0xff]
    %v202 = vld [vmem:[#allocation6 + $0x260] sm:$0xff]
    %v203 = vld [vmem:[#allocation6 + $0x268] sm:$0xff]
    %v204 = vld [vmem:[#allocation6 + $0x270] sm:$0xff]
    %v205 = vld [vmem:[#allocation6 + $0x278] sm:$0xff]
    %v206 = vld [vmem:[#allocation6 + $0x280] sm:$0xff]
    %v207 = vld [vmem:[#allocation6 + $0x288] sm:$0xff]
    %v208 = vld [vmem:[#allocation6 + $0x290] sm:$0xff]
    %v209 = vld [vmem:[#allocation6 + $0x298] sm:$0xff]
    %v210 = vld [vmem:[#allocation6 + $0x2a0] sm:$0xff]
    %v211 = vld [vmem:[#allocation6 + $0x2a8] sm:$0xff]
    %v212 = vld [vmem:[#allocation6 + $0x2b0] sm:$0xff]
    %v213 = vld [vmem:[#allocation6 + $0x2b8] sm:$0xff]
    %v214 = vld [vmem:[#allocation6 + $0x2c0] sm:$0xff]
    %v215 = vld [vmem:[#allocation6 + $0x2c8] sm:$0xff]
    %v216 = vld [vmem:[#allocation6 + $0x2d0] sm:$0xff]
    %v217 = vld [vmem:[#allocation6 + $0x2d8] sm:$0xff]
    %v218 = vld [vmem:[#allocation6 + $0x2e0] sm:$0xff]
    %v219 = vld [vmem:[#allocation6 + $0x2e8] sm:$0xff]
    %v220 = vld [vmem:[#allocation6 + $0x2f0] sm:$0xff]
    %v221 = vld [vmem:[#allocation6 + $0x2f8] sm:$0xff]
    %v222 = vld [vmem:[#allocation6 + $0x300] sm:$0xff]
    %v223 = vld [vmem:[#allocation6 + $0x308] sm:$0xff]
    %v224 = vld [vmem:[#allocation6 + $0x310] sm:$0xff]
    %v225 = vld [vmem:[#allocation6 + $0x318] sm:$0xff]
    %v226 = vld [vmem:[#allocation6 + $0x320] sm:$0xff]
    %v227 = vld [vmem:[#allocation6 + $0x328] sm:$0xff]
    %v228 = vld [vmem:[#allocation6 + $0x330] sm:$0xff]
    %v229 = vld [vmem:[#allocation6 + $0x338] sm:$0xff]
    %v230 = vld [vmem:[#allocation6 + $0x340] sm:$0xff]
    %v231 = vld [vmem:[#allocation6 + $0x348] sm:$0xff]
    %v232 = vld [vmem:[#allocation6 + $0x350] sm:$0xff]
    %v233 = vld [vmem:[#allocation6 + $0x358] sm:$0xff]
    %v234 = vld [vmem:[#allocation6 + $0x360] sm:$0xff]
    %v235 = vld [vmem:[#allocation6 + $0x368] sm:$0xff]
    %v236 = vld [vmem:[#allocation6 + $0x370] sm:$0xff]
    %v237 = vld [vmem:[#allocation6 + $0x378] sm:$0xff]
    %v238 = vld [vmem:[#allocation6 + $0x380] sm:$0xff]
    %v239 = vld [vmem:[#allocation6 + $0x388] sm:$0xff]
    %v240 = vld [vmem:[#allocation6 + $0x390] sm:$0xff]
    %v241 = vld [vmem:[#allocation6 + $0x398] sm:$0xff]
    %v242 = vld [vmem:[#allocation6 + $0x3a0] sm:$0xff]
    %v243 = vld [vmem:[#allocation6 + $0x3a8] sm:$0xff]
    %v244 = vld [vmem:[#allocation6 + $0x3b0] sm:$0xff]
    %v245 = vld [vmem:[#allocation6 + $0x3b8] sm:$0xff]
    %v246 = vld [vmem:[#allocation6 + $0x3c0] sm:$0xff]
    %v247 = vld [vmem:[#allocation6 + $0x3c8] sm:$0xff]
    %v248 = vld [vmem:[#allocation6 + $0x3d0] sm:$0xff]
    %v249 = vld [vmem:[#allocation6 + $0x3d8] sm:$0xff]
    %v250 = vld [vmem:[#allocation6 + $0x3e0] sm:$0xff]
    %v251 = vld [vmem:[#allocation6 + $0x3e8] sm:$0xff]
    %v252 = vld [vmem:[#allocation6 + $0x3f0] sm:$0xff]
    %v253 = vld [vmem:[#allocation6 + $0x3f8] sm:$0xff]
    %v254 = vld [vmem:[#allocation6 + $0x400] sm:$0xff]
    %v255 = vld [vmem:[#allocation6 + $0x408] sm:$0xff]
    %v256 = vld [vmem:[#allocation6 + $0x410] sm:$0xff]
    %v257 = vld [vmem:[#allocation6 + $0x418] sm:$0xff]
    %v258 = vld [vmem:[#allocation6 + $0x420] sm:$0xff]
    %v259 = vld [vmem:[#allocation6 + $0x428] sm:$0xff]
    %v260 = vld [vmem:[#allocation6 + $0x430] sm:$0xff]
    %v261 = vld [vmem:[#allocation6 + $0x438] sm:$0xff]
    %v262 = vld [vmem:[#allocation6 + $0x440] sm:$0xff]
    %v263 = vld [vmem:[#allocation6 + $0x448] sm:$0xff]
    %v264 = vld [vmem:[#allocation6 + $0x450] sm:$0xff]
    %v265 = vld [vmem:[#allocation6 + $0x458] sm:$0xff]
    %v266 = vld [vmem:[#allocation6 + $0x460] sm:$0xff]
    %v267 = vld [vmem:[#allocation6 + $0x468] sm:$0xff]
    %v268 = vld [vmem:[#allocation6 + $0x470] sm:$0xff]
    %v269 = vld [vmem:[#allocation6 + $0x478] sm:$0xff]
    %v270 = vld [vmem:[#allocation6 + $0x480] sm:$0xff]
    %v271 = vld [vmem:[#allocation6 + $0x488] sm:$0xff]
    %v272 = vld [vmem:[#allocation6 + $0x490] sm:$0xff]
    %v273 = vld [vmem:[#allocation6 + $0x498] sm:$0xff]
    %v274 = vld [vmem:[#allocation6 + $0x4a0] sm:$0xff]
    %v275 = vld [vmem:[#allocation6 + $0x4a8] sm:$0xff]
    %v276 = vld [vmem:[#allocation6 + $0x4b0] sm:$0xff]
    %v277 = vld [vmem:[#allocation6 + $0x4b8] sm:$0xff]
    %v278 = vld [vmem:[#allocation6 + $0x4c0] sm:$0xff]
    %v279 = vld [vmem:[#allocation6 + $0x4c8] sm:$0xff]
    %v280 = vld [vmem:[#allocation6 + $0x4d0] sm:$0xff]
    %v281 = vld [vmem:[#allocation6 + $0x4d8] sm:$0xff]
    %v282 = vld [vmem:[#allocation6 + $0x4e0] sm:$0xff]
    %v283 = vld [vmem:[#allocation6 + $0x4e8] sm:$0xff]
    %v284 = vld [vmem:[#allocation6 + $0x4f0] sm:$0xff]
    %v285 = vld [vmem:[#allocation6 + $0x4f8] sm:$0xff]
    %v286 = vld [vmem:[#allocation6 + $0x500] sm:$0xff]
    %v287 = vld [vmem:[#allocation6 + $0x508] sm:$0xff]
    %v288 = vld [vmem:[#allocation6 + $0x510] sm:$0xff]
    %v289 = vld [vmem:[#allocation6 + $0x518] sm:$0xff]
    %v290 = vld [vmem:[#allocation6 + $0x520] sm:$0xff]
    %v291 = vld [vmem:[#allocation6 + $0x528] sm:$0xff]
    %v292 = vld [vmem:[#allocation6 + $0x530] sm:$0xff]
    %v293 = vld [vmem:[#allocation6 + $0x538] sm:$0xff]
    %v294 = vld [vmem:[#allocation6 + $0x540] sm:$0xff]
    %v295 = vld [vmem:[#allocation6 + $0x548] sm:$0xff]
    %v296 = vld [vmem:[#allocation6 + $0x550] sm:$0xff]
    %v297 = vld [vmem:[#allocation6 + $0x558] sm:$0xff]
    %v298 = vld [vmem:[#allocation6 + $0x560] sm:$0xff]
    %v299 = vld [vmem:[#allocation6 + $0x568] sm:$0xff]
    %v300 = vld [vmem:[#allocation6 + $0x570] sm:$0xff]
    %v301 = vld [vmem:[#allocation6 + $0x578] sm:$0xff]
    %v302 = vld [vmem:[#allocation6 + $0x580] sm:$0xff]
    %v303 = vld [vmem:[#allocation6 + $0x588] sm:$0xff]
    %v304 = vld [vmem:[#allocation6 + $0x590] sm:$0xff]
    %v305 = vld [vmem:[#allocation6 + $0x598] sm:$0xff]
    %v306 = vld [vmem:[#allocation6 + $0x5a0] sm:$0xff]
    %v307 = vld [vmem:[#allocation6 + $0x5a8] sm:$0xff]
    %v308 = vld [vmem:[#allocation6 + $0x5b0] sm:$0xff]
    %v309 = vld [vmem:[#allocation6 + $0x5b8] sm:$0xff]
    %v310 = vld [vmem:[#allocation6 + $0x5c0] sm:$0xff]
    %v311 = vld [vmem:[#allocation6 + $0x5c8] sm:$0xff]
    %v312 = vld [vmem:[#allocation6 + $0x5d0] sm:$0xff]
    %v313 = vld [vmem:[#allocation6 + $0x5d8] sm:$0xff]
    %v314 = vld [vmem:[#allocation6 + $0x5e0] sm:$0xff]
    %v315 = vld [vmem:[#allocation6 + $0x5e8] sm:$0xff]
    %v316 = vld [vmem:[#allocation6 + $0x5f0] sm:$0xff]
    %v317 = vld [vmem:[#allocation6 + $0x5f8] sm:$0xff]
    %v318 = vld [vmem:[#allocation6 + $0x600] sm:$0xff]
    %v319 = vld [vmem:[#allocation6 + $0x608] sm:$0xff]
    %v320 = vld [vmem:[#allocation6 + $0x610] sm:$0xff]
    %v321 = vld [vmem:[#allocation6 + $0x618] sm:$0xff]
    %v322 = vld [vmem:[#allocation6 + $0x620] sm:$0xff]
    %v323 = vld [vmem:[#allocation6 + $0x628] sm:$0xff]
    %v324 = vld [vmem:[#allocation6 + $0x630] sm:$0xff]
    %v325 = vld [vmem:[#allocation6 + $0x638] sm:$0xff]
    %v326 = vld [vmem:[#allocation6 + $0x640] sm:$0xff]
    %v327 = vld [vmem:[#allocation6 + $0x648] sm:$0xff]
    %v328 = vld [vmem:[#allocation6 + $0x650] sm:$0xff]
    %v329 = vld [vmem:[#allocation6 + $0x658] sm:$0xff]
    %v330 = vld [vmem:[#allocation6 + $0x660] sm:$0xff]
    %v331 = vld [vmem:[#allocation6 + $0x668] sm:$0xff]
    %v332 = vld [vmem:[#allocation6 + $0x670] sm:$0xff]
    %v333 = vld [vmem:[#allocation6 + $0x678] sm:$0xff]
    %v334 = vld [vmem:[#allocation6 + $0x680] sm:$0xff]
    %v335 = vld [vmem:[#allocation6 + $0x688] sm:$0xff]
    %v336 = vld [vmem:[#allocation6 + $0x690] sm:$0xff]
    %v337 = vld [vmem:[#allocation6 + $0x698] sm:$0xff]
    %v338 = vld [vmem:[#allocation6 + $0x6a0] sm:$0xff]
    %v339 = vld [vmem:[#allocation6 + $0x6a8] sm:$0xff]
    %v340 = vld [vmem:[#allocation6 + $0x6b0] sm:$0xff]
    %v341 = vld [vmem:[#allocation6 + $0x6b8] sm:$0xff]
    %v342 = vld [vmem:[#allocation6 + $0x6c0] sm:$0xff]
    %v343 = vld [vmem:[#allocation6 + $0x6c8] sm:$0xff]
    %v344 = vld [vmem:[#allocation6 + $0x6d0] sm:$0xff]
    %v345 = vld [vmem:[#allocation6 + $0x6d8] sm:$0xff]
    %v346 = vld [vmem:[#allocation6 + $0x6e0] sm:$0xff]
    %v347 = vld [vmem:[#allocation6 + $0x6e8] sm:$0xff]
    %v348 = vld [vmem:[#allocation6 + $0x6f0] sm:$0xff]
    %v349 = vld [vmem:[#allocation6 + $0x6f8] sm:$0xff]
    %v350 = vld [vmem:[#allocation6 + $0x700] sm:$0xff]
    %v351 = vld [vmem:[#allocation6 + $0x708] sm:$0xff]
    %v352 = vld [vmem:[#allocation6 + $0x710] sm:$0xff]
    %v353 = vld [vmem:[#allocation6 + $0x718] sm:$0xff]
    %v354 = vld [vmem:[#allocation6 + $0x720] sm:$0xff]
    %v355 = vld [vmem:[#allocation6 + $0x728] sm:$0xff]
    %v356 = vld [vmem:[#allocation6 + $0x730] sm:$0xff]
    %v357 = vld [vmem:[#allocation6 + $0x738] sm:$0xff]
    %v358 = vld [vmem:[#allocation6 + $0x740] sm:$0xff]
    %v359 = vld [vmem:[#allocation6 + $0x748] sm:$0xff]
    %v360 = vld [vmem:[#allocation6 + $0x750] sm:$0xff]
    %v361 = vld [vmem:[#allocation6 + $0x758] sm:$0xff]
    %v362 = vld [vmem:[#allocation6 + $0x760] sm:$0xff]
    %v363 = vld [vmem:[#allocation6 + $0x768] sm:$0xff]
    %v364 = vld [vmem:[#allocation6 + $0x770] sm:$0xff]
    %v365 = vld [vmem:[#allocation6 + $0x778] sm:$0xff]
    %v366 = vld [vmem:[#allocation6 + $0x780] sm:$0xff]
    %v367 = vld [vmem:[#allocation6 + $0x788] sm:$0xff]
    %v368 = vld [vmem:[#allocation6 + $0x790] sm:$0xff]
    %v369 = vld [vmem:[#allocation6 + $0x798] sm:$0xff]
    %v370 = vld [vmem:[#allocation6 + $0x7a0] sm:$0xff]
    %v371 = vld [vmem:[#allocation6 + $0x7a8] sm:$0xff]
    %v372 = vld [vmem:[#allocation6 + $0x7b0] sm:$0xff]
    %v373 = vld [vmem:[#allocation6 + $0x7b8] sm:$0xff]
    %v374 = vld [vmem:[#allocation6 + $0x7c0] sm:$0xff]
    %v375 = vld [vmem:[#allocation6 + $0x7c8] sm:$0xff]
    %v376 = vld [vmem:[#allocation6 + $0x7d0] sm:$0xff]
    %v377 = vld [vmem:[#allocation6 + $0x7d8] sm:$0xff]
    %v378 = vld [vmem:[#allocation6 + $0x7e0] sm:$0xff]
    %v379 = vld [vmem:[#allocation6 + $0x7e8] sm:$0xff]
    %v380 = vld [vmem:[#allocation6 + $0x7f0] sm:$0xff]
    %v381 = vld [vmem:[#allocation6 + $0x7f8] sm:$0xff]
    %v382 = vld [vmem:[%s4] sm:$0x3]
    %v384 = vlaneseq
    %v385 = vshrl.u32 %v384, 7
    %v386 = vsub.s32 0, %v385
    %v387 = vrot.slane %v382, %v386
    %v388 = vlaneseq
    %v389 = vshrl.u32 %v388, 7
    %v390 = vsub.s32 1, %v389
    %v391 = vrot.slane %v382, %v390
    %v402 = vunpack.c.l.b16 %v118
    %v403 = vunpack.c.h.b16 %v118
    %v404 = vunpack.c.l.b16 %v119
    %v405 = vunpack.c.h.b16 %v119
    %v406 = vunpack.c.l.b16 %v120
    %v407 = vunpack.c.h.b16 %v120
    %v408 = vunpack.c.l.b16 %v121
    %v409 = vunpack.c.h.b16 %v121
    %v410 = vunpack.c.l.b16 %v122
    %v411 = vunpack.c.h.b16 %v122
    %v412 = vunpack.c.l.b16 %v123
    %v413 = vunpack.c.h.b16 %v123
    %v414 = vunpack.c.l.b16 %v124
    %v415 = vunpack.c.h.b16 %v124
    %v416 = vunpack.c.l.b16 %v125
    %v417 = vunpack.c.h.b16 %v125
    %v418 = vpack.c.b16 %v402, %v402
    %v419 = vpack.c.b16 %v403, %v403
    %v420 = vpack.c.b16 %v404, %v404
    %v421 = vpack.c.b16 %v405, %v405
    %v422 = vpack.c.b16 %v406, %v406
    %v423 = vpack.c.b16 %v407, %v407
    %v424 = vpack.c.b16 %v408, %v408
    %v425 = vpack.c.b16 %v409, %v409
    %v426 = vpack.c.b16 %v410, %v410
    %v427 = vpack.c.b16 %v411, %v411
    %v428 = vpack.c.b16 %v412, %v412
    %v429 = vpack.c.b16 %v413, %v413
    %v430 = vpack.c.b16 %v414, %v414
    %v431 = vpack.c.b16 %v415, %v415
    %v432 = vpack.c.b16 %v416, %v416
    %v433 = vpack.c.b16 %v417, %v417
    %v706 = vunpack.c.l.b16 %v126
    %v707 = vunpack.c.h.b16 %v126
    %v708 = vunpack.c.l.b16 %v127
    %v709 = vunpack.c.h.b16 %v127
    %v710 = vunpack.c.l.b16 %v128
    %v711 = vunpack.c.h.b16 %v128
    %v712 = vunpack.c.l.b16 %v129
    %v713 = vunpack.c.h.b16 %v129
    %v714 = vunpack.c.l.b16 %v130
    %v715 = vunpack.c.h.b16 %v130
    %v716 = vunpack.c.l.b16 %v131
    %v717 = vunpack.c.h.b16 %v131
    %v718 = vunpack.c.l.b16 %v132
    %v719 = vunpack.c.h.b16 %v132
    %v720 = vunpack.c.l.b16 %v133
    %v721 = vunpack.c.h.b16 %v133
    %v722 = vunpack.c.l.b16 %v134
    %v723 = vunpack.c.h.b16 %v134
    %v724 = vunpack.c.l.b16 %v135
    %v725 = vunpack.c.h.b16 %v135
    %v726 = vunpack.c.l.b16 %v136
    %v727 = vunpack.c.h.b16 %v136
    %v728 = vunpack.c.l.b16 %v137
    %v729 = vunpack.c.h.b16 %v137
    %v730 = vunpack.c.l.b16 %v138
    %v731 = vunpack.c.h.b16 %v138
    %v732 = vunpack.c.l.b16 %v139
    %v733 = vunpack.c.h.b16 %v139
    %v734 = vunpack.c.l.b16 %v140
    %v735 = vunpack.c.h.b16 %v140
    %v736 = vunpack.c.l.b16 %v141
    %v737 = vunpack.c.h.b16 %v141
    %v738 = vunpack.c.l.b16 %v142
    %v739 = vunpack.c.h.b16 %v142
    %v740 = vunpack.c.l.b16 %v143
    %v741 = vunpack.c.h.b16 %v143
    %v742 = vunpack.c.l.b16 %v144
    %v743 = vunpack.c.h.b16 %v144
    %v744 = vunpack.c.l.b16 %v145
    %v745 = vunpack.c.h.b16 %v145
    %v746 = vunpack.c.l.b16 %v146
    %v747 = vunpack.c.h.b16 %v146
    %v748 = vunpack.c.l.b16 %v147
    %v749 = vunpack.c.h.b16 %v147
    %v750 = vunpack.c.l.b16 %v148
    %v751 = vunpack.c.h.b16 %v148
    %v752 = vunpack.c.l.b16 %v149
    %v753 = vunpack.c.h.b16 %v149
    %v754 = vunpack.c.l.b16 %v150
    %v755 = vunpack.c.h.b16 %v150
    %v756 = vunpack.c.l.b16 %v151
    %v757 = vunpack.c.h.b16 %v151
    %v758 = vunpack.c.l.b16 %v152
    %v759 = vunpack.c.h.b16 %v152
    %v760 = vunpack.c.l.b16 %v153
    %v761 = vunpack.c.h.b16 %v153
    %v762 = vunpack.c.l.b16 %v154
    %v763 = vunpack.c.h.b16 %v154
    %v764 = vunpack.c.l.b16 %v155
    %v765 = vunpack.c.h.b16 %v155
    %v766 = vunpack.c.l.b16 %v156
    %v767 = vunpack.c.h.b16 %v156
    %v768 = vunpack.c.l.b16 %v157
    %v769 = vunpack.c.h.b16 %v157
    %v770 = vunpack.c.l.b16 %v158
    %v771 = vunpack.c.h.b16 %v158
    %v772 = vunpack.c.l.b16 %v159
    %v773 = vunpack.c.h.b16 %v159
    %v774 = vunpack.c.l.b16 %v160
    %v775 = vunpack.c.h.b16 %v160
    %v776 = vunpack.c.l.b16 %v161
    %v777 = vunpack.c.h.b16 %v161
    %v778 = vunpack.c.l.b16 %v162
    %v779 = vunpack.c.h.b16 %v162
    %v780 = vunpack.c.l.b16 %v163
    %v781 = vunpack.c.h.b16 %v163
    %v782 = vunpack.c.l.b16 %v164
    %v783 = vunpack.c.h.b16 %v164
    %v784 = vunpack.c.l.b16 %v165
    %v785 = vunpack.c.h.b16 %v165
    %v786 = vunpack.c.l.b16 %v166
    %v787 = vunpack.c.h.b16 %v166
    %v788 = vunpack.c.l.b16 %v167
    %v789 = vunpack.c.h.b16 %v167
    %v790 = vunpack.c.l.b16 %v168
    %v791 = vunpack.c.h.b16 %v168
    %v792 = vunpack.c.l.b16 %v169
    %v793 = vunpack.c.h.b16 %v169
    %v794 = vunpack.c.l.b16 %v170
    %v795 = vunpack.c.h.b16 %v170
    %v796 = vunpack.c.l.b16 %v171
    %v797 = vunpack.c.h.b16 %v171
    %v798 = vunpack.c.l.b16 %v172
    %v799 = vunpack.c.h.b16 %v172
    %v800 = vunpack.c.l.b16 %v173
    %v801 = vunpack.c.h.b16 %v173
    %v802 = vunpack.c.l.b16 %v174
    %v803 = vunpack.c.h.b16 %v174
    %v804 = vunpack.c.l.b16 %v175
    %v805 = vunpack.c.h.b16 %v175
    %v806 = vunpack.c.l.b16 %v176
    %v807 = vunpack.c.h.b16 %v176
    %v808 = vunpack.c.l.b16 %v177
    %v809 = vunpack.c.h.b16 %v177
    %v810 = vunpack.c.l.b16 %v178
    %v811 = vunpack.c.h.b16 %v178
    %v812 = vunpack.c.l.b16 %v179
    %v813 = vunpack.c.h.b16 %v179
    %v814 = vunpack.c.l.b16 %v180
    %v815 = vunpack.c.h.b16 %v180
    %v816 = vunpack.c.l.b16 %v181
    %v817 = vunpack.c.h.b16 %v181
    %v818 = vunpack.c.l.b16 %v182
    %v819 = vunpack.c.h.b16 %v182
    %v820 = vunpack.c.l.b16 %v183
    %v821 = vunpack.c.h.b16 %v183
    %v822 = vunpack.c.l.b16 %v184
    %v823 = vunpack.c.h.b16 %v184
    %v824 = vunpack.c.l.b16 %v185
    %v825 = vunpack.c.h.b16 %v185
    %v826 = vunpack.c.l.b16 %v186
    %v827 = vunpack.c.h.b16 %v186
    %v828 = vunpack.c.l.b16 %v187
    %v829 = vunpack.c.h.b16 %v187
    %v830 = vunpack.c.l.b16 %v188
    %v831 = vunpack.c.h.b16 %v188
    %v832 = vunpack.c.l.b16 %v189
    %v833 = vunpack.c.h.b16 %v189
    %v834 = vunpack.c.l.b16 %v190
    %v835 = vunpack.c.h.b16 %v190
    %v836 = vunpack.c.l.b16 %v191
    %v837 = vunpack.c.h.b16 %v191
    %v838 = vunpack.c.l.b16 %v192
    %v839 = vunpack.c.h.b16 %v192
    %v840 = vunpack.c.l.b16 %v193
    %v841 = vunpack.c.h.b16 %v193
    %v842 = vunpack.c.l.b16 %v194
    %v843 = vunpack.c.h.b16 %v194
    %v844 = vunpack.c.l.b16 %v195
    %v845 = vunpack.c.h.b16 %v195
    %v846 = vunpack.c.l.b16 %v196
    %v847 = vunpack.c.h.b16 %v196
    %v848 = vunpack.c.l.b16 %v197
    %v849 = vunpack.c.h.b16 %v197
    %v850 = vunpack.c.l.b16 %v198
    %v851 = vunpack.c.h.b16 %v198
    %v852 = vunpack.c.l.b16 %v199
    %v853 = vunpack.c.h.b16 %v199
    %v854 = vunpack.c.l.b16 %v200
    %v855 = vunpack.c.h.b16 %v200
    %v856 = vunpack.c.l.b16 %v201
    %v857 = vunpack.c.h.b16 %v201
    %v858 = vunpack.c.l.b16 %v202
    %v859 = vunpack.c.h.b16 %v202
    %v860 = vunpack.c.l.b16 %v203
    %v861 = vunpack.c.h.b16 %v203
    %v862 = vunpack.c.l.b16 %v204
    %v863 = vunpack.c.h.b16 %v204
    %v864 = vunpack.c.l.b16 %v205
    %v865 = vunpack.c.h.b16 %v205
    %v866 = vunpack.c.l.b16 %v206
    %v867 = vunpack.c.h.b16 %v206
    %v868 = vunpack.c.l.b16 %v207
    %v869 = vunpack.c.h.b16 %v207
    %v870 = vunpack.c.l.b16 %v208
    %v871 = vunpack.c.h.b16 %v208
    %v872 = vunpack.c.l.b16 %v209
    %v873 = vunpack.c.h.b16 %v209
    %v874 = vunpack.c.l.b16 %v210
    %v875 = vunpack.c.h.b16 %v210
    %v876 = vunpack.c.l.b16 %v211
    %v877 = vunpack.c.h.b16 %v211
    %v878 = vunpack.c.l.b16 %v212
    %v879 = vunpack.c.h.b16 %v212
    %v880 = vunpack.c.l.b16 %v213
    %v881 = vunpack.c.h.b16 %v213
    %v882 = vunpack.c.l.b16 %v214
    %v883 = vunpack.c.h.b16 %v214
    %v884 = vunpack.c.l.b16 %v215
    %v885 = vunpack.c.h.b16 %v215
    %v886 = vunpack.c.l.b16 %v216
    %v887 = vunpack.c.h.b16 %v216
    %v888 = vunpack.c.l.b16 %v217
    %v889 = vunpack.c.h.b16 %v217
    %v890 = vunpack.c.l.b16 %v218
    %v891 = vunpack.c.h.b16 %v218
    %v892 = vunpack.c.l.b16 %v219
    %v893 = vunpack.c.h.b16 %v219
    %v894 = vunpack.c.l.b16 %v220
    %v895 = vunpack.c.h.b16 %v220
    %v896 = vunpack.c.l.b16 %v221
    %v897 = vunpack.c.h.b16 %v221
    %v898 = vunpack.c.l.b16 %v222
    %v899 = vunpack.c.h.b16 %v222
    %v900 = vunpack.c.l.b16 %v223
    %v901 = vunpack.c.h.b16 %v223
    %v902 = vunpack.c.l.b16 %v224
    %v903 = vunpack.c.h.b16 %v224
    %v904 = vunpack.c.l.b16 %v225
    %v905 = vunpack.c.h.b16 %v225
    %v906 = vunpack.c.l.b16 %v226
    %v907 = vunpack.c.h.b16 %v226
    %v908 = vunpack.c.l.b16 %v227
    %v909 = vunpack.c.h.b16 %v227
    %v910 = vunpack.c.l.b16 %v228
    %v911 = vunpack.c.h.b16 %v228
    %v912 = vunpack.c.l.b16 %v229
    %v913 = vunpack.c.h.b16 %v229
    %v914 = vunpack.c.l.b16 %v230
    %v915 = vunpack.c.h.b16 %v230
    %v916 = vunpack.c.l.b16 %v231
    %v917 = vunpack.c.h.b16 %v231
    %v918 = vunpack.c.l.b16 %v232
    %v919 = vunpack.c.h.b16 %v232
    %v920 = vunpack.c.l.b16 %v233
    %v921 = vunpack.c.h.b16 %v233
    %v922 = vunpack.c.l.b16 %v234
    %v923 = vunpack.c.h.b16 %v234
    %v924 = vunpack.c.l.b16 %v235
    %v925 = vunpack.c.h.b16 %v235
    %v926 = vunpack.c.l.b16 %v236
    %v927 = vunpack.c.h.b16 %v236
    %v928 = vunpack.c.l.b16 %v237
    %v929 = vunpack.c.h.b16 %v237
    %v930 = vunpack.c.l.b16 %v238
    %v931 = vunpack.c.h.b16 %v238
    %v932 = vunpack.c.l.b16 %v239
    %v933 = vunpack.c.h.b16 %v239
    %v934 = vunpack.c.l.b16 %v240
    %v935 = vunpack.c.h.b16 %v240
    %v936 = vunpack.c.l.b16 %v241
    %v937 = vunpack.c.h.b16 %v241
    %v938 = vunpack.c.l.b16 %v242
    %v939 = vunpack.c.h.b16 %v242
    %v940 = vunpack.c.l.b16 %v243
    %v941 = vunpack.c.h.b16 %v243
    %v942 = vunpack.c.l.b16 %v244
    %v943 = vunpack.c.h.b16 %v244
    %v944 = vunpack.c.l.b16 %v245
    %v945 = vunpack.c.h.b16 %v245
    %v946 = vunpack.c.l.b16 %v246
    %v947 = vunpack.c.h.b16 %v246
    %v948 = vunpack.c.l.b16 %v247
    %v949 = vunpack.c.h.b16 %v247
    %v950 = vunpack.c.l.b16 %v248
    %v951 = vunpack.c.h.b16 %v248
    %v952 = vunpack.c.l.b16 %v249
    %v953 = vunpack.c.h.b16 %v249
    %v954 = vunpack.c.l.b16 %v250
    %v955 = vunpack.c.h.b16 %v250
    %v956 = vunpack.c.l.b16 %v251
    %v957 = vunpack.c.h.b16 %v251
    %v958 = vunpack.c.l.b16 %v252
    %v959 = vunpack.c.h.b16 %v252
    %v960 = vunpack.c.l.b16 %v253
    %v961 = vunpack.c.h.b16 %v253
    %v962 = vunpack.c.l.b16 %v254
    %v963 = vunpack.c.h.b16 %v254
    %v964 = vunpack.c.l.b16 %v255
    %v965 = vunpack.c.h.b16 %v255
    %v966 = vunpack.c.l.b16 %v256
    %v967 = vunpack.c.h.b16 %v256
    %v968 = vunpack.c.l.b16 %v257
    %v969 = vunpack.c.h.b16 %v257
    %v970 = vunpack.c.l.b16 %v258
    %v971 = vunpack.c.h.b16 %v258
    %v972 = vunpack.c.l.b16 %v259
    %v973 = vunpack.c.h.b16 %v259
    %v974 = vunpack.c.l.b16 %v260
    %v975 = vunpack.c.h.b16 %v260
    %v976 = vunpack.c.l.b16 %v261
    %v977 = vunpack.c.h.b16 %v261
    %v978 = vunpack.c.l.b16 %v262
    %v979 = vunpack.c.h.b16 %v262
    %v980 = vunpack.c.l.b16 %v263
    %v981 = vunpack.c.h.b16 %v263
    %v982 = vunpack.c.l.b16 %v264
    %v983 = vunpack.c.h.b16 %v264
    %v984 = vunpack.c.l.b16 %v265
    %v985 = vunpack.c.h.b16 %v265
    %v986 = vunpack.c.l.b16 %v266
    %v987 = vunpack.c.h.b16 %v266
    %v988 = vunpack.c.l.b16 %v267
    %v989 = vunpack.c.h.b16 %v267
    %v990 = vunpack.c.l.b16 %v268
    %v991 = vunpack.c.h.b16 %v268
    %v992 = vunpack.c.l.b16 %v269
    %v993 = vunpack.c.h.b16 %v269
    %v994 = vunpack.c.l.b16 %v270
    %v995 = vunpack.c.h.b16 %v270
    %v996 = vunpack.c.l.b16 %v271
    %v997 = vunpack.c.h.b16 %v271
    %v998 = vunpack.c.l.b16 %v272
    %v999 = vunpack.c.h.b16 %v272
    %v1000 = vunpack.c.l.b16 %v273
    %v1001 = vunpack.c.h.b16 %v273
    %v1002 = vunpack.c.l.b16 %v274
    %v1003 = vunpack.c.h.b16 %v274
    %v1004 = vunpack.c.l.b16 %v275
    %v1005 = vunpack.c.h.b16 %v275
    %v1006 = vunpack.c.l.b16 %v276
    %v1007 = vunpack.c.h.b16 %v276
    %v1008 = vunpack.c.l.b16 %v277
    %v1009 = vunpack.c.h.b16 %v277
    %v1010 = vunpack.c.l.b16 %v278
    %v1011 = vunpack.c.h.b16 %v278
    %v1012 = vunpack.c.l.b16 %v279
    %v1013 = vunpack.c.h.b16 %v279
    %v1014 = vunpack.c.l.b16 %v280
    %v1015 = vunpack.c.h.b16 %v280
    %v1016 = vunpack.c.l.b16 %v281
    %v1017 = vunpack.c.h.b16 %v281
    %v1018 = vunpack.c.l.b16 %v282
    %v1019 = vunpack.c.h.b16 %v282
    %v1020 = vunpack.c.l.b16 %v283
    %v1021 = vunpack.c.h.b16 %v283
    %v1022 = vunpack.c.l.b16 %v284
    %v1023 = vunpack.c.h.b16 %v284
    %v1024 = vunpack.c.l.b16 %v285
    %v1025 = vunpack.c.h.b16 %v285
    %v1026 = vunpack.c.l.b16 %v286
    %v1027 = vunpack.c.h.b16 %v286
    %v1028 = vunpack.c.l.b16 %v287
    %v1029 = vunpack.c.h.b16 %v287
    %v1030 = vunpack.c.l.b16 %v288
    %v1031 = vunpack.c.h.b16 %v288
    %v1032 = vunpack.c.l.b16 %v289
    %v1033 = vunpack.c.h.b16 %v289
    %v1034 = vunpack.c.l.b16 %v290
    %v1035 = vunpack.c.h.b16 %v290
    %v1036 = vunpack.c.l.b16 %v291
    %v1037 = vunpack.c.h.b16 %v291
    %v1038 = vunpack.c.l.b16 %v292
    %v1039 = vunpack.c.h.b16 %v292
    %v1040 = vunpack.c.l.b16 %v293
    %v1041 = vunpack.c.h.b16 %v293
    %v1042 = vunpack.c.l.b16 %v294
    %v1043 = vunpack.c.h.b16 %v294
    %v1044 = vunpack.c.l.b16 %v295
    %v1045 = vunpack.c.h.b16 %v295
    %v1046 = vunpack.c.l.b16 %v296
    %v1047 = vunpack.c.h.b16 %v296
    %v1048 = vunpack.c.l.b16 %v297
    %v1049 = vunpack.c.h.b16 %v297
    %v1050 = vunpack.c.l.b16 %v298
    %v1051 = vunpack.c.h.b16 %v298
    %v1052 = vunpack.c.l.b16 %v299
    %v1053 = vunpack.c.h.b16 %v299
    %v1054 = vunpack.c.l.b16 %v300
    %v1055 = vunpack.c.h.b16 %v300
    %v1056 = vunpack.c.l.b16 %v301
    %v1057 = vunpack.c.h.b16 %v301
    %v1058 = vunpack.c.l.b16 %v302
    %v1059 = vunpack.c.h.b16 %v302
    %v1060 = vunpack.c.l.b16 %v303
    %v1061 = vunpack.c.h.b16 %v303
    %v1062 = vunpack.c.l.b16 %v304
    %v1063 = vunpack.c.h.b16 %v304
    %v1064 = vunpack.c.l.b16 %v305
    %v1065 = vunpack.c.h.b16 %v305
    %v1066 = vunpack.c.l.b16 %v306
    %v1067 = vunpack.c.h.b16 %v306
    %v1068 = vunpack.c.l.b16 %v307
    %v1069 = vunpack.c.h.b16 %v307
    %v1070 = vunpack.c.l.b16 %v308
    %v1071 = vunpack.c.h.b16 %v308
    %v1072 = vunpack.c.l.b16 %v309
    %v1073 = vunpack.c.h.b16 %v309
    %v1074 = vunpack.c.l.b16 %v310
    %v1075 = vunpack.c.h.b16 %v310
    %v1076 = vunpack.c.l.b16 %v311
    %v1077 = vunpack.c.h.b16 %v311
    %v1078 = vunpack.c.l.b16 %v312
    %v1079 = vunpack.c.h.b16 %v312
    %v1080 = vunpack.c.l.b16 %v313
    %v1081 = vunpack.c.h.b16 %v313
    %v1082 = vunpack.c.l.b16 %v314
    %v1083 = vunpack.c.h.b16 %v314
    %v1084 = vunpack.c.l.b16 %v315
    %v1085 = vunpack.c.h.b16 %v315
    %v1086 = vunpack.c.l.b16 %v316
    %v1087 = vunpack.c.h.b16 %v316
    %v1088 = vunpack.c.l.b16 %v317
    %v1089 = vunpack.c.h.b16 %v317
    %v1090 = vunpack.c.l.b16 %v318
    %v1091 = vunpack.c.h.b16 %v318
    %v1092 = vunpack.c.l.b16 %v319
    %v1093 = vunpack.c.h.b16 %v319
    %v1094 = vunpack.c.l.b16 %v320
    %v1095 = vunpack.c.h.b16 %v320
    %v1096 = vunpack.c.l.b16 %v321
    %v1097 = vunpack.c.h.b16 %v321
    %v1098 = vunpack.c.l.b16 %v322
    %v1099 = vunpack.c.h.b16 %v322
    %v1100 = vunpack.c.l.b16 %v323
    %v1101 = vunpack.c.h.b16 %v323
    %v1102 = vunpack.c.l.b16 %v324
    %v1103 = vunpack.c.h.b16 %v324
    %v1104 = vunpack.c.l.b16 %v325
    %v1105 = vunpack.c.h.b16 %v325
    %v1106 = vunpack.c.l.b16 %v326
    %v1107 = vunpack.c.h.b16 %v326
    %v1108 = vunpack.c.l.b16 %v327
    %v1109 = vunpack.c.h.b16 %v327
    %v1110 = vunpack.c.l.b16 %v328
    %v1111 = vunpack.c.h.b16 %v328
    %v1112 = vunpack.c.l.b16 %v329
    %v1113 = vunpack.c.h.b16 %v329
    %v1114 = vunpack.c.l.b16 %v330
    %v1115 = vunpack.c.h.b16 %v330
    %v1116 = vunpack.c.l.b16 %v331
    %v1117 = vunpack.c.h.b16 %v331
    %v1118 = vunpack.c.l.b16 %v332
    %v1119 = vunpack.c.h.b16 %v332
    %v1120 = vunpack.c.l.b16 %v333
    %v1121 = vunpack.c.h.b16 %v333
    %v1122 = vunpack.c.l.b16 %v334
    %v1123 = vunpack.c.h.b16 %v334
    %v1124 = vunpack.c.l.b16 %v335
    %v1125 = vunpack.c.h.b16 %v335
    %v1126 = vunpack.c.l.b16 %v336
    %v1127 = vunpack.c.h.b16 %v336
    %v1128 = vunpack.c.l.b16 %v337
    %v1129 = vunpack.c.h.b16 %v337
    %v1130 = vunpack.c.l.b16 %v338
    %v1131 = vunpack.c.h.b16 %v338
    %v1132 = vunpack.c.l.b16 %v339
    %v1133 = vunpack.c.h.b16 %v339
    %v1134 = vunpack.c.l.b16 %v340
    %v1135 = vunpack.c.h.b16 %v340
    %v1136 = vunpack.c.l.b16 %v341
    %v1137 = vunpack.c.h.b16 %v341
    %v1138 = vunpack.c.l.b16 %v342
    %v1139 = vunpack.c.h.b16 %v342
    %v1140 = vunpack.c.l.b16 %v343
    %v1141 = vunpack.c.h.b16 %v343
    %v1142 = vunpack.c.l.b16 %v344
    %v1143 = vunpack.c.h.b16 %v344
    %v1144 = vunpack.c.l.b16 %v345
    %v1145 = vunpack.c.h.b16 %v345
    %v1146 = vunpack.c.l.b16 %v346
    %v1147 = vunpack.c.h.b16 %v346
    %v1148 = vunpack.c.l.b16 %v347
    %v1149 = vunpack.c.h.b16 %v347
    %v1150 = vunpack.c.l.b16 %v348
    %v1151 = vunpack.c.h.b16 %v348
    %v1152 = vunpack.c.l.b16 %v349
    %v1153 = vunpack.c.h.b16 %v349
    %v1154 = vunpack.c.l.b16 %v350
    %v1155 = vunpack.c.h.b16 %v350
    %v1156 = vunpack.c.l.b16 %v351
    %v1157 = vunpack.c.h.b16 %v351
    %v1158 = vunpack.c.l.b16 %v352
    %v1159 = vunpack.c.h.b16 %v352
    %v1160 = vunpack.c.l.b16 %v353
    %v1161 = vunpack.c.h.b16 %v353
    %v1162 = vunpack.c.l.b16 %v354
    %v1163 = vunpack.c.h.b16 %v354
    %v1164 = vunpack.c.l.b16 %v355
    %v1165 = vunpack.c.h.b16 %v355
    %v1166 = vunpack.c.l.b16 %v356
    %v1167 = vunpack.c.h.b16 %v356
    %v1168 = vunpack.c.l.b16 %v357
    %v1169 = vunpack.c.h.b16 %v357
    %v1170 = vunpack.c.l.b16 %v358
    %v1171 = vunpack.c.h.b16 %v358
    %v1172 = vunpack.c.l.b16 %v359
    %v1173 = vunpack.c.h.b16 %v359
    %v1174 = vunpack.c.l.b16 %v360
    %v1175 = vunpack.c.h.b16 %v360
    %v1176 = vunpack.c.l.b16 %v361
    %v1177 = vunpack.c.h.b16 %v361
    %v1178 = vunpack.c.l.b16 %v362
    %v1179 = vunpack.c.h.b16 %v362
    %v1180 = vunpack.c.l.b16 %v363
    %v1181 = vunpack.c.h.b16 %v363
    %v1182 = vunpack.c.l.b16 %v364
    %v1183 = vunpack.c.h.b16 %v364
    %v1184 = vunpack.c.l.b16 %v365
    %v1185 = vunpack.c.h.b16 %v365
    %v1186 = vunpack.c.l.b16 %v366
    %v1187 = vunpack.c.h.b16 %v366
    %v1188 = vunpack.c.l.b16 %v367
    %v1189 = vunpack.c.h.b16 %v367
    %v1190 = vunpack.c.l.b16 %v368
    %v1191 = vunpack.c.h.b16 %v368
    %v1192 = vunpack.c.l.b16 %v369
    %v1193 = vunpack.c.h.b16 %v369
    %v1194 = vunpack.c.l.b16 %v370
    %v1195 = vunpack.c.h.b16 %v370
    %v1196 = vunpack.c.l.b16 %v371
    %v1197 = vunpack.c.h.b16 %v371
    %v1198 = vunpack.c.l.b16 %v372
    %v1199 = vunpack.c.h.b16 %v372
    %v1200 = vunpack.c.l.b16 %v373
    %v1201 = vunpack.c.h.b16 %v373
    %v1202 = vunpack.c.l.b16 %v374
    %v1203 = vunpack.c.h.b16 %v374
    %v1204 = vunpack.c.l.b16 %v375
    %v1205 = vunpack.c.h.b16 %v375
    %v1206 = vunpack.c.l.b16 %v376
    %v1207 = vunpack.c.h.b16 %v376
    %v1208 = vunpack.c.l.b16 %v377
    %v1209 = vunpack.c.h.b16 %v377
    %v1210 = vunpack.c.l.b16 %v378
    %v1211 = vunpack.c.h.b16 %v378
    %v1212 = vunpack.c.l.b16 %v379
    %v1213 = vunpack.c.h.b16 %v379
    %v1214 = vunpack.c.l.b16 %v380
    %v1215 = vunpack.c.h.b16 %v380
    %v1216 = vunpack.c.l.b16 %v381
    %v1217 = vunpack.c.h.b16 %v381
    %v1218 = vpack.c.b16 %v708, %v706
    %v1219 = vpack.c.b16 %v709, %v707
    %v1220 = vpack.c.b16 %v712, %v710
    %v1221 = vpack.c.b16 %v713, %v711
    %v1222 = vpack.c.b16 %v716, %v714
    %v1223 = vpack.c.b16 %v717, %v715
    %v1224 = vpack.c.b16 %v720, %v718
    %v1225 = vpack.c.b16 %v721, %v719
    %v1226 = vpack.c.b16 %v724, %v722
    %v1227 = vpack.c.b16 %v725, %v723
    %v1228 = vpack.c.b16 %v728, %v726
    %v1229 = vpack.c.b16 %v729, %v727
    %v1230 = vpack.c.b16 %v732, %v730
    %v1231 = vpack.c.b16 %v733, %v731
    %v1232 = vpack.c.b16 %v736, %v734
    %v1233 = vpack.c.b16 %v737, %v735
    %v1234 = vpack.c.b16 %v740, %v738
    %v1235 = vpack.c.b16 %v741, %v739
    %v1236 = vpack.c.b16 %v744, %v742
    %v1237 = vpack.c.b16 %v745, %v743
    %v1238 = vpack.c.b16 %v748, %v746
    %v1239 = vpack.c.b16 %v749, %v747
    %v1240 = vpack.c.b16 %v752, %v750
    %v1241 = vpack.c.b16 %v753, %v751
    %v1242 = vpack.c.b16 %v756, %v754
    %v1243 = vpack.c.b16 %v757, %v755
    %v1244 = vpack.c.b16 %v760, %v758
    %v1245 = vpack.c.b16 %v761, %v759
    %v1246 = vpack.c.b16 %v764, %v762
    %v1247 = vpack.c.b16 %v765, %v763
    %v1248 = vpack.c.b16 %v768, %v766
    %v1249 = vpack.c.b16 %v769, %v767
    %v1250 = vpack.c.b16 %v772, %v770
    %v1251 = vpack.c.b16 %v773, %v771
    %v1252 = vpack.c.b16 %v776, %v774
    %v1253 = vpack.c.b16 %v777, %v775
    %v1254 = vpack.c.b16 %v780, %v778
    %v1255 = vpack.c.b16 %v781, %v779
    %v1256 = vpack.c.b16 %v784, %v782
    %v1257 = vpack.c.b16 %v785, %v783
    %v1258 = vpack.c.b16 %v788, %v786
    %v1259 = vpack.c.b16 %v789, %v787
    %v1260 = vpack.c.b16 %v792, %v790
    %v1261 = vpack.c.b16 %v793, %v791
    %v1262 = vpack.c.b16 %v796, %v794
    %v1263 = vpack.c.b16 %v797, %v795
    %v1264 = vpack.c.b16 %v800, %v798
    %v1265 = vpack.c.b16 %v801, %v799
    %v1266 = vpack.c.b16 %v804, %v802
    %v1267 = vpack.c.b16 %v805, %v803
    %v1268 = vpack.c.b16 %v808, %v806
    %v1269 = vpack.c.b16 %v809, %v807
    %v1270 = vpack.c.b16 %v812, %v810
    %v1271 = vpack.c.b16 %v813, %v811
    %v1272 = vpack.c.b16 %v816, %v814
    %v1273 = vpack.c.b16 %v817, %v815
    %v1274 = vpack.c.b16 %v820, %v818
    %v1275 = vpack.c.b16 %v821, %v819
    %v1276 = vpack.c.b16 %v824, %v822
    %v1277 = vpack.c.b16 %v825, %v823
    %v1278 = vpack.c.b16 %v828, %v826
    %v1279 = vpack.c.b16 %v829, %v827
    %v1280 = vpack.c.b16 %v832, %v830
    %v1281 = vpack.c.b16 %v833, %v831
    %v1282 = vpack.c.b16 %v836, %v834
    %v1283 = vpack.c.b16 %v837, %v835
    %v1284 = vpack.c.b16 %v840, %v838
    %v1285 = vpack.c.b16 %v841, %v839
    %v1286 = vpack.c.b16 %v844, %v842
    %v1287 = vpack.c.b16 %v845, %v843
    %v1288 = vpack.c.b16 %v848, %v846
    %v1289 = vpack.c.b16 %v849, %v847
    %v1290 = vpack.c.b16 %v852, %v850
    %v1291 = vpack.c.b16 %v853, %v851
    %v1292 = vpack.c.b16 %v856, %v854
    %v1293 = vpack.c.b16 %v857, %v855
    %v1294 = vpack.c.b16 %v860, %v858
    %v1295 = vpack.c.b16 %v861, %v859
    %v1296 = vpack.c.b16 %v864, %v862
    %v1297 = vpack.c.b16 %v865, %v863
    %v1298 = vpack.c.b16 %v868, %v866
    %v1299 = vpack.c.b16 %v869, %v867
    %v1300 = vpack.c.b16 %v872, %v870
    %v1301 = vpack.c.b16 %v873, %v871
    %v1302 = vpack.c.b16 %v876, %v874
    %v1303 = vpack.c.b16 %v877, %v875
    %v1304 = vpack.c.b16 %v880, %v878
    %v1305 = vpack.c.b16 %v881, %v879
    %v1306 = vpack.c.b16 %v884, %v882
    %v1307 = vpack.c.b16 %v885, %v883
    %v1308 = vpack.c.b16 %v888, %v886
    %v1309 = vpack.c.b16 %v889, %v887
    %v1310 = vpack.c.b16 %v892, %v890
    %v1311 = vpack.c.b16 %v893, %v891
    %v1312 = vpack.c.b16 %v896, %v894
    %v1313 = vpack.c.b16 %v897, %v895
    %v1314 = vpack.c.b16 %v900, %v898
    %v1315 = vpack.c.b16 %v901, %v899
    %v1316 = vpack.c.b16 %v904, %v902
    %v1317 = vpack.c.b16 %v905, %v903
    %v1318 = vpack.c.b16 %v908, %v906
    %v1319 = vpack.c.b16 %v909, %v907
    %v1320 = vpack.c.b16 %v912, %v910
    %v1321 = vpack.c.b16 %v913, %v911
    %v1322 = vpack.c.b16 %v916, %v914
    %v1323 = vpack.c.b16 %v917, %v915
    %v1324 = vpack.c.b16 %v920, %v918
    %v1325 = vpack.c.b16 %v921, %v919
    %v1326 = vpack.c.b16 %v924, %v922
    %v1327 = vpack.c.b16 %v925, %v923
    %v1328 = vpack.c.b16 %v928, %v926
    %v1329 = vpack.c.b16 %v929, %v927
    %v1330 = vpack.c.b16 %v932, %v930
    %v1331 = vpack.c.b16 %v933, %v931
    %v1332 = vpack.c.b16 %v936, %v934
    %v1333 = vpack.c.b16 %v937, %v935
    %v1334 = vpack.c.b16 %v940, %v938
    %v1335 = vpack.c.b16 %v941, %v939
    %v1336 = vpack.c.b16 %v944, %v942
    %v1337 = vpack.c.b16 %v945, %v943
    %v1338 = vpack.c.b16 %v948, %v946
    %v1339 = vpack.c.b16 %v949, %v947
    %v1340 = vpack.c.b16 %v952, %v950
    %v1341 = vpack.c.b16 %v953, %v951
    %v1342 = vpack.c.b16 %v956, %v954
    %v1343 = vpack.c.b16 %v957, %v955
    %v1344 = vpack.c.b16 %v960, %v958
    %v1345 = vpack.c.b16 %v961, %v959
    %v1346 = vpack.c.b16 %v964, %v962
    %v1347 = vpack.c.b16 %v965, %v963
    %v1348 = vpack.c.b16 %v968, %v966
    %v1349 = vpack.c.b16 %v969, %v967
    %v1350 = vpack.c.b16 %v972, %v970
    %v1351 = vpack.c.b16 %v973, %v971
    %v1352 = vpack.c.b16 %v976, %v974
    %v1353 = vpack.c.b16 %v977, %v975
    %v1354 = vpack.c.b16 %v980, %v978
    %v1355 = vpack.c.b16 %v981, %v979
    %v1356 = vpack.c.b16 %v984, %v982
    %v1357 = vpack.c.b16 %v985, %v983
    %v1358 = vpack.c.b16 %v988, %v986
    %v1359 = vpack.c.b16 %v989, %v987
    %v1360 = vpack.c.b16 %v992, %v990
    %v1361 = vpack.c.b16 %v993, %v991
    %v1362 = vpack.c.b16 %v996, %v994
    %v1363 = vpack.c.b16 %v997, %v995
    %v1364 = vpack.c.b16 %v1000, %v998
    %v1365 = vpack.c.b16 %v1001, %v999
    %v1366 = vpack.c.b16 %v1004, %v1002
    %v1367 = vpack.c.b16 %v1005, %v1003
    %v1368 = vpack.c.b16 %v1008, %v1006
    %v1369 = vpack.c.b16 %v1009, %v1007
    %v1370 = vpack.c.b16 %v1012, %v1010
    %v1371 = vpack.c.b16 %v1013, %v1011
    %v1372 = vpack.c.b16 %v1016, %v1014
    %v1373 = vpack.c.b16 %v1017, %v1015
    %v1374 = vpack.c.b16 %v1020, %v1018
    %v1375 = vpack.c.b16 %v1021, %v1019
    %v1376 = vpack.c.b16 %v1024, %v1022
    %v1377 = vpack.c.b16 %v1025, %v1023
    %v1378 = vpack.c.b16 %v1028, %v1026
    %v1379 = vpack.c.b16 %v1029, %v1027
    %v1380 = vpack.c.b16 %v1032, %v1030
    %v1381 = vpack.c.b16 %v1033, %v1031
    %v1382 = vpack.c.b16 %v1036, %v1034
    %v1383 = vpack.c.b16 %v1037, %v1035
    %v1384 = vpack.c.b16 %v1040, %v1038
    %v1385 = vpack.c.b16 %v1041, %v1039
    %v1386 = vpack.c.b16 %v1044, %v1042
    %v1387 = vpack.c.b16 %v1045, %v1043
    %v1388 = vpack.c.b16 %v1048, %v1046
    %v1389 = vpack.c.b16 %v1049, %v1047
    %v1390 = vpack.c.b16 %v1052, %v1050
    %v1391 = vpack.c.b16 %v1053, %v1051
    %v1392 = vpack.c.b16 %v1056, %v1054
    %v1393 = vpack.c.b16 %v1057, %v1055
    %v1394 = vpack.c.b16 %v1060, %v1058
    %v1395 = vpack.c.b16 %v1061, %v1059
    %v1396 = vpack.c.b16 %v1064, %v1062
    %v1397 = vpack.c.b16 %v1065, %v1063
    %v1398 = vpack.c.b16 %v1068, %v1066
    %v1399 = vpack.c.b16 %v1069, %v1067
    %v1400 = vpack.c.b16 %v1072, %v1070
    %v1401 = vpack.c.b16 %v1073, %v1071
    %v1402 = vpack.c.b16 %v1076, %v1074
    %v1403 = vpack.c.b16 %v1077, %v1075
    %v1404 = vpack.c.b16 %v1080, %v1078
    %v1405 = vpack.c.b16 %v1081, %v1079
    %v1406 = vpack.c.b16 %v1084, %v1082
    %v1407 = vpack.c.b16 %v1085, %v1083
    %v1408 = vpack.c.b16 %v1088, %v1086
    %v1409 = vpack.c.b16 %v1089, %v1087
    %v1410 = vpack.c.b16 %v1092, %v1090
    %v1411 = vpack.c.b16 %v1093, %v1091
    %v1412 = vpack.c.b16 %v1096, %v1094
    %v1413 = vpack.c.b16 %v1097, %v1095
    %v1414 = vpack.c.b16 %v1100, %v1098
    %v1415 = vpack.c.b16 %v1101, %v1099
    %v1416 = vpack.c.b16 %v1104, %v1102
    %v1417 = vpack.c.b16 %v1105, %v1103
    %v1418 = vpack.c.b16 %v1108, %v1106
    %v1419 = vpack.c.b16 %v1109, %v1107
    %v1420 = vpack.c.b16 %v1112, %v1110
    %v1421 = vpack.c.b16 %v1113, %v1111
    %v1422 = vpack.c.b16 %v1116, %v1114
    %v1423 = vpack.c.b16 %v1117, %v1115
    %v1424 = vpack.c.b16 %v1120, %v1118
    %v1425 = vpack.c.b16 %v1121, %v1119
    %v1426 = vpack.c.b16 %v1124, %v1122
    %v1427 = vpack.c.b16 %v1125, %v1123
    %v1428 = vpack.c.b16 %v1128, %v1126
    %v1429 = vpack.c.b16 %v1129, %v1127
    %v1430 = vpack.c.b16 %v1132, %v1130
    %v1431 = vpack.c.b16 %v1133, %v1131
    %v1432 = vpack.c.b16 %v1136, %v1134
    %v1433 = vpack.c.b16 %v1137, %v1135
    %v1434 = vpack.c.b16 %v1140, %v1138
    %v1435 = vpack.c.b16 %v1141, %v1139
    %v1436 = vpack.c.b16 %v1144, %v1142
    %v1437 = vpack.c.b16 %v1145, %v1143
    %v1438 = vpack.c.b16 %v1148, %v1146
    %v1439 = vpack.c.b16 %v1149, %v1147
    %v1440 = vpack.c.b16 %v1152, %v1150
    %v1441 = vpack.c.b16 %v1153, %v1151
    %v1442 = vpack.c.b16 %v1156, %v1154
    %v1443 = vpack.c.b16 %v1157, %v1155
    %v1444 = vpack.c.b16 %v1160, %v1158
    %v1445 = vpack.c.b16 %v1161, %v1159
    %v1446 = vpack.c.b16 %v1164, %v1162
    %v1447 = vpack.c.b16 %v1165, %v1163
    %v1448 = vpack.c.b16 %v1168, %v1166
    %v1449 = vpack.c.b16 %v1169, %v1167
    %v1450 = vpack.c.b16 %v1172, %v1170
    %v1451 = vpack.c.b16 %v1173, %v1171
    %v1452 = vpack.c.b16 %v1176, %v1174
    %v1453 = vpack.c.b16 %v1177, %v1175
    %v1454 = vpack.c.b16 %v1180, %v1178
    %v1455 = vpack.c.b16 %v1181, %v1179
    %v1456 = vpack.c.b16 %v1184, %v1182
    %v1457 = vpack.c.b16 %v1185, %v1183
    %v1458 = vpack.c.b16 %v1188, %v1186
    %v1459 = vpack.c.b16 %v1189, %v1187
    %v1460 = vpack.c.b16 %v1192, %v1190
    %v1461 = vpack.c.b16 %v1193, %v1191
    %v1462 = vpack.c.b16 %v1196, %v1194
    %v1463 = vpack.c.b16 %v1197, %v1195
    %v1464 = vpack.c.b16 %v1200, %v1198
    %v1465 = vpack.c.b16 %v1201, %v1199
    %v1466 = vpack.c.b16 %v1204, %v1202
    %v1467 = vpack.c.b16 %v1205, %v1203
    %v1468 = vpack.c.b16 %v1208, %v1206
    %v1469 = vpack.c.b16 %v1209, %v1207
    %v1470 = vpack.c.b16 %v1212, %v1210
    %v1471 = vpack.c.b16 %v1213, %v1211
    %v1472 = vpack.c.b16 %v1216, %v1214
    %v1473 = vpack.c.b16 %v1217, %v1215
    %1730 = vmatprep.subr.bf16.mxu0 %v1219
    %1731 = vmatpush1.bf16.msra.mxu0 %v1218
    %1732 = vmatprep.subr.bf16.mxu0 %v1221
    %1733 = vmatpush1.bf16.msra.mxu0 %v1220
    %1734 = vmatprep.subr.bf16.mxu0 %v1223
    %1735 = vmatpush1.bf16.msra.mxu0 %v1222
    %1736 = vmatprep.subr.bf16.mxu0 %v1225
    %1737 = vmatpush1.bf16.msra.mxu0 %v1224
    %1738 = vmatprep.subr.bf16.mxu0 %v1227
    %1739 = vmatpush1.bf16.msra.mxu0 %v1226
    %1740 = vmatprep.subr.bf16.mxu0 %v1229
    %1741 = vmatpush1.bf16.msra.mxu0 %v1228
    %1742 = vmatprep.subr.bf16.mxu0 %v1231
    %1743 = vmatpush1.bf16.msra.mxu0 %v1230
    %1744 = vmatprep.subr.bf16.mxu0 %v1233
    %1745 = vmatpush1.bf16.msra.mxu0 %v1232
    %1746 = vmatprep.subr.bf16.mxu0 %v1235
    %1747 = vmatpush1.bf16.msra.mxu0 %v1234
    %1748 = vmatprep.subr.bf16.mxu0 %v1237
    %1749 = vmatpush1.bf16.msra.mxu0 %v1236
    %1750 = vmatprep.subr.bf16.mxu0 %v1239
    %1751 = vmatpush1.bf16.msra.mxu0 %v1238
    %1752 = vmatprep.subr.bf16.mxu0 %v1241
    %1753 = vmatpush1.bf16.msra.mxu0 %v1240
    %1754 = vmatprep.subr.bf16.mxu0 %v1243
    %1755 = vmatpush1.bf16.msra.mxu0 %v1242
    %1756 = vmatprep.subr.bf16.mxu0 %v1245
    %1757 = vmatpush1.bf16.msra.mxu0 %v1244
    %1758 = vmatprep.subr.bf16.mxu0 %v1247
    %1759 = vmatpush1.bf16.msra.mxu0 %v1246
    %1760 = vmatprep.subr.bf16.mxu0 %v1249
    %1761 = vmatpush1.bf16.msra.mxu0 %v1248
    %1762 = vmatprep.mubr.bf16.mxu0 %v419
    %1763 = vmatmul.mubr.bf16.gmra.mrb[0].mxu0 %v418
    %v1764 = vpop.f32.mrb[0].mxu0
    %v1765 = vadd.f32 %v387, %v1764
    %v1766 = vpop.f32.mrb[0].mxu0
    %v1767 = vadd.f32 %v391, %v1766
    %v1768 = vpop.f32.mrb[0].mxu0
    %v1769 = vpop.f32.mrb[0].mxu0
    %1770 = vdwg.mxu0
    %1771 = vmatprep.subr.bf16.mxu0 %v1251
    %1772 = vmatpush1.bf16.msra.mxu0 %v1250
    %1773 = vmatprep.subr.bf16.mxu0 %v1253
    %1774 = vmatpush1.bf16.msra.mxu0 %v1252
    %1775 = vmatprep.subr.bf16.mxu0 %v1255
    %1776 = vmatpush1.bf16.msra.mxu0 %v1254
    %1777 = vmatprep.subr.bf16.mxu0 %v1257
    %1778 = vmatpush1.bf16.msra.mxu0 %v1256
    %1779 = vmatprep.subr.bf16.mxu0 %v1259
    %1780 = vmatpush1.bf16.msra.mxu0 %v1258
    %1781 = vmatprep.subr.bf16.mxu0 %v1261
    %1782 = vmatpush1.bf16.msra.mxu0 %v1260
    %1783 = vmatprep.subr.bf16.mxu0 %v1263
    %1784 = vmatpush1.bf16.msra.mxu0 %v1262
    %1785 = vmatprep.subr.bf16.mxu0 %v1265
    %1786 = vmatpush1.bf16.msra.mxu0 %v1264
    %1787 = vmatprep.subr.bf16.mxu0 %v1267
    %1788 = vmatpush1.bf16.msra.mxu0 %v1266
    %1789 = vmatprep.subr.bf16.mxu0 %v1269
    %1790 = vmatpush1.bf16.msra.mxu0 %v1268
    %1791 = vmatprep.subr.bf16.mxu0 %v1271
    %1792 = vmatpush1.bf16.msra.mxu0 %v1270
    %1793 = vmatprep.subr.bf16.mxu0 %v1273
    %1794 = vmatpush1.bf16.msra.mxu0 %v1272
    %1795 = vmatprep.subr.bf16.mxu0 %v1275
    %1796 = vmatpush1.bf16.msra.mxu0 %v1274
    %1797 = vmatprep.subr.bf16.mxu0 %v1277
    %1798 = vmatpush1.bf16.msra.mxu0 %v1276
    %1799 = vmatprep.subr.bf16.mxu0 %v1279
    %1800 = vmatpush1.bf16.msra.mxu0 %v1278
    %1801 = vmatprep.subr.bf16.mxu0 %v1281
    %1802 = vmatpush1.bf16.msra.mxu0 %v1280
    %1803 = vmatprep.mubr.bf16.mxu0 %v421
    %1804 = vmatmul.mubr.bf16.gmra.mrb[0].mxu0 %v420
    %v1805 = vpop.f32.mrb[0].mxu0
    %v1806 = vadd.f32 %v1765, %v1805
    %v1807 = vpop.f32.mrb[0].mxu0
    %v1808 = vadd.f32 %v1767, %v1807
    %v1809 = vpop.f32.mrb[0].mxu0
    %v1810 = vpop.f32.mrb[0].mxu0
    %1811 = vdwg.mxu0
    %1812 = vmatprep.subr.bf16.mxu0 %v1283
    %1813 = vmatpush1.bf16.msra.mxu0 %v1282
    %1814 = vmatprep.subr.bf16.mxu0 %v1285
    %1815 = vmatpush1.bf16.msra.mxu0 %v1284
    %1816 = vmatprep.subr.bf16.mxu0 %v1287
    %1817 = vmatpush1.bf16.msra.mxu0 %v1286
    %1818 = vmatprep.subr.bf16.mxu0 %v1289
    %1819 = vmatpush1.bf16.msra.mxu0 %v1288
    %1820 = vmatprep.subr.bf16.mxu0 %v1291
    %1821 = vmatpush1.bf16.msra.mxu0 %v1290
    %1822 = vmatprep.subr.bf16.mxu0 %v1293
    %1823 = vmatpush1.bf16.msra.mxu0 %v1292
    %1824 = vmatprep.subr.bf16.mxu0 %v1295
    %1825 = vmatpush1.bf16.msra.mxu0 %v1294
    %1826 = vmatprep.subr.bf16.mxu0 %v1297
    %1827 = vmatpush1.bf16.msra.mxu0 %v1296
    %1828 = vmatprep.subr.bf16.mxu0 %v1299
    %1829 = vmatpush1.bf16.msra.mxu0 %v1298
    %1830 = vmatprep.subr.bf16.mxu0 %v1301
    %1831 = vmatpush1.bf16.msra.mxu0 %v1300
    %1832 = vmatprep.subr.bf16.mxu0 %v1303
    %1833 = vmatpush1.bf16.msra.mxu0 %v1302
    %1834 = vmatprep.subr.bf16.mxu0 %v1305
    %1835 = vmatpush1.bf16.msra.mxu0 %v1304
    %1836 = vmatprep.subr.bf16.mxu0 %v1307
    %1837 = vmatpush1.bf16.msra.mxu0 %v1306
    %1838 = vmatprep.subr.bf16.mxu0 %v1309
    %1839 = vmatpush1.bf16.msra.mxu0 %v1308
    %1840 = vmatprep.subr.bf16.mxu0 %v1311
    %1841 = vmatpush1.bf16.msra.mxu0 %v1310
    %1842 = vmatprep.subr.bf16.mxu0 %v1313
    %1843 = vmatpush1.bf16.msra.mxu0 %v1312
    %1844 = vmatprep.mubr.bf16.mxu0 %v423
    %1845 = vmatmul.mubr.bf16.gmra.mrb[0].mxu0 %v422
    %v1846 = vpop.f32.mrb[0].mxu0
    %v1847 = vadd.f32 %v1806, %v1846
    %v1848 = vpop.f32.mrb[0].mxu0
    %v1849 = vadd.f32 %v1808, %v1848
    %v1850 = vpop.f32.mrb[0].mxu0
    %v1851 = vpop.f32.mrb[0].mxu0
    %1852 = vdwg.mxu0
    %1853 = vmatprep.subr.bf16.mxu0 %v1315
    %1854 = vmatpush1.bf16.msra.mxu0 %v1314
    %1855 = vmatprep.subr.bf16.mxu0 %v1317
    %1856 = vmatpush1.bf16.msra.mxu0 %v1316
    %1857 = vmatprep.subr.bf16.mxu0 %v1319
    %1858 = vmatpush1.bf16.msra.mxu0 %v1318
    %1859 = vmatprep.subr.bf16.mxu0 %v1321
    %1860 = vmatpush1.bf16.msra.mxu0 %v1320
    %1861 = vmatprep.subr.bf16.mxu0 %v1323
    %1862 = vmatpush1.bf16.msra.mxu0 %v1322
    %1863 = vmatprep.subr.bf16.mxu0 %v1325
    %1864 = vmatpush1.bf16.msra.mxu0 %v1324
    %1865 = vmatprep.subr.bf16.mxu0 %v1327
    %1866 = vmatpush1.bf16.msra.mxu0 %v1326
    %1867 = vmatprep.subr.bf16.mxu0 %v1329
    %1868 = vmatpush1.bf16.msra.mxu0 %v1328
    %1869 = vmatprep.subr.bf16.mxu0 %v1331
    %1870 = vmatpush1.bf16.msra.mxu0 %v1330
    %1871 = vmatprep.subr.bf16.mxu0 %v1333
    %1872 = vmatpush1.bf16.msra.mxu0 %v1332
    %1873 = vmatprep.subr.bf16.mxu0 %v1335
    %1874 = vmatpush1.bf16.msra.mxu0 %v1334
    %1875 = vmatprep.subr.bf16.mxu0 %v1337
    %1876 = vmatpush1.bf16.msra.mxu0 %v1336
    %1877 = vmatprep.subr.bf16.mxu0 %v1339
    %1878 = vmatpush1.bf16.msra.mxu0 %v1338
    %1879 = vmatprep.subr.bf16.mxu0 %v1341
    %1880 = vmatpush1.bf16.msra.mxu0 %v1340
    %1881 = vmatprep.subr.bf16.mxu0 %v1343
    %1882 = vmatpush1.bf16.msra.mxu0 %v1342
    %1883 = vmatprep.subr.bf16.mxu0 %v1345
    %1884 = vmatpush1.bf16.msra.mxu0 %v1344
    %1885 = vmatprep.mubr.bf16.mxu0 %v425
    %1886 = vmatmul.mubr.bf16.gmra.mrb[0].mxu0 %v424
    %v1887 = vpop.f32.mrb[0].mxu0
    %v1888 = vadd.f32 %v1847, %v1887
    %v1889 = vpop.f32.mrb[0].mxu0
    %v1890 = vadd.f32 %v1849, %v1889
    %v1891 = vpop.f32.mrb[0].mxu0
    %v1892 = vpop.f32.mrb[0].mxu0
    %1893 = vdwg.mxu0
    %1894 = vmatprep.subr.bf16.mxu0 %v1347
    %1895 = vmatpush1.bf16.msra.mxu0 %v1346
    %1896 = vmatprep.subr.bf16.mxu0 %v1349
    %1897 = vmatpush1.bf16.msra.mxu0 %v1348
    %1898 = vmatprep.subr.bf16.mxu0 %v1351
    %1899 = vmatpush1.bf16.msra.mxu0 %v1350
    %1900 = vmatprep.subr.bf16.mxu0 %v1353
    %1901 = vmatpush1.bf16.msra.mxu0 %v1352
    %1902 = vmatprep.subr.bf16.mxu0 %v1355
    %1903 = vmatpush1.bf16.msra.mxu0 %v1354
    %1904 = vmatprep.subr.bf16.mxu0 %v1357
    %1905 = vmatpush1.bf16.msra.mxu0 %v1356
    %1906 = vmatprep.subr.bf16.mxu0 %v1359
    %1907 = vmatpush1.bf16.msra.mxu0 %v1358
    %1908 = vmatprep.subr.bf16.mxu0 %v1361
    %1909 = vmatpush1.bf16.msra.mxu0 %v1360
    %1910 = vmatprep.subr.bf16.mxu0 %v1363
    %1911 = vmatpush1.bf16.msra.mxu0 %v1362
    %1912 = vmatprep.subr.bf16.mxu0 %v1365
    %1913 = vmatpush1.bf16.msra.mxu0 %v1364
    %1914 = vmatprep.subr.bf16.mxu0 %v1367
    %1915 = vmatpush1.bf16.msra.mxu0 %v1366
    %1916 = vmatprep.subr.bf16.mxu0 %v1369
    %1917 = vmatpush1.bf16.msra.mxu0 %v1368
    %1918 = vmatprep.subr.bf16.mxu0 %v1371
    %1919 = vmatpush1.bf16.msra.mxu0 %v1370
    %1920 = vmatprep.subr.bf16.mxu0 %v1373
    %1921 = vmatpush1.bf16.msra.mxu0 %v1372
    %1922 = vmatprep.subr.bf16.mxu0 %v1375
    %1923 = vmatpush1.bf16.msra.mxu0 %v1374
    %1924 = vmatprep.subr.bf16.mxu0 %v1377
    %1925 = vmatpush1.bf16.msra.mxu0 %v1376
    %1926 = vmatprep.mubr.bf16.mxu0 %v427
    %1927 = vmatmul.mubr.bf16.gmra.mrb[0].mxu0 %v426
    %v1928 = vpop.f32.mrb[0].mxu0
    %v1929 = vadd.f32 %v1888, %v1928
    %v1930 = vpop.f32.mrb[0].mxu0
    %v1931 = vadd.f32 %v1890, %v1930
    %v1932 = vpop.f32.mrb[0].mxu0
    %v1933 = vpop.f32.mrb[0].mxu0
    %1934 = vdwg.mxu0
    %1935 = vmatprep.subr.bf16.mxu0 %v1379
    %1936 = vmatpush1.bf16.msra.mxu0 %v1378
    %1937 = vmatprep.subr.bf16.mxu0 %v1381
    %1938 = vmatpush1.bf16.msra.mxu0 %v1380
    %1939 = vmatprep.subr.bf16.mxu0 %v1383
    %1940 = vmatpush1.bf16.msra.mxu0 %v1382
    %1941 = vmatprep.subr.bf16.mxu0 %v1385
    %1942 = vmatpush1.bf16.msra.mxu0 %v1384
    %1943 = vmatprep.subr.bf16.mxu0 %v1387
    %1944 = vmatpush1.bf16.msra.mxu0 %v1386
    %1945 = vmatprep.subr.bf16.mxu0 %v1389
    %1946 = vmatpush1.bf16.msra.mxu0 %v1388
    %1947 = vmatprep.subr.bf16.mxu0 %v1391
    %1948 = vmatpush1.bf16.msra.mxu0 %v1390
    %1949 = vmatprep.subr.bf16.mxu0 %v1393
    %1950 = vmatpush1.bf16.msra.mxu0 %v1392
    %1951 = vmatprep.subr.bf16.mxu0 %v1395
    %1952 = vmatpush1.bf16.msra.mxu0 %v1394
    %1953 = vmatprep.subr.bf16.mxu0 %v1397
    %1954 = vmatpush1.bf16.msra.mxu0 %v1396
    %1955 = vmatprep.subr.bf16.mxu0 %v1399
    %1956 = vmatpush1.bf16.msra.mxu0 %v1398
    %1957 = vmatprep.subr.bf16.mxu0 %v1401
    %1958 = vmatpush1.bf16.msra.mxu0 %v1400
    %1959 = vmatprep.subr.bf16.mxu0 %v1403
    %1960 = vmatpush1.bf16.msra.mxu0 %v1402
    %1961 = vmatprep.subr.bf16.mxu0 %v1405
    %1962 = vmatpush1.bf16.msra.mxu0 %v1404
    %1963 = vmatprep.subr.bf16.mxu0 %v1407
    %1964 = vmatpush1.bf16.msra.mxu0 %v1406
    %1965 = vmatprep.subr.bf16.mxu0 %v1409
    %1966 = vmatpush1.bf16.msra.mxu0 %v1408
    %1967 = vmatprep.mubr.bf16.mxu0 %v429
    %1968 = vmatmul.mubr.bf16.gmra.mrb[0].mxu0 %v428
    %v1969 = vpop.f32.mrb[0].mxu0
    %v1970 = vadd.f32 %v1929, %v1969
    %v1971 = vpop.f32.mrb[0].mxu0
    %v1972 = vadd.f32 %v1931, %v1971
    %v1973 = vpop.f32.mrb[0].mxu0
    %v1974 = vpop.f32.mrb[0].mxu0
    %1975 = vdwg.mxu0
    %1976 = vmatprep.subr.bf16.mxu0 %v1411
    %1977 = vmatpush1.bf16.msra.mxu0 %v1410
    %1978 = vmatprep.subr.bf16.mxu0 %v1413
    %1979 = vmatpush1.bf16.msra.mxu0 %v1412
    %1980 = vmatprep.subr.bf16.mxu0 %v1415
    %1981 = vmatpush1.bf16.msra.mxu0 %v1414
    %1982 = vmatprep.subr.bf16.mxu0 %v1417
    %1983 = vmatpush1.bf16.msra.mxu0 %v1416
    %1984 = vmatprep.subr.bf16.mxu0 %v1419
    %1985 = vmatpush1.bf16.msra.mxu0 %v1418
    %1986 = vmatprep.subr.bf16.mxu0 %v1421
    %1987 = vmatpush1.bf16.msra.mxu0 %v1420
    %1988 = vmatprep.subr.bf16.mxu0 %v1423
    %1989 = vmatpush1.bf16.msra.mxu0 %v1422
    %1990 = vmatprep.subr.bf16.mxu0 %v1425
    %1991 = vmatpush1.bf16.msra.mxu0 %v1424
    %1992 = vmatprep.subr.bf16.mxu0 %v1427
    %1993 = vmatpush1.bf16.msra.mxu0 %v1426
    %1994 = vmatprep.subr.bf16.mxu0 %v1429
    %1995 = vmatpush1.bf16.msra.mxu0 %v1428
    %1996 = vmatprep.subr.bf16.mxu0 %v1431
    %1997 = vmatpush1.bf16.msra.mxu0 %v1430
    %1998 = vmatprep.subr.bf16.mxu0 %v1433
    %1999 = vmatpush1.bf16.msra.mxu0 %v1432
    %2000 = vmatprep.subr.bf16.mxu0 %v1435
    %2001 = vmatpush1.bf16.msra.mxu0 %v1434
    %2002 = vmatprep.subr.bf16.mxu0 %v1437
    %2003 = vmatpush1.bf16.msra.mxu0 %v1436
    %2004 = vmatprep.subr.bf16.mxu0 %v1439
    %2005 = vmatpush1.bf16.msra.mxu0 %v1438
    %2006 = vmatprep.subr.bf16.mxu0 %v1441
    %2007 = vmatpush1.bf16.msra.mxu0 %v1440
    %2008 = vmatprep.mubr.bf16.mxu0 %v431
    %2009 = vmatmul.mubr.bf16.gmra.mrb[0].mxu0 %v430
    %v2010 = vpop.f32.mrb[0].mxu0
    %v2011 = vadd.f32 %v1970, %v2010
    %v2012 = vpop.f32.mrb[0].mxu0
    %v2013 = vadd.f32 %v1972, %v2012
    %v2014 = vpop.f32.mrb[0].mxu0
    %v2015 = vpop.f32.mrb[0].mxu0
    %2016 = vdwg.mxu0
    %2017 = vmatprep.subr.bf16.mxu0 %v1443
    %2018 = vmatpush1.bf16.msra.mxu0 %v1442
    %2019 = vmatprep.subr.bf16.mxu0 %v1445
    %2020 = vmatpush1.bf16.msra.mxu0 %v1444
    %2021 = vmatprep.subr.bf16.mxu0 %v1447
    %2022 = vmatpush1.bf16.msra.mxu0 %v1446
    %2023 = vmatprep.subr.bf16.mxu0 %v1449
    %2024 = vmatpush1.bf16.msra.mxu0 %v1448
    %2025 = vmatprep.subr.bf16.mxu0 %v1451
    %2026 = vmatpush1.bf16.msra.mxu0 %v1450
    %2027 = vmatprep.subr.bf16.mxu0 %v1453
    %2028 = vmatpush1.bf16.msra.mxu0 %v1452
    %2029 = vmatprep.subr.bf16.mxu0 %v1455
    %2030 = vmatpush1.bf16.msra.mxu0 %v1454
    %2031 = vmatprep.subr.bf16.mxu0 %v1457
    %2032 = vmatpush1.bf16.msra.mxu0 %v1456
    %2033 = vmatprep.subr.bf16.mxu0 %v1459
    %2034 = vmatpush1.bf16.msra.mxu0 %v1458
    %2035 = vmatprep.subr.bf16.mxu0 %v1461
    %2036 = vmatpush1.bf16.msra.mxu0 %v1460
    %2037 = vmatprep.subr.bf16.mxu0 %v1463
    %2038 = vmatpush1.bf16.msra.mxu0 %v1462
    %2039 = vmatprep.subr.bf16.mxu0 %v1465
    %2040 = vmatpush1.bf16.msra.mxu0 %v1464
    %2041 = vmatprep.subr.bf16.mxu0 %v1467
    %2042 = vmatpush1.bf16.msra.mxu0 %v1466
    %2043 = vmatprep.subr.bf16.mxu0 %v1469
    %2044 = vmatpush1.bf16.msra.mxu0 %v1468
    %2045 = vmatprep.subr.bf16.mxu0 %v1471
    %2046 = vmatpush1.bf16.msra.mxu0 %v1470
    %2047 = vmatprep.subr.bf16.mxu0 %v1473
    %2048 = vmatpush1.bf16.msra.mxu0 %v1472
    %2049 = vmatprep.mubr.bf16.mxu0 %v433
    %2050 = vmatmul.mubr.bf16.gmra.mrb[0].mxu0 %v432
    %v2051 = vpop.f32.mrb[0].mxu0
    %v2052 = vadd.f32 %v2011, %v2051
    %v2053 = vpop.f32.mrb[0].mxu0
    %v2054 = vadd.f32 %v2013, %v2053
    %v2055 = vpop.f32.mrb[0].mxu0
    %v2056 = vpop.f32.mrb[0].mxu0
    %2057 = vdwg.mxu0
    %v2058 = vmul.f32 %v2052, 0.5
    %v2059 = vmul.f32 %v2054, 0.5
    %v2060 = vmul.f32 %v2052, 0.70710677
    %v2061 = vmul.f32 %v2054, 0.70710677
    %vm2062 = vcmp.lt.f32.partialorder %v2060, 0.0
    %vm2063 = vcmp.lt.f32.partialorder %v2061, 0.0
    %v2064 = vsel %vm2062, -1.0, 1.0
    %v2065 = vsel %vm2063, -1.0, 1.0
    %v2066 = vand.u32 2147483647, %v2060
    %v2067 = vand.u32 2147483647, %v2061
    %v2068 = vmul.f32 %v2066, 0.3275911
    %v2069 = vmul.f32 %v2067, 0.3275911
    %v2070 = vadd.f32 %v2068, 1.0
    %v2071 = vadd.f32 %v2069, 1.0
    %v2072 = vrcp.pop %v2070
    %v2073 = vmul.f32 1.0, %v2072
    %v2074 = vrcp.pop %v2071
    %v2075 = vmul.f32 1.0, %v2074
    %v2076 = vmul.f32 %v2073, 1.0614054
    %v2077 = vmul.f32 %v2075, 1.0614054
    %v2078 = vadd.f32 %v2076, -1.4531521
    %v2079 = vadd.f32 %v2077, -1.4531521
    %v2080 = vmul.f32 %v2078, %v2073
    %v2081 = vmul.f32 %v2079, %v2075
    %v2082 = vadd.f32 %v2080, 1.4214138
    %v2083 = vadd.f32 %v2081, 1.4214138
    %v2084 = vmul.f32 %v2082, %v2073
    %v2085 = vmul.f32 %v2083, %v2075
    %v2086 = vadd.f32 %v2084, -0.28449672
    %v2087 = vadd.f32 %v2085, -0.28449672
    %v2088 = vmul.f32 %v2086, %v2073
    %v2089 = vmul.f32 %v2087, %v2075
    %v2090 = vadd.f32 %v2088, 0.2548296
    %v2091 = vadd.f32 %v2089, 0.2548296
    %v2092 = vmul.f32 %v2090, %v2073
    %v2093 = vmul.f32 %v2091, %v2075
    %v2094 = vsub.f32 0.0, %v2066
    %v2095 = vsub.f32 0.0, %v2067
    %v2096 = vmul.f32 %v2094, %v2066
    %v2097 = vmul.f32 %v2095, %v2067
    %v2098 = vmul.f32 %v2096, 1.442695
    %v2099 = vpow.pop %v2098
    %v2100 = vmul.f32 %v2097, 1.442695
    %v2101 = vpow.pop %v2100
    %v2102 = vmul.f32 %v2092, %v2099
    %v2103 = vmul.f32 %v2093, %v2101
    %v2104 = vsub.f32 1.0, %v2102
    %v2105 = vsub.f32 1.0, %v2103
    %v2106 = vmul.f32 %v2064, %v2104
    %v2107 = vmul.f32 %v2065, %v2105
    %v2108 = vadd.f32 %v2106, 1.0
    %v2109 = vadd.f32 %v2107, 1.0
    %v2110 = vmul.f32 %v2058, %v2108
    %v2111 = vmul.f32 %v2059, %v2109
    %v2112 = vpack.c.bf16 %v2110, %v2110
    %v2113 = vpack.c.bf16 %v2111, %v2111
    %v2114 = vld [vmem:[%s5] sm:$0xff]
    %v2115 = vld [vmem:[%s5 + $0x8] sm:$0xff]
    %v2116 = vld [vmem:[%s5 + $0x10] sm:$0xff]
    %v2117 = vld [vmem:[%s5 + $0x18] sm:$0xff]
    %v2118 = vld [vmem:[%s5 + $0x20] sm:$0xff]
    %v2119 = vld [vmem:[%s5 + $0x28] sm:$0xff]
    %v2120 = vld [vmem:[%s5 + $0x30] sm:$0xff]
    %v2121 = vld [vmem:[%s5 + $0x38] sm:$0xff]
    %v2122 = vld [vmem:[%s5 + $0x40] sm:$0xff]
    %v2123 = vld [vmem:[%s5 + $0x48] sm:$0xff]
    %v2124 = vld [vmem:[%s5 + $0x50] sm:$0xff]
    %v2125 = vld [vmem:[%s5 + $0x58] sm:$0xff]
    %v2126 = vld [vmem:[%s5 + $0x60] sm:$0xff]
    %v2127 = vld [vmem:[%s5 + $0x68] sm:$0xff]
    %v2128 = vld [vmem:[%s5 + $0x70] sm:$0xff]
    %v2129 = vld [vmem:[%s5 + $0x78] sm:$0xff]
    %v2130 = vld [vmem:[%s5 + $0x80] sm:$0xff]
    %v2131 = vld [vmem:[%s5 + $0x88] sm:$0xff]
    %v2132 = vld [vmem:[%s5 + $0x90] sm:$0xff]
    %v2133 = vld [vmem:[%s5 + $0x98] sm:$0xff]
    %v2134 = vld [vmem:[%s5 + $0xa0] sm:$0xff]
    %v2135 = vld [vmem:[%s5 + $0xa8] sm:$0xff]
    %v2136 = vld [vmem:[%s5 + $0xb0] sm:$0xff]
    %v2137 = vld [vmem:[%s5 + $0xb8] sm:$0xff]
    %v2138 = vld [vmem:[%s5 + $0xc0] sm:$0xff]
    %v2139 = vld [vmem:[%s5 + $0xc8] sm:$0xff]
    %v2140 = vld [vmem:[%s5 + $0xd0] sm:$0xff]
    %v2141 = vld [vmem:[%s5 + $0xd8] sm:$0xff]
    %v2142 = vld [vmem:[%s5 + $0xe0] sm:$0xff]
    %v2143 = vld [vmem:[%s5 + $0xe8] sm:$0xff]
    %v2144 = vld [vmem:[%s5 + $0xf0] sm:$0xff]
    %v2145 = vld [vmem:[%s5 + $0xf8] sm:$0xff]
    %v2146 = vld [vmem:[%s6] sm:$0x3]
    %v2148 = vlaneseq
    %v2149 = vshrl.u32 %v2148, 7
    %v2150 = vsub.s32 0, %v2149
    %v2151 = vrot.slane %v2146, %v2150
    %v2152 = vlaneseq
    %v2153 = vshrl.u32 %v2152, 7
    %v2154 = vsub.s32 1, %v2153
    %v2155 = vrot.slane %v2146, %v2154
    %v2190 = vunpack.c.l.b16 %v2114
    %v2191 = vunpack.c.h.b16 %v2114
    %v2192 = vunpack.c.l.b16 %v2115
    %v2193 = vunpack.c.h.b16 %v2115
    %v2194 = vunpack.c.l.b16 %v2116
    %v2195 = vunpack.c.h.b16 %v2116
    %v2196 = vunpack.c.l.b16 %v2117
    %v2197 = vunpack.c.h.b16 %v2117
    %v2198 = vunpack.c.l.b16 %v2118
    %v2199 = vunpack.c.h.b16 %v2118
    %v2200 = vunpack.c.l.b16 %v2119
    %v2201 = vunpack.c.h.b16 %v2119
    %v2202 = vunpack.c.l.b16 %v2120
    %v2203 = vunpack.c.h.b16 %v2120
    %v2204 = vunpack.c.l.b16 %v2121
    %v2205 = vunpack.c.h.b16 %v2121
    %v2206 = vunpack.c.l.b16 %v2122
    %v2207 = vunpack.c.h.b16 %v2122
    %v2208 = vunpack.c.l.b16 %v2123
    %v2209 = vunpack.c.h.b16 %v2123
    %v2210 = vunpack.c.l.b16 %v2124
    %v2211 = vunpack.c.h.b16 %v2124
    %v2212 = vunpack.c.l.b16 %v2125
    %v2213 = vunpack.c.h.b16 %v2125
    %v2214 = vunpack.c.l.b16 %v2126
    %v2215 = vunpack.c.h.b16 %v2126
    %v2216 = vunpack.c.l.b16 %v2127
    %v2217 = vunpack.c.h.b16 %v2127
    %v2218 = vunpack.c.l.b16 %v2128
    %v2219 = vunpack.c.h.b16 %v2128
    %v2220 = vunpack.c.l.b16 %v2129
    %v2221 = vunpack.c.h.b16 %v2129
    %v2222 = vunpack.c.l.b16 %v2130
    %v2223 = vunpack.c.h.b16 %v2130
    %v2224 = vunpack.c.l.b16 %v2131
    %v2225 = vunpack.c.h.b16 %v2131
    %v2226 = vunpack.c.l.b16 %v2132
    %v2227 = vunpack.c.h.b16 %v2132
    %v2228 = vunpack.c.l.b16 %v2133
    %v2229 = vunpack.c.h.b16 %v2133
    %v2230 = vunpack.c.l.b16 %v2134
    %v2231 = vunpack.c.h.b16 %v2134
    %v2232 = vunpack.c.l.b16 %v2135
    %v2233 = vunpack.c.h.b16 %v2135
    %v2234 = vunpack.c.l.b16 %v2136
    %v2235 = vunpack.c.h.b16 %v2136
    %v2236 = vunpack.c.l.b16 %v2137
    %v2237 = vunpack.c.h.b16 %v2137
    %v2238 = vunpack.c.l.b16 %v2138
    %v2239 = vunpack.c.h.b16 %v2138
    %v2240 = vunpack.c.l.b16 %v2139
    %v2241 = vunpack.c.h.b16 %v2139
    %v2242 = vunpack.c.l.b16 %v2140
    %v2243 = vunpack.c.h.b16 %v2140
    %v2244 = vunpack.c.l.b16 %v2141
    %v2245 = vunpack.c.h.b16 %v2141
    %v2246 = vunpack.c.l.b16 %v2142
    %v2247 = vunpack.c.h.b16 %v2142
    %v2248 = vunpack.c.l.b16 %v2143
    %v2249 = vunpack.c.h.b16 %v2143
    %v2250 = vunpack.c.l.b16 %v2144
    %v2251 = vunpack.c.h.b16 %v2144
    %v2252 = vunpack.c.l.b16 %v2145
    %v2253 = vunpack.c.h.b16 %v2145
    %v2254 = vpack.c.b16 %v2192, %v2190
    %v2255 = vpack.c.b16 %v2193, %v2191
    %v2256 = vpack.c.b16 %v2196, %v2194
    %v2257 = vpack.c.b16 %v2197, %v2195
    %v2258 = vpack.c.b16 %v2200, %v2198
    %v2259 = vpack.c.b16 %v2201, %v2199
    %v2260 = vpack.c.b16 %v2204, %v2202
    %v2261 = vpack.c.b16 %v2205, %v2203
    %v2262 = vpack.c.b16 %v2208, %v2206
    %v2263 = vpack.c.b16 %v2209, %v2207
    %v2264 = vpack.c.b16 %v2212, %v2210
    %v2265 = vpack.c.b16 %v2213, %v2211
    %v2266 = vpack.c.b16 %v2216, %v2214
    %v2267 = vpack.c.b16 %v2217, %v2215
    %v2268 = vpack.c.b16 %v2220, %v2218
    %v2269 = vpack.c.b16 %v2221, %v2219
    %v2270 = vpack.c.b16 %v2224, %v2222
    %v2271 = vpack.c.b16 %v2225, %v2223
    %v2272 = vpack.c.b16 %v2228, %v2226
    %v2273 = vpack.c.b16 %v2229, %v2227
    %v2274 = vpack.c.b16 %v2232, %v2230
    %v2275 = vpack.c.b16 %v2233, %v2231
    %v2276 = vpack.c.b16 %v2236, %v2234
    %v2277 = vpack.c.b16 %v2237, %v2235
    %v2278 = vpack.c.b16 %v2240, %v2238
    %v2279 = vpack.c.b16 %v2241, %v2239
    %v2280 = vpack.c.b16 %v2244, %v2242
    %v2281 = vpack.c.b16 %v2245, %v2243
    %v2282 = vpack.c.b16 %v2248, %v2246
    %v2283 = vpack.c.b16 %v2249, %v2247
    %v2284 = vpack.c.b16 %v2252, %v2250
    %v2285 = vpack.c.b16 %v2253, %v2251
    %2318 = vmatprep.subr.bf16.mxu0 %v2255
    %2319 = vmatpush1.bf16.msra.mxu0 %v2254
    %2320 = vmatprep.subr.bf16.mxu0 %v2257
    %2321 = vmatpush1.bf16.msra.mxu0 %v2256
    %2322 = vmatprep.subr.bf16.mxu0 %v2259
    %2323 = vmatpush1.bf16.msra.mxu0 %v2258
    %2324 = vmatprep.subr.bf16.mxu0 %v2261
    %2325 = vmatpush1.bf16.msra.mxu0 %v2260
    %2326 = vmatprep.subr.bf16.mxu0 %v2263
    %2327 = vmatpush1.bf16.msra.mxu0 %v2262
    %2328 = vmatprep.subr.bf16.mxu0 %v2265
    %2329 = vmatpush1.bf16.msra.mxu0 %v2264
    %2330 = vmatprep.subr.bf16.mxu0 %v2267
    %2331 = vmatpush1.bf16.msra.mxu0 %v2266
    %2332 = vmatprep.subr.bf16.mxu0 %v2269
    %2333 = vmatpush1.bf16.msra.mxu0 %v2268
    %2334 = vmatprep.subr.bf16.mxu0 %v2271
    %2335 = vmatpush1.bf16.msra.mxu0 %v2270
    %2336 = vmatprep.subr.bf16.mxu0 %v2273
    %2337 = vmatpush1.bf16.msra.mxu0 %v2272
    %2338 = vmatprep.subr.bf16.mxu0 %v2275
    %2339 = vmatpush1.bf16.msra.mxu0 %v2274
    %2340 = vmatprep.subr.bf16.mxu0 %v2277
    %2341 = vmatpush1.bf16.msra.mxu0 %v2276
    %2342 = vmatprep.subr.bf16.mxu0 %v2279
    %2343 = vmatpush1.bf16.msra.mxu0 %v2278
    %2344 = vmatprep.subr.bf16.mxu0 %v2281
    %2345 = vmatpush1.bf16.msra.mxu0 %v2280
    %2346 = vmatprep.subr.bf16.mxu0 %v2283
    %2347 = vmatpush1.bf16.msra.mxu0 %v2282
    %2348 = vmatprep.subr.bf16.mxu0 %v2285
    %2349 = vmatpush1.bf16.msra.mxu0 %v2284
    %2350 = vmatprep.mubr.bf16.mxu0 %v2113
    %2351 = vmatmul.mubr.bf16.gmra.mrb[0].mxu0 %v2112
    %v2352 = vpop.f32.mrb[0].mxu0
    %v2353 = vadd.f32 %v2151, %v2352
    %v2354 = vpop.f32.mrb[0].mxu0
    %v2355 = vadd.f32 %v2155, %v2354
    %v2356 = vpop.f32.mrb[0].mxu0
    %v2357 = vpop.f32.mrb[0].mxu0
    %2358 = vdwg.mxu0
    %v2359 = vadd.f32 %v2353, %v2052
    %v2360 = vadd.f32 %v2355, %v2054
    %v2361 = vadd.f32 %v2359, %v2360
    %2362 = vadd.xlane.f32.xlu0 %v2361
    %v2363 = vpop.xlane.xlu0 %2362
    %v2364 = vrcp.pop 256.0
    %v2365 = vmul.f32 %v2363, %v2364
    %v2366 = vsub.f32 %v2359, %v2365
    %v2367 = vsub.f32 %v2360, %v2365
    %v2368 = vmul.f32 %v2366, %v2366
    %v2369 = vmul.f32 %v2367, %v2367
    %v2370 = vadd.f32 %v2368, %v2369
    %2371 = vadd.xlane.f32.xlu0 %v2370
    %v2372 = vpop.xlane.xlu0 %2371
    %v2373 = vmul.f32 %v2372, %v2364
    %v2374 = vadd.f32 %v2373, 1e-05
    %v2375 = vrsqrt.pop %v2374
    %v2376 = vmul.f32 %v2366, %v2375
    %v2377 = vmul.f32 %v2367, %v2375
    %v2378 = vld [vmem:[%s7] sm:$0x3]
    %v2380 = vlaneseq
    %v2381 = vshrl.u32 %v2380, 7
    %v2382 = vsub.s32 0, %v2381
    %v2383 = vrot.slane %v2378, %v2382
    %v2384 = vlaneseq
    %v2385 = vshrl.u32 %v2384, 7
    %v2386 = vsub.s32 1, %v2385
    %v2387 = vrot.slane %v2378, %v2386
    %v2390 = vmul.f32 %v2376, %v2383
    %v2391 = vmul.f32 %v2377, %v2387
    %v2392 = vld [vmem:[%s8] sm:$0x3]
    %v2394 = vlaneseq
    %v2395 = vshrl.u32 %v2394, 7
    %v2396 = vsub.s32 0, %v2395
    %v2397 = vrot.slane %v2392, %v2396
    %v2398 = vlaneseq
    %v2399 = vshrl.u32 %v2398, 7
    %v2400 = vsub.s32 1, %v2399
    %v2401 = vrot.slane %v2392, %v2400
    %v2404 = vadd.f32 %v2390, %v2397
    %v2405 = vadd.f32 %v2391, %v2401
    %v2406 = vld [vmem:[%s2] sm:$0xff]
    %v2407 = vld [vmem:[%s2 + $0x8] sm:$0xff]
    %v2408 = vld [vmem:[%s2 + $0x10] sm:$0xff]
    %v2409 = vld [vmem:[%s2 + $0x18] sm:$0xff]
    %v2410 = vld [vmem:[#allocation7] sm:$0xff]
    %v2411 = vld [vmem:[#allocation7 + $0x8] sm:$0xff]
    %v2412 = vld [vmem:[#allocation7 + $0x10] sm:$0xff]
    %v2413 = vld [vmem:[#allocation7 + $0x18] sm:$0xff]
    %v2414 = vld [vmem:[#allocation7 + $0x20] sm:$0xff]
    %v2415 = vld [vmem:[#allocation7 + $0x28] sm:$0xff]
    %v2416 = vld [vmem:[#allocation7 + $0x30] sm:$0xff]
    %v2417 = vld [vmem:[#allocation7 + $0x38] sm:$0xff]
    %v2418 = vld [vmem:[#allocation7 + $0x40] sm:$0xff]
    %v2419 = vld [vmem:[#allocation7 + $0x48] sm:$0xff]
    %v2420 = vld [vmem:[#allocation7 + $0x50] sm:$0xff]
    %v2421 = vld [vmem:[#allocation7 + $0x58] sm:$0xff]
    %v2422 = vld [vmem:[#allocation7 + $0x60] sm:$0xff]
    %v2423 = vld [vmem:[#allocation7 + $0x68] sm:$0xff]
    %v2424 = vld [vmem:[#allocation7 + $0x70] sm:$0xff]
    %v2425 = vld [vmem:[#allocation7 + $0x78] sm:$0xff]
    %v2426 = vld [vmem:[#allocation7 + $0x80] sm:$0xff]
    %v2427 = vld [vmem:[#allocation7 + $0x88] sm:$0xff]
    %v2428 = vld [vmem:[#allocation7 + $0x90] sm:$0xff]
    %v2429 = vld [vmem:[#allocation7 + $0x98] sm:$0xff]
    %v2430 = vld [vmem:[#allocation7 + $0xa0] sm:$0xff]
    %v2431 = vld [vmem:[#allocation7 + $0xa8] sm:$0xff]
    %v2432 = vld [vmem:[#allocation7 + $0xb0] sm:$0xff]
    %v2433 = vld [vmem:[#allocation7 + $0xb8] sm:$0xff]
    %v2434 = vld [vmem:[#allocation7 + $0xc0] sm:$0xff]
    %v2435 = vld [vmem:[#allocation7 + $0xc8] sm:$0xff]
    %v2436 = vld [vmem:[#allocation7 + $0xd0] sm:$0xff]
    %v2437 = vld [vmem:[#allocation7 + $0xd8] sm:$0xff]
    %v2438 = vld [vmem:[#allocation7 + $0xe0] sm:$0xff]
    %v2439 = vld [vmem:[#allocation7 + $0xe8] sm:$0xff]
    %v2440 = vld [vmem:[#allocation7 + $0xf0] sm:$0xff]
    %v2441 = vld [vmem:[#allocation7 + $0xf8] sm:$0xff]
    %v2442 = vld [vmem:[#allocation7 + $0x100] sm:$0xff]
    %v2443 = vld [vmem:[#allocation7 + $0x108] sm:$0xff]
    %v2444 = vld [vmem:[#allocation7 + $0x110] sm:$0xff]
    %v2445 = vld [vmem:[#allocation7 + $0x118] sm:$0xff]
    %v2446 = vld [vmem:[#allocation7 + $0x120] sm:$0xff]
    %v2447 = vld [vmem:[#allocation7 + $0x128] sm:$0xff]
    %v2448 = vld [vmem:[#allocation7 + $0x130] sm:$0xff]
    %v2449 = vld [vmem:[#allocation7 + $0x138] sm:$0xff]
    %v2450 = vld [vmem:[#allocation7 + $0x140] sm:$0xff]
    %v2451 = vld [vmem:[#allocation7 + $0x148] sm:$0xff]
    %v2452 = vld [vmem:[#allocation7 + $0x150] sm:$0xff]
    %v2453 = vld [vmem:[#allocation7 + $0x158] sm:$0xff]
    %v2454 = vld [vmem:[#allocation7 + $0x160] sm:$0xff]
    %v2455 = vld [vmem:[#allocation7 + $0x168] sm:$0xff]
    %v2456 = vld [vmem:[#allocation7 + $0x170] sm:$0xff]
    %v2457 = vld [vmem:[#allocation7 + $0x178] sm:$0xff]
    %v2458 = vld [vmem:[#allocation7 + $0x180] sm:$0xff]
    %v2459 = vld [vmem:[#allocation7 + $0x188] sm:$0xff]
    %v2460 = vld [vmem:[#allocation7 + $0x190] sm:$0xff]
    %v2461 = vld [vmem:[#allocation7 + $0x198] sm:$0xff]
    %v2462 = vld [vmem:[#allocation7 + $0x1a0] sm:$0xff]
    %v2463 = vld [vmem:[#allocation7 + $0x1a8] sm:$0xff]
    %v2464 = vld [vmem:[#allocation7 + $0x1b0] sm:$0xff]
    %v2465 = vld [vmem:[#allocation7 + $0x1b8] sm:$0xff]
    %v2466 = vld [vmem:[#allocation7 + $0x1c0] sm:$0xff]
    %v2467 = vld [vmem:[#allocation7 + $0x1c8] sm:$0xff]
    %v2468 = vld [vmem:[#allocation7 + $0x1d0] sm:$0xff]
    %v2469 = vld [vmem:[#allocation7 + $0x1d8] sm:$0xff]
    %v2470 = vld [vmem:[#allocation7 + $0x1e0] sm:$0xff]
    %v2471 = vld [vmem:[#allocation7 + $0x1e8] sm:$0xff]
    %v2472 = vld [vmem:[#allocation7 + $0x1f0] sm:$0xff]
    %v2473 = vld [vmem:[#allocation7 + $0x1f8] sm:$0xff]
    %v2474 = vld [vmem:[#allocation7 + $0x200] sm:$0xff]
    %v2475 = vld [vmem:[#allocation7 + $0x208] sm:$0xff]
    %v2476 = vld [vmem:[#allocation7 + $0x210] sm:$0xff]
    %v2477 = vld [vmem:[#allocation7 + $0x218] sm:$0xff]
    %v2478 = vld [vmem:[#allocation7 + $0x220] sm:$0xff]
    %v2479 = vld [vmem:[#allocation7 + $0x228] sm:$0xff]
    %v2480 = vld [vmem:[#allocation7 + $0x230] sm:$0xff]
    %v2481 = vld [vmem:[#allocation7 + $0x238] sm:$0xff]
    %v2482 = vld [vmem:[#allocation7 + $0x240] sm:$0xff]
    %v2483 = vld [vmem:[#allocation7 + $0x248] sm:$0xff]
    %v2484 = vld [vmem:[#allocation7 + $0x250] sm:$0xff]
    %v2485 = vld [vmem:[#allocation7 + $0x258] sm:$0xff]
    %v2486 = vld [vmem:[#allocation7 + $0x260] sm:$0xff]
    %v2487 = vld [vmem:[#allocation7 + $0x268] sm:$0xff]
    %v2488 = vld [vmem:[#allocation7 + $0x270] sm:$0xff]
    %v2489 = vld [vmem:[#allocation7 + $0x278] sm:$0xff]
    %v2490 = vld [vmem:[#allocation7 + $0x280] sm:$0xff]
    %v2491 = vld [vmem:[#allocation7 + $0x288] sm:$0xff]
    %v2492 = vld [vmem:[#allocation7 + $0x290] sm:$0xff]
    %v2493 = vld [vmem:[#allocation7 + $0x298] sm:$0xff]
    %v2494 = vld [vmem:[#allocation7 + $0x2a0] sm:$0xff]
    %v2495 = vld [vmem:[#allocation7 + $0x2a8] sm:$0xff]
    %v2496 = vld [vmem:[#allocation7 + $0x2b0] sm:$0xff]
    %v2497 = vld [vmem:[#allocation7 + $0x2b8] sm:$0xff]
    %v2498 = vld [vmem:[#allocation7 + $0x2c0] sm:$0xff]
    %v2499 = vld [vmem:[#allocation7 + $0x2c8] sm:$0xff]
    %v2500 = vld [vmem:[#allocation7 + $0x2d0] sm:$0xff]
    %v2501 = vld [vmem:[#allocation7 + $0x2d8] sm:$0xff]
    %v2502 = vld [vmem:[#allocation7 + $0x2e0] sm:$0xff]
    %v2503 = vld [vmem:[#allocation7 + $0x2e8] sm:$0xff]
    %v2504 = vld [vmem:[#allocation7 + $0x2f0] sm:$0xff]
    %v2505 = vld [vmem:[#allocation7 + $0x2f8] sm:$0xff]
    %v2506 = vld [vmem:[#allocation7 + $0x300] sm:$0xff]
    %v2507 = vld [vmem:[#allocation7 + $0x308] sm:$0xff]
    %v2508 = vld [vmem:[#allocation7 + $0x310] sm:$0xff]
    %v2509 = vld [vmem:[#allocation7 + $0x318] sm:$0xff]
    %v2510 = vld [vmem:[#allocation7 + $0x320] sm:$0xff]
    %v2511 = vld [vmem:[#allocation7 + $0x328] sm:$0xff]
    %v2512 = vld [vmem:[#allocation7 + $0x330] sm:$0xff]
    %v2513 = vld [vmem:[#allocation7 + $0x338] sm:$0xff]
    %v2514 = vld [vmem:[#allocation7 + $0x340] sm:$0xff]
    %v2515 = vld [vmem:[#allocation7 + $0x348] sm:$0xff]
    %v2516 = vld [vmem:[#allocation7 + $0x350] sm:$0xff]
    %v2517 = vld [vmem:[#allocation7 + $0x358] sm:$0xff]
    %v2518 = vld [vmem:[#allocation7 + $0x360] sm:$0xff]
    %v2519 = vld [vmem:[#allocation7 + $0x368] sm:$0xff]
    %v2520 = vld [vmem:[#allocation7 + $0x370] sm:$0xff]
    %v2521 = vld [vmem:[#allocation7 + $0x378] sm:$0xff]
    %v2522 = vld [vmem:[#allocation7 + $0x380] sm:$0xff]
    %v2523 = vld [vmem:[#allocation7 + $0x388] sm:$0xff]
    %v2524 = vld [vmem:[#allocation7 + $0x390] sm:$0xff]
    %v2525 = vld [vmem:[#allocation7 + $0x398] sm:$0xff]
    %v2526 = vld [vmem:[#allocation7 + $0x3a0] sm:$0xff]
    %v2527 = vld [vmem:[#allocation7 + $0x3a8] sm:$0xff]
    %v2528 = vld [vmem:[#allocation7 + $0x3b0] sm:$0xff]
    %v2529 = vld [vmem:[#allocation7 + $0x3b8] sm:$0xff]
    %v2530 = vld [vmem:[#allocation7 + $0x3c0] sm:$0xff]
    %v2531 = vld [vmem:[#allocation7 + $0x3c8] sm:$0xff]
    %v2532 = vld [vmem:[#allocation7 + $0x3d0] sm:$0xff]
    %v2533 = vld [vmem:[#allocation7 + $0x3d8] sm:$0xff]
    %v2534 = vld [vmem:[#allocation7 + $0x3e0] sm:$0xff]
    %v2535 = vld [vmem:[#allocation7 + $0x3e8] sm:$0xff]
    %v2536 = vld [vmem:[#allocation7 + $0x3f0] sm:$0xff]
    %v2537 = vld [vmem:[#allocation7 + $0x3f8] sm:$0xff]
    %v2538 = vld [vmem:[%s10] sm:$0x3]
    %v2540 = vlaneseq
    %v2541 = vshrl.u32 %v2540, 7
    %v2542 = vsub.s32 0, %v2541
    %v2543 = vrot.slane %v2538, %v2542
    %v2544 = vlaneseq
    %v2545 = vshrl.u32 %v2544, 7
    %v2546 = vsub.s32 1, %v2545
    %v2547 = vrot.slane %v2538, %v2546
    %v2554 = vunpack.c.l.b16 %v2406
    %v2555 = vunpack.c.h.b16 %v2406
    %v2556 = vunpack.c.l.b16 %v2407
    %v2557 = vunpack.c.h.b16 %v2407
    %v2558 = vunpack.c.l.b16 %v2408
    %v2559 = vunpack.c.h.b16 %v2408
    %v2560 = vunpack.c.l.b16 %v2409
    %v2561 = vunpack.c.h.b16 %v2409
    %v2562 = vpack.c.b16 %v2554, %v2554
    %v2563 = vpack.c.b16 %v2555, %v2555
    %v2564 = vpack.c.b16 %v2556, %v2556
    %v2565 = vpack.c.b16 %v2557, %v2557
    %v2566 = vpack.c.b16 %v2558, %v2558
    %v2567 = vpack.c.b16 %v2559, %v2559
    %v2568 = vpack.c.b16 %v2560, %v2560
    %v2569 = vpack.c.b16 %v2561, %v2561
    %v2706 = vunpack.c.l.b16 %v2410
    %v2707 = vunpack.c.h.b16 %v2410
    %v2708 = vunpack.c.l.b16 %v2411
    %v2709 = vunpack.c.h.b16 %v2411
    %v2710 = vunpack.c.l.b16 %v2412
    %v2711 = vunpack.c.h.b16 %v2412
    %v2712 = vunpack.c.l.b16 %v2413
    %v2713 = vunpack.c.h.b16 %v2413
    %v2714 = vunpack.c.l.b16 %v2414
    %v2715 = vunpack.c.h.b16 %v2414
    %v2716 = vunpack.c.l.b16 %v2415
    %v2717 = vunpack.c.h.b16 %v2415
    %v2718 = vunpack.c.l.b16 %v2416
    %v2719 = vunpack.c.h.b16 %v2416
    %v2720 = vunpack.c.l.b16 %v2417
    %v2721 = vunpack.c.h.b16 %v2417
    %v2722 = vunpack.c.l.b16 %v2418
    %v2723 = vunpack.c.h.b16 %v2418
    %v2724 = vunpack.c.l.b16 %v2419
    %v2725 = vunpack.c.h.b16 %v2419
    %v2726 = vunpack.c.l.b16 %v2420
    %v2727 = vunpack.c.h.b16 %v2420
    %v2728 = vunpack.c.l.b16 %v2421
    %v2729 = vunpack.c.h.b16 %v2421
    %v2730 = vunpack.c.l.b16 %v2422
    %v2731 = vunpack.c.h.b16 %v2422
    %v2732 = vunpack.c.l.b16 %v2423
    %v2733 = vunpack.c.h.b16 %v2423
    %v2734 = vunpack.c.l.b16 %v2424
    %v2735 = vunpack.c.h.b16 %v2424
    %v2736 = vunpack.c.l.b16 %v2425
    %v2737 = vunpack.c.h.b16 %v2425
    %v2738 = vunpack.c.l.b16 %v2426
    %v2739 = vunpack.c.h.b16 %v2426
    %v2740 = vunpack.c.l.b16 %v2427
    %v2741 = vunpack.c.h.b16 %v2427
    %v2742 = vunpack.c.l.b16 %v2428
    %v2743 = vunpack.c.h.b16 %v2428
    %v2744 = vunpack.c.l.b16 %v2429
    %v2745 = vunpack.c.h.b16 %v2429
    %v2746 = vunpack.c.l.b16 %v2430
    %v2747 = vunpack.c.h.b16 %v2430
    %v2748 = vunpack.c.l.b16 %v2431
    %v2749 = vunpack.c.h.b16 %v2431
    %v2750 = vunpack.c.l.b16 %v2432
    %v2751 = vunpack.c.h.b16 %v2432
    %v2752 = vunpack.c.l.b16 %v2433
    %v2753 = vunpack.c.h.b16 %v2433
    %v2754 = vunpack.c.l.b16 %v2434
    %v2755 = vunpack.c.h.b16 %v2434
    %v2756 = vunpack.c.l.b16 %v2435
    %v2757 = vunpack.c.h.b16 %v2435
    %v2758 = vunpack.c.l.b16 %v2436
    %v2759 = vunpack.c.h.b16 %v2436
    %v2760 = vunpack.c.l.b16 %v2437
    %v2761 = vunpack.c.h.b16 %v2437
    %v2762 = vunpack.c.l.b16 %v2438
    %v2763 = vunpack.c.h.b16 %v2438
    %v2764 = vunpack.c.l.b16 %v2439
    %v2765 = vunpack.c.h.b16 %v2439
    %v2766 = vunpack.c.l.b16 %v2440
    %v2767 = vunpack.c.h.b16 %v2440
    %v2768 = vunpack.c.l.b16 %v2441
    %v2769 = vunpack.c.h.b16 %v2441
    %v2770 = vunpack.c.l.b16 %v2442
    %v2771 = vunpack.c.h.b16 %v2442
    %v2772 = vunpack.c.l.b16 %v2443
    %v2773 = vunpack.c.h.b16 %v2443
    %v2774 = vunpack.c.l.b16 %v2444
    %v2775 = vunpack.c.h.b16 %v2444
    %v2776 = vunpack.c.l.b16 %v2445
    %v2777 = vunpack.c.h.b16 %v2445
    %v2778 = vunpack.c.l.b16 %v2446
    %v2779 = vunpack.c.h.b16 %v2446
    %v2780 = vunpack.c.l.b16 %v2447
    %v2781 = vunpack.c.h.b16 %v2447
    %v2782 = vunpack.c.l.b16 %v2448
    %v2783 = vunpack.c.h.b16 %v2448
    %v2784 = vunpack.c.l.b16 %v2449
    %v2785 = vunpack.c.h.b16 %v2449
    %v2786 = vunpack.c.l.b16 %v2450
    %v2787 = vunpack.c.h.b16 %v2450
    %v2788 = vunpack.c.l.b16 %v2451
    %v2789 = vunpack.c.h.b16 %v2451
    %v2790 = vunpack.c.l.b16 %v2452
    %v2791 = vunpack.c.h.b16 %v2452
    %v2792 = vunpack.c.l.b16 %v2453
    %v2793 = vunpack.c.h.b16 %v2453
    %v2794 = vunpack.c.l.b16 %v2454
    %v2795 = vunpack.c.h.b16 %v2454
    %v2796 = vunpack.c.l.b16 %v2455
    %v2797 = vunpack.c.h.b16 %v2455
    %v2798 = vunpack.c.l.b16 %v2456
    %v2799 = vunpack.c.h.b16 %v2456
    %v2800 = vunpack.c.l.b16 %v2457
    %v2801 = vunpack.c.h.b16 %v2457
    %v2802 = vunpack.c.l.b16 %v2458
    %v2803 = vunpack.c.h.b16 %v2458
    %v2804 = vunpack.c.l.b16 %v2459
    %v2805 = vunpack.c.h.b16 %v2459
    %v2806 = vunpack.c.l.b16 %v2460
    %v2807 = vunpack.c.h.b16 %v2460
    %v2808 = vunpack.c.l.b16 %v2461
    %v2809 = vunpack.c.h.b16 %v2461
    %v2810 = vunpack.c.l.b16 %v2462
    %v2811 = vunpack.c.h.b16 %v2462
    %v2812 = vunpack.c.l.b16 %v2463
    %v2813 = vunpack.c.h.b16 %v2463
    %v2814 = vunpack.c.l.b16 %v2464
    %v2815 = vunpack.c.h.b16 %v2464
    %v2816 = vunpack.c.l.b16 %v2465
    %v2817 = vunpack.c.h.b16 %v2465
    %v2818 = vunpack.c.l.b16 %v2466
    %v2819 = vunpack.c.h.b16 %v2466
    %v2820 = vunpack.c.l.b16 %v2467
    %v2821 = vunpack.c.h.b16 %v2467
    %v2822 = vunpack.c.l.b16 %v2468
    %v2823 = vunpack.c.h.b16 %v2468
    %v2824 = vunpack.c.l.b16 %v2469
    %v2825 = vunpack.c.h.b16 %v2469
    %v2826 = vunpack.c.l.b16 %v2470
    %v2827 = vunpack.c.h.b16 %v2470
    %v2828 = vunpack.c.l.b16 %v2471
    %v2829 = vunpack.c.h.b16 %v2471
    %v2830 = vunpack.c.l.b16 %v2472
    %v2831 = vunpack.c.h.b16 %v2472
    %v2832 = vunpack.c.l.b16 %v2473
    %v2833 = vunpack.c.h.b16 %v2473
    %v2834 = vunpack.c.l.b16 %v2474
    %v2835 = vunpack.c.h.b16 %v2474
    %v2836 = vunpack.c.l.b16 %v2475
    %v2837 = vunpack.c.h.b16 %v2475
    %v2838 = vunpack.c.l.b16 %v2476
    %v2839 = vunpack.c.h.b16 %v2476
    %v2840 = vunpack.c.l.b16 %v2477
    %v2841 = vunpack.c.h.b16 %v2477
    %v2842 = vunpack.c.l.b16 %v2478
    %v2843 = vunpack.c.h.b16 %v2478
    %v2844 = vunpack.c.l.b16 %v2479
    %v2845 = vunpack.c.h.b16 %v2479
    %v2846 = vunpack.c.l.b16 %v2480
    %v2847 = vunpack.c.h.b16 %v2480
    %v2848 = vunpack.c.l.b16 %v2481
    %v2849 = vunpack.c.h.b16 %v2481
    %v2850 = vunpack.c.l.b16 %v2482
    %v2851 = vunpack.c.h.b16 %v2482
    %v2852 = vunpack.c.l.b16 %v2483
    %v2853 = vunpack.c.h.b16 %v2483
    %v2854 = vunpack.c.l.b16 %v2484
    %v2855 = vunpack.c.h.b16 %v2484
    %v2856 = vunpack.c.l.b16 %v2485
    %v2857 = vunpack.c.h.b16 %v2485
    %v2858 = vunpack.c.l.b16 %v2486
    %v2859 = vunpack.c.h.b16 %v2486
    %v2860 = vunpack.c.l.b16 %v2487
    %v2861 = vunpack.c.h.b16 %v2487
    %v2862 = vunpack.c.l.b16 %v2488
    %v2863 = vunpack.c.h.b16 %v2488
    %v2864 = vunpack.c.l.b16 %v2489
    %v2865 = vunpack.c.h.b16 %v2489
    %v2866 = vunpack.c.l.b16 %v2490
    %v2867 = vunpack.c.h.b16 %v2490
    %v2868 = vunpack.c.l.b16 %v2491
    %v2869 = vunpack.c.h.b16 %v2491
    %v2870 = vunpack.c.l.b16 %v2492
    %v2871 = vunpack.c.h.b16 %v2492
    %v2872 = vunpack.c.l.b16 %v2493
    %v2873 = vunpack.c.h.b16 %v2493
    %v2874 = vunpack.c.l.b16 %v2494
    %v2875 = vunpack.c.h.b16 %v2494
    %v2876 = vunpack.c.l.b16 %v2495
    %v2877 = vunpack.c.h.b16 %v2495
    %v2878 = vunpack.c.l.b16 %v2496
    %v2879 = vunpack.c.h.b16 %v2496
    %v2880 = vunpack.c.l.b16 %v2497
    %v2881 = vunpack.c.h.b16 %v2497
    %v2882 = vunpack.c.l.b16 %v2498
    %v2883 = vunpack.c.h.b16 %v2498
    %v2884 = vunpack.c.l.b16 %v2499
    %v2885 = vunpack.c.h.b16 %v2499
    %v2886 = vunpack.c.l.b16 %v2500
    %v2887 = vunpack.c.h.b16 %v2500
    %v2888 = vunpack.c.l.b16 %v2501
    %v2889 = vunpack.c.h.b16 %v2501
    %v2890 = vunpack.c.l.b16 %v2502
    %v2891 = vunpack.c.h.b16 %v2502
    %v2892 = vunpack.c.l.b16 %v2503
    %v2893 = vunpack.c.h.b16 %v2503
    %v2894 = vunpack.c.l.b16 %v2504
    %v2895 = vunpack.c.h.b16 %v2504
    %v2896 = vunpack.c.l.b16 %v2505
    %v2897 = vunpack.c.h.b16 %v2505
    %v2898 = vunpack.c.l.b16 %v2506
    %v2899 = vunpack.c.h.b16 %v2506
    %v2900 = vunpack.c.l.b16 %v2507
    %v2901 = vunpack.c.h.b16 %v2507
    %v2902 = vunpack.c.l.b16 %v2508
    %v2903 = vunpack.c.h.b16 %v2508
    %v2904 = vunpack.c.l.b16 %v2509
    %v2905 = vunpack.c.h.b16 %v2509
    %v2906 = vunpack.c.l.b16 %v2510
    %v2907 = vunpack.c.h.b16 %v2510
    %v2908 = vunpack.c.l.b16 %v2511
    %v2909 = vunpack.c.h.b16 %v2511
    %v2910 = vunpack.c.l.b16 %v2512
    %v2911 = vunpack.c.h.b16 %v2512
    %v2912 = vunpack.c.l.b16 %v2513
    %v2913 = vunpack.c.h.b16 %v2513
    %v2914 = vunpack.c.l.b16 %v2514
    %v2915 = vunpack.c.h.b16 %v2514
    %v2916 = vunpack.c.l.b16 %v2515
    %v2917 = vunpack.c.h.b16 %v2515
    %v2918 = vunpack.c.l.b16 %v2516
    %v2919 = vunpack.c.h.b16 %v2516
    %v2920 = vunpack.c.l.b16 %v2517
    %v2921 = vunpack.c.h.b16 %v2517
    %v2922 = vunpack.c.l.b16 %v2518
    %v2923 = vunpack.c.h.b16 %v2518
    %v2924 = vunpack.c.l.b16 %v2519
    %v2925 = vunpack.c.h.b16 %v2519
    %v2926 = vunpack.c.l.b16 %v2520
    %v2927 = vunpack.c.h.b16 %v2520
    %v2928 = vunpack.c.l.b16 %v2521
    %v2929 = vunpack.c.h.b16 %v2521
    %v2930 = vunpack.c.l.b16 %v2522
    %v2931 = vunpack.c.h.b16 %v2522
    %v2932 = vunpack.c.l.b16 %v2523
    %v2933 = vunpack.c.h.b16 %v2523
    %v2934 = vunpack.c.l.b16 %v2524
    %v2935 = vunpack.c.h.b16 %v2524
    %v2936 = vunpack.c.l.b16 %v2525
    %v2937 = vunpack.c.h.b16 %v2525
    %v2938 = vunpack.c.l.b16 %v2526
    %v2939 = vunpack.c.h.b16 %v2526
    %v2940 = vunpack.c.l.b16 %v2527
    %v2941 = vunpack.c.h.b16 %v2527
    %v2942 = vunpack.c.l.b16 %v2528
    %v2943 = vunpack.c.h.b16 %v2528
    %v2944 = vunpack.c.l.b16 %v2529
    %v2945 = vunpack.c.h.b16 %v2529
    %v2946 = vunpack.c.l.b16 %v2530
    %v2947 = vunpack.c.h.b16 %v2530
    %v2948 = vunpack.c.l.b16 %v2531
    %v2949 = vunpack.c.h.b16 %v2531
    %v2950 = vunpack.c.l.b16 %v2532
    %v2951 = vunpack.c.h.b16 %v2532
    %v2952 = vunpack.c.l.b16 %v2533
    %v2953 = vunpack.c.h.b16 %v2533
    %v2954 = vunpack.c.l.b16 %v2534
    %v2955 = vunpack.c.h.b16 %v2534
    %v2956 = vunpack.c.l.b16 %v2535
    %v2957 = vunpack.c.h.b16 %v2535
    %v2958 = vunpack.c.l.b16 %v2536
    %v2959 = vunpack.c.h.b16 %v2536
    %v2960 = vunpack.c.l.b16 %v2537
    %v2961 = vunpack.c.h.b16 %v2537
    %v2962 = vpack.c.b16 %v2708, %v2706
    %v2963 = vpack.c.b16 %v2709, %v2707
    %v2964 = vpack.c.b16 %v2712, %v2710
    %v2965 = vpack.c.b16 %v2713, %v2711
    %v2966 = vpack.c.b16 %v2716, %v2714
    %v2967 = vpack.c.b16 %v2717, %v2715
    %v2968 = vpack.c.b16 %v2720, %v2718
    %v2969 = vpack.c.b16 %v2721, %v2719
    %v2970 = vpack.c.b16 %v2724, %v2722
    %v2971 = vpack.c.b16 %v2725, %v2723
    %v2972 = vpack.c.b16 %v2728, %v2726
    %v2973 = vpack.c.b16 %v2729, %v2727
    %v2974 = vpack.c.b16 %v2732, %v2730
    %v2975 = vpack.c.b16 %v2733, %v2731
    %v2976 = vpack.c.b16 %v2736, %v2734
    %v2977 = vpack.c.b16 %v2737, %v2735
    %v2978 = vpack.c.b16 %v2740, %v2738
    %v2979 = vpack.c.b16 %v2741, %v2739
    %v2980 = vpack.c.b16 %v2744, %v2742
    %v2981 = vpack.c.b16 %v2745, %v2743
    %v2982 = vpack.c.b16 %v2748, %v2746
    %v2983 = vpack.c.b16 %v2749, %v2747
    %v2984 = vpack.c.b16 %v2752, %v2750
    %v2985 = vpack.c.b16 %v2753, %v2751
    %v2986 = vpack.c.b16 %v2756, %v2754
    %v2987 = vpack.c.b16 %v2757, %v2755
    %v2988 = vpack.c.b16 %v2760, %v2758
    %v2989 = vpack.c.b16 %v2761, %v2759
    %v2990 = vpack.c.b16 %v2764, %v2762
    %v2991 = vpack.c.b16 %v2765, %v2763
    %v2992 = vpack.c.b16 %v2768, %v2766
    %v2993 = vpack.c.b16 %v2769, %v2767
    %v2994 = vpack.c.b16 %v2772, %v2770
    %v2995 = vpack.c.b16 %v2773, %v2771
    %v2996 = vpack.c.b16 %v2776, %v2774
    %v2997 = vpack.c.b16 %v2777, %v2775
    %v2998 = vpack.c.b16 %v2780, %v2778
    %v2999 = vpack.c.b16 %v2781, %v2779
    %v3000 = vpack.c.b16 %v2784, %v2782
    %v3001 = vpack.c.b16 %v2785, %v2783
    %v3002 = vpack.c.b16 %v2788, %v2786
    %v3003 = vpack.c.b16 %v2789, %v2787
    %v3004 = vpack.c.b16 %v2792, %v2790
    %v3005 = vpack.c.b16 %v2793, %v2791
    %v3006 = vpack.c.b16 %v2796, %v2794
    %v3007 = vpack.c.b16 %v2797, %v2795
    %v3008 = vpack.c.b16 %v2800, %v2798
    %v3009 = vpack.c.b16 %v2801, %v2799
    %v3010 = vpack.c.b16 %v2804, %v2802
    %v3011 = vpack.c.b16 %v2805, %v2803
    %v3012 = vpack.c.b16 %v2808, %v2806
    %v3013 = vpack.c.b16 %v2809, %v2807
    %v3014 = vpack.c.b16 %v2812, %v2810
    %v3015 = vpack.c.b16 %v2813, %v2811
    %v3016 = vpack.c.b16 %v2816, %v2814
    %v3017 = vpack.c.b16 %v2817, %v2815
    %v3018 = vpack.c.b16 %v2820, %v2818
    %v3019 = vpack.c.b16 %v2821, %v2819
    %v3020 = vpack.c.b16 %v2824, %v2822
    %v3021 = vpack.c.b16 %v2825, %v2823
    %v3022 = vpack.c.b16 %v2828, %v2826
    %v3023 = vpack.c.b16 %v2829, %v2827
    %v3024 = vpack.c.b16 %v2832, %v2830
    %v3025 = vpack.c.b16 %v2833, %v2831
    %v3026 = vpack.c.b16 %v2836, %v2834
    %v3027 = vpack.c.b16 %v2837, %v2835
    %v3028 = vpack.c.b16 %v2840, %v2838
    %v3029 = vpack.c.b16 %v2841, %v2839
    %v3030 = vpack.c.b16 %v2844, %v2842
    %v3031 = vpack.c.b16 %v2845, %v2843
    %v3032 = vpack.c.b16 %v2848, %v2846
    %v3033 = vpack.c.b16 %v2849, %v2847
    %v3034 = vpack.c.b16 %v2852, %v2850
    %v3035 = vpack.c.b16 %v2853, %v2851
    %v3036 = vpack.c.b16 %v2856, %v2854
    %v3037 = vpack.c.b16 %v2857, %v2855
    %v3038 = vpack.c.b16 %v2860, %v2858
    %v3039 = vpack.c.b16 %v2861, %v2859
    %v3040 = vpack.c.b16 %v2864, %v2862
    %v3041 = vpack.c.b16 %v2865, %v2863
    %v3042 = vpack.c.b16 %v2868, %v2866
    %v3043 = vpack.c.b16 %v2869, %v2867
    %v3044 = vpack.c.b16 %v2872, %v2870
    %v3045 = vpack.c.b16 %v2873, %v2871
    %v3046 = vpack.c.b16 %v2876, %v2874
    %v3047 = vpack.c.b16 %v2877, %v2875
    %v3048 = vpack.c.b16 %v2880, %v2878
    %v3049 = vpack.c.b16 %v2881, %v2879
    %v3050 = vpack.c.b16 %v2884, %v2882
    %v3051 = vpack.c.b16 %v2885, %v2883
    %v3052 = vpack.c.b16 %v2888, %v2886
    %v3053 = vpack.c.b16 %v2889, %v2887
    %v3054 = vpack.c.b16 %v2892, %v2890
    %v3055 = vpack.c.b16 %v2893, %v2891
    %v3056 = vpack.c.b16 %v2896, %v2894
    %v3057 = vpack.c.b16 %v2897, %v2895
    %v3058 = vpack.c.b16 %v2900, %v2898
    %v3059 = vpack.c.b16 %v2901, %v2899
    %v3060 = vpack.c.b16 %v2904, %v2902
    %v3061 = vpack.c.b16 %v2905, %v2903
    %v3062 = vpack.c.b16 %v2908, %v2906
    %v3063 = vpack.c.b16 %v2909, %v2907
    %v3064 = vpack.c.b16 %v2912, %v2910
    %v3065 = vpack.c.b16 %v2913, %v2911
    %v3066 = vpack.c.b16 %v2916, %v2914
    %v3067 = vpack.c.b16 %v2917, %v2915
    %v3068 = vpack.c.b16 %v2920, %v2918
    %v3069 = vpack.c.b16 %v2921, %v2919
    %v3070 = vpack.c.b16 %v2924, %v2922
    %v3071 = vpack.c.b16 %v2925, %v2923
    %v3072 = vpack.c.b16 %v2928, %v2926
    %v3073 = vpack.c.b16 %v2929, %v2927
    %v3074 = vpack.c.b16 %v2932, %v2930
    %v3075 = vpack.c.b16 %v2933, %v2931
    %v3076 = vpack.c.b16 %v2936, %v2934
    %v3077 = vpack.c.b16 %v2937, %v2935
    %v3078 = vpack.c.b16 %v2940, %v2938
    %v3079 = vpack.c.b16 %v2941, %v2939
    %v3080 = vpack.c.b16 %v2944, %v2942
    %v3081 = vpack.c.b16 %v2945, %v2943
    %v3082 = vpack.c.b16 %v2948, %v2946
    %v3083 = vpack.c.b16 %v2949, %v2947
    %v3084 = vpack.c.b16 %v2952, %v2950
    %v3085 = vpack.c.b16 %v2953, %v2951
    %v3086 = vpack.c.b16 %v2956, %v2954
    %v3087 = vpack.c.b16 %v2957, %v2955
    %v3088 = vpack.c.b16 %v2960, %v2958
    %v3089 = vpack.c.b16 %v2961, %v2959
    %3218 = vmatprep.subr.bf16.mxu0 %v2963
    %3219 = vmatpush1.bf16.msra.mxu0 %v2962
    %3220 = vmatprep.subr.bf16.mxu0 %v2965
    %3221 = vmatpush1.bf16.msra.mxu0 %v2964
    %3222 = vmatprep.subr.bf16.mxu0 %v2967
    %3223 = vmatpush1.bf16.msra.mxu0 %v2966
    %3224 = vmatprep.subr.bf16.mxu0 %v2969
    %3225 = vmatpush1.bf16.msra.mxu0 %v2968
    %3226 = vmatprep.subr.bf16.mxu0 %v2971
    %3227 = vmatpush1.bf16.msra.mxu0 %v2970
    %3228 = vmatprep.subr.bf16.mxu0 %v2973
    %3229 = vmatpush1.bf16.msra.mxu0 %v2972
    %3230 = vmatprep.subr.bf16.mxu0 %v2975
    %3231 = vmatpush1.bf16.msra.mxu0 %v2974
    %3232 = vmatprep.subr.bf16.mxu0 %v2977
    %3233 = vmatpush1.bf16.msra.mxu0 %v2976
    %3234 = vmatprep.subr.bf16.mxu0 %v2979
    %3235 = vmatpush1.bf16.msra.mxu0 %v2978
    %3236 = vmatprep.subr.bf16.mxu0 %v2981
    %3237 = vmatpush1.bf16.msra.mxu0 %v2980
    %3238 = vmatprep.subr.bf16.mxu0 %v2983
    %3239 = vmatpush1.bf16.msra.mxu0 %v2982
    %3240 = vmatprep.subr.bf16.mxu0 %v2985
    %3241 = vmatpush1.bf16.msra.mxu0 %v2984
    %3242 = vmatprep.subr.bf16.mxu0 %v2987
    %3243 = vmatpush1.bf16.msra.mxu0 %v2986
    %3244 = vmatprep.subr.bf16.mxu0 %v2989
    %3245 = vmatpush1.bf16.msra.mxu0 %v2988
    %3246 = vmatprep.subr.bf16.mxu0 %v2991
    %3247 = vmatpush1.bf16.msra.mxu0 %v2990
    %3248 = vmatprep.subr.bf16.mxu0 %v2993
    %3249 = vmatpush1.bf16.msra.mxu0 %v2992
    %3250 = vmatprep.mubr.bf16.mxu0 %v2563
    %3251 = vmatmul.mubr.bf16.gmra.mrb[0].mxu0 %v2562
    %v3252 = vpop.f32.mrb[0].mxu0
    %v3253 = vadd.f32 %v2543, %v3252
    %v3254 = vpop.f32.mrb[0].mxu0
    %v3255 = vadd.f32 %v2547, %v3254
    %v3256 = vpop.f32.mrb[0].mxu0
    %v3257 = vpop.f32.mrb[0].mxu0
    %3258 = vdwg.mxu0
    %3259 = vmatprep.subr.bf16.mxu0 %v2995
    %3260 = vmatpush1.bf16.msra.mxu0 %v2994
    %3261 = vmatprep.subr.bf16.mxu0 %v2997
    %3262 = vmatpush1.bf16.msra.mxu0 %v2996
    %3263 = vmatprep.subr.bf16.mxu0 %v2999
    %3264 = vmatpush1.bf16.msra.mxu0 %v2998
    %3265 = vmatprep.subr.bf16.mxu0 %v3001
    %3266 = vmatpush1.bf16.msra.mxu0 %v3000
    %3267 = vmatprep.subr.bf16.mxu0 %v3003
    %3268 = vmatpush1.bf16.msra.mxu0 %v3002
    %3269 = vmatprep.subr.bf16.mxu0 %v3005
    %3270 = vmatpush1.bf16.msra.mxu0 %v3004
    %3271 = vmatprep.subr.bf16.mxu0 %v3007
    %3272 = vmatpush1.bf16.msra.mxu0 %v3006
    %3273 = vmatprep.subr.bf16.mxu0 %v3009
    %3274 = vmatpush1.bf16.msra.mxu0 %v3008
    %3275 = vmatprep.subr.bf16.mxu0 %v3011
    %3276 = vmatpush1.bf16.msra.mxu0 %v3010
    %3277 = vmatprep.subr.bf16.mxu0 %v3013
    %3278 = vmatpush1.bf16.msra.mxu0 %v3012
    %3279 = vmatprep.subr.bf16.mxu0 %v3015
    %3280 = vmatpush1.bf16.msra.mxu0 %v3014
    %3281 = vmatprep.subr.bf16.mxu0 %v3017
    %3282 = vmatpush1.bf16.msra.mxu0 %v3016
    %3283 = vmatprep.subr.bf16.mxu0 %v3019
    %3284 = vmatpush1.bf16.msra.mxu0 %v3018
    %3285 = vmatprep.subr.bf16.mxu0 %v3021
    %3286 = vmatpush1.bf16.msra.mxu0 %v3020
    %3287 = vmatprep.subr.bf16.mxu0 %v3023
    %3288 = vmatpush1.bf16.msra.mxu0 %v3022
    %3289 = vmatprep.subr.bf16.mxu0 %v3025
    %3290 = vmatpush1.bf16.msra.mxu0 %v3024
    %3291 = vmatprep.mubr.bf16.mxu0 %v2565
    %3292 = vmatmul.mubr.bf16.gmra.mrb[0].mxu0 %v2564
    %v3293 = vpop.f32.mrb[0].mxu0
    %v3294 = vadd.f32 %v3253, %v3293
    %v3295 = vpop.f32.mrb[0].mxu0
    %v3296 = vadd.f32 %v3255, %v3295
    %v3297 = vpop.f32.mrb[0].mxu0
    %v3298 = vpop.f32.mrb[0].mxu0
    %3299 = vdwg.mxu0
    %3300 = vmatprep.subr.bf16.mxu0 %v3027
    %3301 = vmatpush1.bf16.msra.mxu0 %v3026
    %3302 = vmatprep.subr.bf16.mxu0 %v3029
    %3303 = vmatpush1.bf16.msra.mxu0 %v3028
    %3304 = vmatprep.subr.bf16.mxu0 %v3031
    %3305 = vmatpush1.bf16.msra.mxu0 %v3030
    %3306 = vmatprep.subr.bf16.mxu0 %v3033
    %3307 = vmatpush1.bf16.msra.mxu0 %v3032
    %3308 = vmatprep.subr.bf16.mxu0 %v3035
    %3309 = vmatpush1.bf16.msra.mxu0 %v3034
    %3310 = vmatprep.subr.bf16.mxu0 %v3037
    %3311 = vmatpush1.bf16.msra.mxu0 %v3036
    %3312 = vmatprep.subr.bf16.mxu0 %v3039
    %3313 = vmatpush1.bf16.msra.mxu0 %v3038
    %3314 = vmatprep.subr.bf16.mxu0 %v3041
    %3315 = vmatpush1.bf16.msra.mxu0 %v3040
    %3316 = vmatprep.subr.bf16.mxu0 %v3043
    %3317 = vmatpush1.bf16.msra.mxu0 %v3042
    %3318 = vmatprep.subr.bf16.mxu0 %v3045
    %3319 = vmatpush1.bf16.msra.mxu0 %v3044
    %3320 = vmatprep.subr.bf16.mxu0 %v3047
    %3321 = vmatpush1.bf16.msra.mxu0 %v3046
    %3322 = vmatprep.subr.bf16.mxu0 %v3049
    %3323 = vmatpush1.bf16.msra.mxu0 %v3048
    %3324 = vmatprep.subr.bf16.mxu0 %v3051
    %3325 = vmatpush1.bf16.msra.mxu0 %v3050
    %3326 = vmatprep.subr.bf16.mxu0 %v3053
    %3327 = vmatpush1.bf16.msra.mxu0 %v3052
    %3328 = vmatprep.subr.bf16.mxu0 %v3055
    %3329 = vmatpush1.bf16.msra.mxu0 %v3054
    %3330 = vmatprep.subr.bf16.mxu0 %v3057
    %3331 = vmatpush1.bf16.msra.mxu0 %v3056
    %3332 = vmatprep.mubr.bf16.mxu0 %v2567
    %3333 = vmatmul.mubr.bf16.gmra.mrb[0].mxu0 %v2566
    %v3334 = vpop.f32.mrb[0].mxu0
    %v3335 = vadd.f32 %v3294, %v3334
    %v3336 = vpop.f32.mrb[0].mxu0
    %v3337 = vadd.f32 %v3296, %v3336
    %v3338 = vpop.f32.mrb[0].mxu0
    %v3339 = vpop.f32.mrb[0].mxu0
    %3340 = vdwg.mxu0
    %3341 = vmatprep.subr.bf16.mxu0 %v3059
    %3342 = vmatpush1.bf16.msra.mxu0 %v3058
    %3343 = vmatprep.subr.bf16.mxu0 %v3061
    %3344 = vmatpush1.bf16.msra.mxu0 %v3060
    %3345 = vmatprep.subr.bf16.mxu0 %v3063
    %3346 = vmatpush1.bf16.msra.mxu0 %v3062
    %3347 = vmatprep.subr.bf16.mxu0 %v3065
    %3348 = vmatpush1.bf16.msra.mxu0 %v3064
    %3349 = vmatprep.subr.bf16.mxu0 %v3067
    %3350 = vmatpush1.bf16.msra.mxu0 %v3066
    %3351 = vmatprep.subr.bf16.mxu0 %v3069
    %3352 = vmatpush1.bf16.msra.mxu0 %v3068
    %3353 = vmatprep.subr.bf16.mxu0 %v3071
    %3354 = vmatpush1.bf16.msra.mxu0 %v3070
    %3355 = vmatprep.subr.bf16.mxu0 %v3073
    %3356 = vmatpush1.bf16.msra.mxu0 %v3072
    %3357 = vmatprep.subr.bf16.mxu0 %v3075
    %3358 = vmatpush1.bf16.msra.mxu0 %v3074
    %3359 = vmatprep.subr.bf16.mxu0 %v3077
    %3360 = vmatpush1.bf16.msra.mxu0 %v3076
    %3361 = vmatprep.subr.bf16.mxu0 %v3079
    %3362 = vmatpush1.bf16.msra.mxu0 %v3078
    %3363 = vmatprep.subr.bf16.mxu0 %v3081
    %3364 = vmatpush1.bf16.msra.mxu0 %v3080
    %3365 = vmatprep.subr.bf16.mxu0 %v3083
    %3366 = vmatpush1.bf16.msra.mxu0 %v3082
    %3367 = vmatprep.subr.bf16.mxu0 %v3085
    %3368 = vmatpush1.bf16.msra.mxu0 %v3084
    %3369 = vmatprep.subr.bf16.mxu0 %v3087
    %3370 = vmatpush1.bf16.msra.mxu0 %v3086
    %3371 = vmatprep.subr.bf16.mxu0 %v3089
    %3372 = vmatpush1.bf16.msra.mxu0 %v3088
    %3373 = vmatprep.mubr.bf16.mxu0 %v2569
    %3374 = vmatmul.mubr.bf16.gmra.mrb[0].mxu0 %v2568
    %v3375 = vpop.f32.mrb[0].mxu0
    %v3376 = vadd.f32 %v3335, %v3375
    %v3377 = vpop.f32.mrb[0].mxu0
    %v3378 = vadd.f32 %v3337, %v3377
    %v3379 = vpop.f32.mrb[0].mxu0
    %v3380 = vpop.f32.mrb[0].mxu0
    %3381 = vdwg.mxu0
    %v3382 = vmul.f32 %v3376, 0.5
    %v3383 = vmul.f32 %v3378, 0.5
    %v3384 = vmul.f32 %v3376, 0.70710677
    %v3385 = vmul.f32 %v3378, 0.70710677
    %vm3386 = vcmp.lt.f32.partialorder %v3384, 0.0
    %vm3387 = vcmp.lt.f32.partialorder %v3385, 0.0
    %v3388 = vsel %vm3386, -1.0, 1.0
    %v3389 = vsel %vm3387, -1.0, 1.0
    %v3390 = vand.u32 2147483647, %v3384
    %v3391 = vand.u32 2147483647, %v3385
    %v3392 = vmul.f32 %v3390, 0.3275911
    %v3393 = vmul.f32 %v3391, 0.3275911
    %v3394 = vadd.f32 %v3392, 1.0
    %v3395 = vadd.f32 %v3393, 1.0
    %v3396 = vrcp.pop %v3394
    %v3397 = vmul.f32 1.0, %v3396
    %v3398 = vrcp.pop %v3395
    %v3399 = vmul.f32 1.0, %v3398
    %v3400 = vmul.f32 %v3397, 1.0614054
    %v3401 = vmul.f32 %v3399, 1.0614054
    %v3402 = vadd.f32 %v3400, -1.4531521
    %v3403 = vadd.f32 %v3401, -1.4531521
    %v3404 = vmul.f32 %v3402, %v3397
    %v3405 = vmul.f32 %v3403, %v3399
    %v3406 = vadd.f32 %v3404, 1.4214138
    %v3407 = vadd.f32 %v3405, 1.4214138
    %v3408 = vmul.f32 %v3406, %v3397
    %v3409 = vmul.f32 %v3407, %v3399
    %v3410 = vadd.f32 %v3408, -0.28449672
    %v3411 = vadd.f32 %v3409, -0.28449672
    %v3412 = vmul.f32 %v3410, %v3397
    %v3413 = vmul.f32 %v3411, %v3399
    %v3414 = vadd.f32 %v3412, 0.2548296
    %v3415 = vadd.f32 %v3413, 0.2548296
    %v3416 = vmul.f32 %v3414, %v3397
    %v3417 = vmul.f32 %v3415, %v3399
    %v3418 = vsub.f32 0.0, %v3390
    %v3419 = vsub.f32 0.0, %v3391
    %v3420 = vmul.f32 %v3418, %v3390
    %v3421 = vmul.f32 %v3419, %v3391
    %v3422 = vmul.f32 %v3420, 1.442695
    %v3423 = vpow.pop %v3422
    %v3424 = vmul.f32 %v3421, 1.442695
    %v3425 = vpow.pop %v3424
    %v3426 = vmul.f32 %v3416, %v3423
    %v3427 = vmul.f32 %v3417, %v3425
    %v3428 = vsub.f32 1.0, %v3426
    %v3429 = vsub.f32 1.0, %v3427
    %v3430 = vmul.f32 %v3388, %v3428
    %v3431 = vmul.f32 %v3389, %v3429
    %v3432 = vadd.f32 %v3430, 1.0
    %v3433 = vadd.f32 %v3431, 1.0
    %v3434 = vmul.f32 %v3382, %v3432
    %v3435 = vmul.f32 %v3383, %v3433
    %v3436 = vpack.c.bf16 %v3434, %v3434
    %v3437 = vpack.c.bf16 %v3435, %v3435
    %v3438 = vld [vmem:[#allocation9] sm:$0xff]
    %v3439 = vld [vmem:[#allocation9 + $0x8] sm:$0xff]
    %v3440 = vld [vmem:[#allocation9 + $0x10] sm:$0xff]
    %v3441 = vld [vmem:[#allocation9 + $0x18] sm:$0xff]
    %v3442 = vld [vmem:[#allocation9 + $0x20] sm:$0xff]
    %v3443 = vld [vmem:[#allocation9 + $0x28] sm:$0xff]
    %v3444 = vld [vmem:[#allocation9 + $0x30] sm:$0xff]
    %v3445 = vld [vmem:[#allocation9 + $0x38] sm:$0xff]
    %v3446 = vld [vmem:[#allocation9 + $0x40] sm:$0xff]
    %v3447 = vld [vmem:[#allocation9 + $0x48] sm:$0xff]
    %v3448 = vld [vmem:[#allocation9 + $0x50] sm:$0xff]
    %v3449 = vld [vmem:[#allocation9 + $0x58] sm:$0xff]
    %v3450 = vld [vmem:[#allocation9 + $0x60] sm:$0xff]
    %v3451 = vld [vmem:[#allocation9 + $0x68] sm:$0xff]
    %v3452 = vld [vmem:[#allocation9 + $0x70] sm:$0xff]
    %v3453 = vld [vmem:[#allocation9 + $0x78] sm:$0xff]
    %v3454 = vld [vmem:[#allocation9 + $0x80] sm:$0xff]
    %v3455 = vld [vmem:[#allocation9 + $0x88] sm:$0xff]
    %v3456 = vld [vmem:[#allocation9 + $0x90] sm:$0xff]
    %v3457 = vld [vmem:[#allocation9 + $0x98] sm:$0xff]
    %v3458 = vld [vmem:[#allocation9 + $0xa0] sm:$0xff]
    %v3459 = vld [vmem:[#allocation9 + $0xa8] sm:$0xff]
    %v3460 = vld [vmem:[#allocation9 + $0xb0] sm:$0xff]
    %v3461 = vld [vmem:[#allocation9 + $0xb8] sm:$0xff]
    %v3462 = vld [vmem:[#allocation9 + $0xc0] sm:$0xff]
    %v3463 = vld [vmem:[#allocation9 + $0xc8] sm:$0xff]
    %v3464 = vld [vmem:[#allocation9 + $0xd0] sm:$0xff]
    %v3465 = vld [vmem:[#allocation9 + $0xd8] sm:$0xff]
    %v3466 = vld [vmem:[#allocation9 + $0xe0] sm:$0xff]
    %v3467 = vld [vmem:[#allocation9 + $0xe8] sm:$0xff]
    %v3468 = vld [vmem:[#allocation9 + $0xf0] sm:$0xff]
    %v3469 = vld [vmem:[#allocation9 + $0xf8] sm:$0xff]
    %v3470 = vld [vmem:[%s12] sm:$0x3]
    %v3472 = vlaneseq
    %v3473 = vshrl.u32 %v3472, 7
    %v3474 = vsub.s32 0, %v3473
    %v3475 = vrot.slane %v3470, %v3474
    %v3476 = vlaneseq
    %v3477 = vshrl.u32 %v3476, 7
    %v3478 = vsub.s32 1, %v3477
    %v3479 = vrot.slane %v3470, %v3478
    %v3514 = vunpack.c.l.b16 %v3438
    %v3515 = vunpack.c.h.b16 %v3438
    %v3516 = vunpack.c.l.b16 %v3439
    %v3517 = vunpack.c.h.b16 %v3439
    %v3518 = vunpack.c.l.b16 %v3440
    %v3519 = vunpack.c.h.b16 %v3440
    %v3520 = vunpack.c.l.b16 %v3441
    %v3521 = vunpack.c.h.b16 %v3441
    %v3522 = vunpack.c.l.b16 %v3442
    %v3523 = vunpack.c.h.b16 %v3442
    %v3524 = vunpack.c.l.b16 %v3443
    %v3525 = vunpack.c.h.b16 %v3443
    %v3526 = vunpack.c.l.b16 %v3444
    %v3527 = vunpack.c.h.b16 %v3444
    %v3528 = vunpack.c.l.b16 %v3445
    %v3529 = vunpack.c.h.b16 %v3445
    %v3530 = vunpack.c.l.b16 %v3446
    %v3531 = vunpack.c.h.b16 %v3446
    %v3532 = vunpack.c.l.b16 %v3447
    %v3533 = vunpack.c.h.b16 %v3447
    %v3534 = vunpack.c.l.b16 %v3448
    %v3535 = vunpack.c.h.b16 %v3448
    %v3536 = vunpack.c.l.b16 %v3449
    %v3537 = vunpack.c.h.b16 %v3449
    %v3538 = vunpack.c.l.b16 %v3450
    %v3539 = vunpack.c.h.b16 %v3450
    %v3540 = vunpack.c.l.b16 %v3451
    %v3541 = vunpack.c.h.b16 %v3451
    %v3542 = vunpack.c.l.b16 %v3452
    %v3543 = vunpack.c.h.b16 %v3452
    %v3544 = vunpack.c.l.b16 %v3453
    %v3545 = vunpack.c.h.b16 %v3453
    %v3546 = vunpack.c.l.b16 %v3454
    %v3547 = vunpack.c.h.b16 %v3454
    %v3548 = vunpack.c.l.b16 %v3455
    %v3549 = vunpack.c.h.b16 %v3455
    %v3550 = vunpack.c.l.b16 %v3456
    %v3551 = vunpack.c.h.b16 %v3456
    %v3552 = vunpack.c.l.b16 %v3457
    %v3553 = vunpack.c.h.b16 %v3457
    %v3554 = vunpack.c.l.b16 %v3458
    %v3555 = vunpack.c.h.b16 %v3458
    %v3556 = vunpack.c.l.b16 %v3459
    %v3557 = vunpack.c.h.b16 %v3459
    %v3558 = vunpack.c.l.b16 %v3460
    %v3559 = vunpack.c.h.b16 %v3460
    %v3560 = vunpack.c.l.b16 %v3461
    %v3561 = vunpack.c.h.b16 %v3461
    %v3562 = vunpack.c.l.b16 %v3462
    %v3563 = vunpack.c.h.b16 %v3462
    %v3564 = vunpack.c.l.b16 %v3463
    %v3565 = vunpack.c.h.b16 %v3463
    %v3566 = vunpack.c.l.b16 %v3464
    %v3567 = vunpack.c.h.b16 %v3464
    %v3568 = vunpack.c.l.b16 %v3465
    %v3569 = vunpack.c.h.b16 %v3465
    %v3570 = vunpack.c.l.b16 %v3466
    %v3571 = vunpack.c.h.b16 %v3466
    %v3572 = vunpack.c.l.b16 %v3467
    %v3573 = vunpack.c.h.b16 %v3467
    %v3574 = vunpack.c.l.b16 %v3468
    %v3575 = vunpack.c.h.b16 %v3468
    %v3576 = vunpack.c.l.b16 %v3469
    %v3577 = vunpack.c.h.b16 %v3469
    %v3578 = vpack.c.b16 %v3516, %v3514
    %v3579 = vpack.c.b16 %v3517, %v3515
    %v3580 = vpack.c.b16 %v3520, %v3518
    %v3581 = vpack.c.b16 %v3521, %v3519
    %v3582 = vpack.c.b16 %v3524, %v3522
    %v3583 = vpack.c.b16 %v3525, %v3523
    %v3584 = vpack.c.b16 %v3528, %v3526
    %v3585 = vpack.c.b16 %v3529, %v3527
    %v3586 = vpack.c.b16 %v3532, %v3530
    %v3587 = vpack.c.b16 %v3533, %v3531
    %v3588 = vpack.c.b16 %v3536, %v3534
    %v3589 = vpack.c.b16 %v3537, %v3535
    %v3590 = vpack.c.b16 %v3540, %v3538
    %v3591 = vpack.c.b16 %v3541, %v3539
    %v3592 = vpack.c.b16 %v3544, %v3542
    %v3593 = vpack.c.b16 %v3545, %v3543
    %v3594 = vpack.c.b16 %v3548, %v3546
    %v3595 = vpack.c.b16 %v3549, %v3547
    %v3596 = vpack.c.b16 %v3552, %v3550
    %v3597 = vpack.c.b16 %v3553, %v3551
    %v3598 = vpack.c.b16 %v3556, %v3554
    %v3599 = vpack.c.b16 %v3557, %v3555
    %v3600 = vpack.c.b16 %v3560, %v3558
    %v3601 = vpack.c.b16 %v3561, %v3559
    %v3602 = vpack.c.b16 %v3564, %v3562
    %v3603 = vpack.c.b16 %v3565, %v3563
    %v3604 = vpack.c.b16 %v3568, %v3566
    %v3605 = vpack.c.b16 %v3569, %v3567
    %v3606 = vpack.c.b16 %v3572, %v3570
    %v3607 = vpack.c.b16 %v3573, %v3571
    %v3608 = vpack.c.b16 %v3576, %v3574
    %v3609 = vpack.c.b16 %v3577, %v3575
    %3642 = vmatprep.subr.bf16.mxu0 %v3579
    %3643 = vmatpush1.bf16.msra.mxu0 %v3578
    %3644 = vmatprep.subr.bf16.mxu0 %v3581
    %3645 = vmatpush1.bf16.msra.mxu0 %v3580
    %3646 = vmatprep.subr.bf16.mxu0 %v3583
    %3647 = vmatpush1.bf16.msra.mxu0 %v3582
    %3648 = vmatprep.subr.bf16.mxu0 %v3585
    %3649 = vmatpush1.bf16.msra.mxu0 %v3584
    %3650 = vmatprep.subr.bf16.mxu0 %v3587
    %3651 = vmatpush1.bf16.msra.mxu0 %v3586
    %3652 = vmatprep.subr.bf16.mxu0 %v3589
    %3653 = vmatpush1.bf16.msra.mxu0 %v3588
    %3654 = vmatprep.subr.bf16.mxu0 %v3591
    %3655 = vmatpush1.bf16.msra.mxu0 %v3590
    %3656 = vmatprep.subr.bf16.mxu0 %v3593
    %3657 = vmatpush1.bf16.msra.mxu0 %v3592
    %3658 = vmatprep.subr.bf16.mxu0 %v3595
    %3659 = vmatpush1.bf16.msra.mxu0 %v3594
    %3660 = vmatprep.subr.bf16.mxu0 %v3597
    %3661 = vmatpush1.bf16.msra.mxu0 %v3596
    %3662 = vmatprep.subr.bf16.mxu0 %v3599
    %3663 = vmatpush1.bf16.msra.mxu0 %v3598
    %3664 = vmatprep.subr.bf16.mxu0 %v3601
    %3665 = vmatpush1.bf16.msra.mxu0 %v3600
    %3666 = vmatprep.subr.bf16.mxu0 %v3603
    %3667 = vmatpush1.bf16.msra.mxu0 %v3602
    %3668 = vmatprep.subr.bf16.mxu0 %v3605
    %3669 = vmatpush1.bf16.msra.mxu0 %v3604
    %3670 = vmatprep.subr.bf16.mxu0 %v3607
    %3671 = vmatpush1.bf16.msra.mxu0 %v3606
    %3672 = vmatprep.subr.bf16.mxu0 %v3609
    %3673 = vmatpush1.bf16.msra.mxu0 %v3608
    %3674 = vmatprep.mubr.bf16.mxu0 %v3437
    %3675 = vmatmul.mubr.bf16.gmra.mrb[0].mxu0 %v3436
    %v3676 = vpop.f32.mrb[0].mxu0
    %v3677 = vadd.f32 %v3475, %v3676
    %v3678 = vpop.f32.mrb[0].mxu0
    %v3679 = vadd.f32 %v3479, %v3678
    %v3680 = vpop.f32.mrb[0].mxu0
    %v3681 = vpop.f32.mrb[0].mxu0
    %3682 = vdwg.mxu0
    %v3683 = vadd.f32 %v3677, %v3376
    %v3684 = vadd.f32 %v3679, %v3378
    %v3685 = vadd.f32 %v3683, %v3684
    %3686 = vadd.xlane.f32.xlu0 %v3685
    %v3687 = vpop.xlane.xlu0 %3686
    %v3688 = vmul.f32 %v3687, %v2364
    %v3689 = vsub.f32 %v3683, %v3688
    %v3690 = vsub.f32 %v3684, %v3688
    %v3691 = vmul.f32 %v3689, %v3689
    %v3692 = vmul.f32 %v3690, %v3690
    %v3693 = vadd.f32 %v3691, %v3692
    %3694 = vadd.xlane.f32.xlu0 %v3693
    %v3695 = vpop.xlane.xlu0 %3694
    %v3696 = vmul.f32 %v3695, %v2364
    %v3697 = vadd.f32 %v3696, 1e-05
    %v3698 = vrsqrt.pop %v3697
    %v3699 = vmul.f32 %v3689, %v3698
    %v3700 = vmul.f32 %v3690, %v3698
    %v3701 = vld [vmem:[%s13] sm:$0x3]
    %v3703 = vlaneseq
    %v3704 = vshrl.u32 %v3703, 7
    %v3705 = vsub.s32 0, %v3704
    %v3706 = vrot.slane %v3701, %v3705
    %v3707 = vlaneseq
    %v3708 = vshrl.u32 %v3707, 7
    %v3709 = vsub.s32 1, %v3708
    %v3710 = vrot.slane %v3701, %v3709
    %v3713 = vmul.f32 %v3699, %v3706
    %v3714 = vmul.f32 %v3700, %v3710
    %v3715 = vld [vmem:[%s14] sm:$0x3]
    %v3717 = vlaneseq
    %v3718 = vshrl.u32 %v3717, 7
    %v3719 = vsub.s32 0, %v3718
    %v3720 = vrot.slane %v3715, %v3719
    %v3721 = vlaneseq
    %v3722 = vshrl.u32 %v3721, 7
    %v3723 = vsub.s32 1, %v3722
    %v3724 = vrot.slane %v3715, %v3723
    %v3727 = vadd.f32 %v3713, %v3720
    %v3728 = vadd.f32 %v3714, %v3724
    %v3729 = vstv %s106
    %v3730 = vmul.f32 %v2404, %v3729
    %v3731 = vmul.f32 %v2405, %v3729
    %v3732 = vstv %s107
    %v3733 = vmul.f32 %v3727, %v3732
    %v3734 = vmul.f32 %v3728, %v3732
    %v3735 = vmul.f32 %v3730, %v3730
    %v3736 = vmul.f32 %v3731, %v3731
    %v3737 = vadd.f32 %v3735, %v3736
    %3738 = vadd.xlane.f32.xlu0 %v3737
    %v3739 = vpop.xlane.xlu0 %3738
    %v3740 = vrsqrt.pop %v3739
    %v3741 = vmul.f32 %v3739, %v3740
    %vm3742 = vcmp.eq.f32.partialorder %v3739, inf
    %v3743 = vsel %vm3742, %v3739, %v3741
    %vm3744 = vcmp.eq.f32.partialorder %v3739, 0.0
    %v3745 = vand.u32 %v3739, 2147483648
    %v3746 = vsel %vm3744, %v3745, %v3743
    %v3747 = vstv %s117
    %v3748 = vmul.f32 %v3747, %v3746
    %v3749 = vmax.f32 %v3748, 1e-08
    %v3750 = vmin.f32 %v3749, 11.090355
    %v3751 = vmax.f32 %v3750, 0.001
    %v3752 = vmul.f32 %v3751, 1.442695
    %v3753 = vpow.pop %v3752
    %v3754 = vrcp.pop %v3753
    %v3755 = vmul.f32 1.0, %v3754
    %v3756 = vsub.f32 %v3753, %v3755
    %v3757 = vmul.f32 %v3756, 0.5
    %v3758 = vmul.f32 %v3750, %v3750
    %v3759 = vmul.f32 %v3758, 0.008333334
    %v3760 = vadd.f32 %v3759, 0.16666667
    %v3761 = vmul.f32 %v3758, %v3760
    %v3762 = vadd.f32 %v3761, 1.0
    %v3763 = vmul.f32 %v3750, %v3762
    %vm3764 = vcmp.lt.f32.partialorder %v3750, 0.001
    %v3765 = vsel %vm3764, %v3763, %v3757
    %v3766 = vrcp.pop %v3749
    %v3767 = vmul.f32 %v3765, %v3766
    %v3768 = vmul.f32 %v3767, %v3730
    %v3769 = vmul.f32 %v3767, %v3731
    %v3770 = vmul.f32 %v3733, %v3733
    %v3771 = vmul.f32 %v3734, %v3734
    %v3772 = vadd.f32 %v3770, %v3771
    %3773 = vadd.xlane.f32.xlu0 %v3772
    %v3774 = vpop.xlane.xlu0 %3773
    %v3775 = vrsqrt.pop %v3774
    %v3776 = vmul.f32 %v3774, %v3775
    %vm3777 = vcmp.eq.f32.partialorder %v3774, inf
    %v3778 = vsel %vm3777, %v3774, %v3776
    %vm3779 = vcmp.eq.f32.partialorder %v3774, 0.0
    %v3780 = vand.u32 %v3774, 2147483648
    %v3781 = vsel %vm3779, %v3780, %v3778
    %v3782 = vmul.f32 %v3747, %v3781
    %v3783 = vmax.f32 %v3782, 1e-08
    %v3784 = vmin.f32 %v3783, 11.090355
    %v3785 = vmax.f32 %v3784, 0.001
    %v3786 = vmul.f32 %v3785, 1.442695
    %v3787 = vpow.pop %v3786
    %v3788 = vrcp.pop %v3787
    %v3789 = vmul.f32 1.0, %v3788
    %v3790 = vsub.f32 %v3787, %v3789
    %v3791 = vmul.f32 %v3790, 0.5
    %v3792 = vmul.f32 %v3784, %v3784
    %v3793 = vmul.f32 %v3792, 0.008333334
    %v3794 = vadd.f32 %v3793, 0.16666667
    %v3795 = vmul.f32 %v3792, %v3794
    %v3796 = vadd.f32 %v3795, 1.0
    %v3797 = vmul.f32 %v3784, %v3796
    %vm3798 = vcmp.lt.f32.partialorder %v3784, 0.001
    %v3799 = vsel %vm3798, %v3797, %v3791
    %v3800 = vrcp.pop %v3783
    %v3801 = vmul.f32 %v3799, %v3800
    %v3802 = vmul.f32 %v3801, %v3733
    %v3803 = vmul.f32 %v3801, %v3734
    %v3804 = vmul.f32 %v3802, %v3802
    %v3805 = vmul.f32 %v3803, %v3803
    %v3806 = vadd.f32 %v3804, %v3805
    %3807 = vadd.xlane.f32.xlu0 %v3806
    %v3808 = vpop.xlane.xlu0 %3807
    %v3809 = vmul.f32 %v3768, %v3768
    %v3810 = vmul.f32 %v3769, %v3769
    %v3811 = vadd.f32 %v3809, %v3810
    %3812 = vadd.xlane.f32.xlu0 %v3811
    %v3813 = vpop.xlane.xlu0 %3812
    %v3814 = vstv %s105
    %v3815 = vrcp.pop %v3814
    %s3816 = vtos %v3815
    %v3817 = vstv %s3816
    %v3818 = vadd.f32 %v3817, %v3808
    %v3819 = vrsqrt.pop %v3818
    %v3820 = vmul.f32 %v3818, %v3819
    %vm3821 = vcmp.eq.f32.partialorder %v3818, inf
    %v3822 = vsel %vm3821, %v3818, %v3820
    %vm3823 = vcmp.eq.f32.partialorder %v3818, 0.0
    %v3824 = vand.u32 %v3818, 2147483648
    %v3825 = vsel %vm3823, %v3824, %v3822
    %v3826 = vadd.f32 %v3817, %v3813
    %v3827 = vrsqrt.pop %v3826
    %v3828 = vmul.f32 %v3826, %v3827
    %vm3829 = vcmp.eq.f32.partialorder %v3826, inf
    %v3830 = vsel %vm3829, %v3826, %v3828
    %vm3831 = vcmp.eq.f32.partialorder %v3826, 0.0
    %v3832 = vand.u32 %v3826, 2147483648
    %v3833 = vsel %vm3831, %v3832, %v3830
    %3834 = vmatprep.subr.mxu0 %v3769
    %3835 = vmatpush1.xpose.msra.mxu0 %v3768
    %3836 = vmatprep.subr.mxu0 0.0
    %3837 = vmatpush1.xpose.msra.mxu0 0.0
    %3838 = vmatprep.subr.mxu0 0.0
    %3839 = vmatpush1.xpose.msra.mxu0 0.0
    %3840 = vmatprep.subr.mxu0 0.0
    %3841 = vmatpush1.xpose.msra.mxu0 0.0
    %3842 = vmatprep.subr.mxu0 0.0
    %3843 = vmatpush1.xpose.msra.mxu0 0.0
    %3844 = vmatprep.subr.mxu0 0.0
    %3845 = vmatpush1.xpose.msra.mxu0 0.0
    %3846 = vmatprep.subr.mxu0 0.0
    %3847 = vmatpush1.xpose.msra.mxu0 0.0
    %3848 = vmatprep.subr.mxu0 0.0
    %3849 = vmatpush1.xpose.msra.mxu0 0.0
    %3850 = vmatprep.subr.mxu0 0.0
    %3851 = vmatpush1.xpose.msra.mxu0 0.0
    %3852 = vmatprep.subr.mxu0 0.0
    %3853 = vmatpush1.xpose.msra.mxu0 0.0
    %3854 = vmatprep.subr.mxu0 0.0
    %3855 = vmatpush1.xpose.msra.mxu0 0.0
    %3856 = vmatprep.subr.mxu0 0.0
    %3857 = vmatpush1.xpose.msra.mxu0 0.0
    %3858 = vmatprep.subr.mxu0 0.0
    %3859 = vmatpush1.xpose.msra.mxu0 0.0
    %3860 = vmatprep.subr.mxu0 0.0
    %3861 = vmatpush1.xpose.msra.mxu0 0.0
    %3862 = vmatprep.subr.mxu0 0.0
    %3863 = vmatpush1.xpose.msra.mxu0 0.0
    %3864 = vmatprep.subr.mxu0 0.0
    %3865 = vmatpush1.xpose.msra.mxu0 0.0
    %3866 = vmatprep.subr.mxu0 0.0
    %3867 = vmatpush1.xpose.msra.mxu0 0.0
    %3868 = vmatprep.subr.mxu0 0.0
    %3869 = vmatpush1.xpose.msra.mxu0 0.0
    %3870 = vmatprep.subr.mxu0 0.0
    %3871 = vmatpush1.xpose.msra.mxu0 0.0
    %3872 = vmatprep.subr.mxu0 0.0
    %3873 = vmatpush1.xpose.msra.mxu0 0.0
    %3874 = vmatprep.subr.mxu0 0.0
    %3875 = vmatpush1.xpose.msra.mxu0 0.0
    %3876 = vmatprep.subr.mxu0 0.0
    %3877 = vmatpush1.xpose.msra.mxu0 0.0
    %3878 = vmatprep.subr.mxu0 0.0
    %3879 = vmatpush1.xpose.msra.mxu0 0.0
    %3880 = vmatprep.subr.mxu0 0.0
    %3881 = vmatpush1.xpose.msra.mxu0 0.0
    %3882 = vmatprep.subr.mxu0 0.0
    %3883 = vmatpush1.xpose.msra.mxu0 0.0
    %3884 = vmatprep.subr.mxu0 0.0
    %3885 = vmatpush1.xpose.msra.mxu0 0.0
    %3886 = vmatprep.subr.mxu0 0.0
    %3887 = vmatpush1.xpose.msra.mxu0 0.0
    %3888 = vmatprep.subr.mxu0 0.0
    %3889 = vmatpush1.xpose.msra.mxu0 0.0
    %3890 = vmatprep.subr.mxu0 0.0
    %3891 = vmatpush1.xpose.msra.mxu0 0.0
    %3892 = vmatprep.subr.mxu0 0.0
    %3893 = vmatpush1.xpose.msra.mxu0 0.0
    %3894 = vmatprep.subr.mxu0 0.0
    %3895 = vmatpush1.xpose.msra.mxu0 0.0
    %3896 = vmatprep.subr.mxu0 0.0
    %3897 = vmatpush1.xpose.msra.mxu0 0.0
    %3898 = vmatprep.mubr.f32.mxu0 %v3803
    %3899 = vmatmul.mubr.f32.gmra.mrb[0].mxu0 %v3802
    %v3900 = vpop.f32.mrb[0].mxu0
    %v3901 = vadd.f32 0.0, %v3900
    %v3902 = vpop.f32.mrb[0].mxu0
    %3903 = vdwg.mxu0
    %v3905 = vlaneseq
    %v3906 = vand.u32 %v3905, 127
    %v3907 = vlaneseq
    %v3908 = vshrl.u32 %v3907, 7
    %v3909 = vsub.s32 %v3906, %v3908
    %v3910 = vrot.slane %v3833, %v3909
    %vm3911 = vcmask 1042434
    %v3912 = vsel %vm3911, %v3910, %v3910
    %vm3913 = vcmask 1043459
    %v3914 = vsel %vm3913, %v3910, %v3912
    %vm3915 = vcmask 1044484
    %v3916 = vsel %vm3915, %v3910, %v3914
    %vm3917 = vcmask 1045509
    %v3918 = vsel %vm3917, %v3910, %v3916
    %vm3919 = vcmask 1046534
    %v3920 = vsel %vm3919, %v3910, %v3918
    %vm3921 = vcmask 1047559
    %v3922 = vsel %vm3921, %v3910, %v3920
    %v3924 = vmul.f32 %v3825, %v3922
    %s3925 = ssub.f32 0.0, %s105
    %v3926 = vsub.f32 %v3901, %v3924
    %v3927 = vstv %s3925
    %v3928 = vmul.f32 %v3927, %v3926
    %v3929 = vmax.f32 %v3928, 1.0
    %v3930 = vsub.f32 %v3929, 1.0
    %v3931 = vmax.f32 %v3930, 0.0
    %v3932 = vadd.f32 %v3931, 2.0
    %v3933 = vmul.f32 %v3931, %v3932
    %v3934 = vrsqrt.pop %v3933
    %v3935 = vmul.f32 %v3933, %v3934
    %vm3936 = vcmp.eq.f32.partialorder %v3933, inf
    %v3937 = vsel %vm3936, %v3933, %v3935
    %vm3938 = vcmp.eq.f32.partialorder %v3933, 0.0
    %v3939 = vand.u32 %v3933, 2147483648
    %v3940 = vsel %vm3938, %v3939, %v3937
    %v3941 = vadd.f32 %v3931, %v3940
    %v3942 = vadd.f32 %v3941, 1.0
    %v3943 = vlog2.pop %v3942
    %v3944 = vmul.f32 %v3943, 0.6931472
    %v3945 = vrcp.pop %v3747
    %v3946 = vmul.f32 %v3944, %v3945
    %v3947 = vsub.f32 0.0, %v3946
    %v3948 = vstv %s108
    %v3949 = vmul.f32 %v3947, %v3948
    %v3950 = vmul.f32 %v3802, %v3768
    %v3951 = vmul.f32 %v3803, %v3769
    %v3952 = vadd.f32 %v3950, %v3951
    %3953 = vadd.xlane.f32.xlu0 %v3952
    %v3954 = vpop.xlane.xlu0 %3953
    %v3955 = vmul.f32 %v3825, %v3833
    %v3956 = vsub.f32 %v3954, %v3955
    %v3957 = vmul.f32 %v3927, %v3956
    %v3958 = vmax.f32 %v3957, 1.0
    %v3959 = vsub.f32 %v3958, 1.0
    %v3960 = vmax.f32 %v3959, 0.0
    %v3961 = vadd.f32 %v3960, 2.0
    %v3962 = vmul.f32 %v3960, %v3961
    %v3963 = vrsqrt.pop %v3962
    %v3964 = vmul.f32 %v3962, %v3963
    %vm3965 = vcmp.eq.f32.partialorder %v3962, inf
    %v3966 = vsel %vm3965, %v3962, %v3964
    %vm3967 = vcmp.eq.f32.partialorder %v3962, 0.0
    %v3968 = vand.u32 %v3962, 2147483648
    %v3969 = vsel %vm3967, %v3968, %v3966
    %v3970 = vadd.f32 %v3960, %v3969
    %v3971 = vadd.f32 %v3970, 1.0
    %v3972 = vlog2.pop %v3971
    %v3973 = vmul.f32 %v3972, 0.6931472
    %v3974 = vmul.f32 %v3973, %v3945
    %v3975 = vsub.f32 0.0, %v3974
    %v3976 = vmul.f32 %v3975, %v3948
    %vm3977 = vcmask 64512
    %v3978 = vsel %vm3977, %v3949, -inf
    %3979 = vmax.xlane.f32.xlu0 %v3978
    %v3980 = vpop.xlane.xlu0 %3979
    %v3981 = vsub.f32 %v3949, %v3980
    %v3982 = vmul.f32 %v3981, 1.442695
    %v3983 = vpow.pop %v3982
    %v3984 = vsel %vm3977, %v3983, 0.0
    %3985 = vadd.xlane.f32.xlu0 %v3984
    %v3986 = vpop.xlane.xlu0 %3985
    %v3987 = vlog2.pop %v3986
    %v3988 = vmul.f32 %v3987, 0.6931472
    %v3989 = vadd.f32 %v3988, %v3980
    %v3990 = vrot.slane %v3978, 4
    %v3991 = vmax.f32 %v3978, %v3990
    %v3992 = vrot.slane %v3991, 2
    %v3993 = vmax.f32 %v3991, %v3992
    %v3994 = vrot.slane %v3993, 1
    %v3995 = vmax.f32 %v3993, %v3994
    %v3996 = vsub.f32 %v3949, %v3995
    %v3997 = vmul.f32 %v3996, 1.442695
    %v3998 = vpow.pop %v3997
    %v3999 = vsel %vm3977, %v3998, 0.0
    %v4000 = vrot.slane %v3999, 4
    %v4001 = vadd.f32 %v3999, %v4000
    %v4002 = vrot.slane %v4001, 2
    %v4003 = vadd.f32 %v4001, %v4002
    %v4004 = vrot.slane %v4003, 1
    %v4005 = vadd.f32 %v4003, %v4004
    %v4006 = vlog2.pop %v4005
    %v4007 = vmul.f32 %v4006, 0.6931472
    %v4008 = vadd.f32 %v4007, %v3995
    %vm4009 = vcmask 7168
    %v4010 = vsel %vm4009, %v3976, 0.0
    %4011 = vadd.xlane.f32.xlu0 %v4010
    %v4012 = vpop.xlane.xlu0 %4011
    %v4013 = vrot.slane %v4012, 4
    %v4014 = vadd.f32 %v4012, %v4013
    %v4015 = vrot.slane %v4014, 2
    %v4016 = vadd.f32 %v4014, %v4015
    %v4017 = vrot.slane %v4016, 1
    %v4018 = vadd.f32 %v4016, %v4017
    %s4019 = vtos %v4018
    %v4020 = vrcp.pop 8.0
    %s4021 = vtos %v4020
    %s4022 = smul.f32 %s4019, %s4021
    %v4023 = vsel %vm4009, %v3989, 0.0
    %4024 = vadd.xlane.f32.xlu0 %v4023
    %v4025 = vpop.xlane.xlu0 %4024
    %v4026 = vrot.slane %v4025, 4
    %v4027 = vadd.f32 %v4025, %v4026
    %v4028 = vrot.slane %v4027, 2
    %v4029 = vadd.f32 %v4027, %v4028
    %v4030 = vrot.slane %v4029, 1
    %v4031 = vadd.f32 %v4029, %v4030
    %s4032 = vtos %v4031
    %v4033 = vrcp.pop 8.0
    %s4034 = vtos %v4033
    %s4035 = smul.f32 %s4032, %s4034
    %vm4036 = vcmask 57344
    %v4037 = vsel %vm4036, %v4008, 0.0
    %4038 = vadd.xlane.f32.xlu0 %v4037
    %v4039 = vpop.xlane.xlu0 %4038
    %v4040 = vrot.slane %v4039, 4
    %v4041 = vadd.f32 %v4039, %v4040
    %v4042 = vrot.slane %v4041, 2
    %v4043 = vadd.f32 %v4041, %v4042
    %v4044 = vrot.slane %v4043, 1
    %v4045 = vadd.f32 %v4043, %v4044
    %s4046 = vtos %v4045
    %v4047 = vrcp.pop 8.0
    %s4048 = vtos %v4047
    %s4049 = smul.f32 %s4046, %s4048
    %s4050 = sadd.f32 %s4035, %s4049
    %s4051 = smul.f32 %s4050, 0.5
    %s4052 = ssub.f32 %s4051, %s4022
    %v4053 = vstv %s105
    %v4054 = vmul.f32 %v4053, %v3956
    %v4055 = vmul.f32 %v4054, %v3825
    %v4056 = vadd.f32 %v3833, %v4055
    %v4057 = vmul.f32 %v4054, %v4054
    %v4058 = vsub.f32 %v4057, 1.0
    %v4059 = vmax.f32 %v4058, 1e-08
    %v4060 = vrsqrt.pop %v4059
    %v4061 = vmul.f32 %v4059, %v4060
    %vm4062 = vcmp.eq.f32.partialorder %v4059, inf
    %v4063 = vsel %vm4062, %v4059, %v4061
    %vm4064 = vcmp.eq.f32.partialorder %v4059, 0.0
    %v4065 = vand.u32 %v4059, 2147483648
    %v4066 = vsel %vm4064, %v4065, %v4063
    %v4067 = vrsqrt.pop %v3808
    %v4068 = vmul.f32 %v3808, %v4067
    %vm4069 = vcmp.eq.f32.partialorder %v3808, inf
    %v4070 = vsel %vm4069, %v3808, %v4068
    %vm4071 = vcmp.eq.f32.partialorder %v3808, 0.0
    %v4072 = vand.u32 %v3808, 2147483648
    %v4073 = vsel %vm4071, %v4072, %v4070
    %v4074 = vmul.f32 %v4073, %v4066
    %v4075 = vadd.f32 %v4074, 1e-08
    %v4076 = vrcp.pop %v4075
    %v4077 = vmul.f32 %v4056, %v4076
    %v4078 = vmax.f32 %v4077, -1.0
    %v4079 = vmin.f32 %v4078, 1.0
    %v4080 = vand.u32 2147483647, %v4079
    %v4081 = vmul.f32 %v4080, -0.0012624911
    %v4082 = vadd.f32 %v4081, 0.00667009
    %v4083 = vmul.f32 %v4082, %v4080
    %v4084 = vadd.f32 %v4083, -0.017088126
    %v4085 = vmul.f32 %v4084, %v4080
    %v4086 = vadd.f32 %v4085, 0.03089188
    %v4087 = vmul.f32 %v4086, %v4080
    %v4088 = vadd.f32 %v4087, -0.050174303
    %v4089 = vmul.f32 %v4088, %v4080
    %v4090 = vadd.f32 %v4089, 0.08897899
    %v4091 = vmul.f32 %v4090, %v4080
    %v4092 = vadd.f32 %v4091, -0.2145988
    %v4093 = vmul.f32 %v4092, %v4080
    %v4094 = vadd.f32 %v4093, 1.5707963
    %v4095 = vsub.f32 1.0, %v4080
    %v4096 = vmax.f32 %v4095, 0.0
    %v4097 = vrsqrt.pop %v4096
    %v4098 = vmul.f32 %v4096, %v4097
    %vm4099 = vcmp.eq.f32.partialorder %v4096, inf
    %v4100 = vsel %vm4099, %v4096, %v4098
    %vm4101 = vcmp.eq.f32.partialorder %v4096, 0.0
    %v4102 = vand.u32 %v4096, 2147483648
    %v4103 = vsel %vm4101, %v4102, %v4100
    %v4104 = vmul.f32 %v4103, %v4094
    %vm4105 = vcmp.lt.f32.partialorder %v4079, 0.0
    %v4106 = vsub.f32 3.1415927, %v4104
    %v4107 = vsel %vm4105, %v4106, %v4104
    %v4108 = vmul.f32 %v4073, %v3747
    %v4109 = vadd.f32 %v4108, 1e-08
    %v4110 = vrcp.pop %v4109
    %v4111 = vmul.f32 0.2, %v4110
    %v4112 = vmax.f32 %v4111, -1.0
    %v4113 = vmin.f32 %v4112, 1.0
    %v4114 = vand.u32 2147483647, %v4113
    %v4115 = vmul.f32 %v4114, -0.0012624911
    %v4116 = vadd.f32 %v4115, 0.00667009
    %v4117 = vmul.f32 %v4116, %v4114
    %v4118 = vadd.f32 %v4117, -0.017088126
    %v4119 = vmul.f32 %v4118, %v4114
    %v4120 = vadd.f32 %v4119, 0.03089188
    %v4121 = vmul.f32 %v4120, %v4114
    %v4122 = vadd.f32 %v4121, -0.050174303
    %v4123 = vmul.f32 %v4122, %v4114
    %v4124 = vadd.f32 %v4123, 0.08897899
    %v4125 = vmul.f32 %v4124, %v4114
    %v4126 = vadd.f32 %v4125, -0.2145988
    %v4127 = vmul.f32 %v4126, %v4114
    %v4128 = vadd.f32 %v4127, 1.5707963
    %v4129 = vsub.f32 1.0, %v4114
    %v4130 = vmax.f32 %v4129, 0.0
    %v4131 = vrsqrt.pop %v4130
    %v4132 = vmul.f32 %v4130, %v4131
    %vm4133 = vcmp.eq.f32.partialorder %v4130, inf
    %v4134 = vsel %vm4133, %v4130, %v4132
    %vm4135 = vcmp.eq.f32.partialorder %v4130, 0.0
    %v4136 = vand.u32 %v4130, 2147483648
    %v4137 = vsel %vm4135, %v4136, %v4134
    %v4138 = vmul.f32 %v4137, %v4128
    %vm4139 = vcmp.lt.f32.partialorder %v4113, 0.0
    %v4140 = vsub.f32 3.1415927, %v4138
    %v4141 = vsel %vm4139, %v4140, %v4138
    %v4142 = vsub.f32 1.5707964, %v4141
    %v4143 = vsub.f32 %v4107, %v4142
    %v4144 = vmax.f32 %v4143, 0.0
    %v4145 = vsel %vm4009, %v4144, 0.0
    %4146 = vadd.xlane.f32.xlu0 %v4145
    %v4147 = vpop.xlane.xlu0 %4146
    %v4148 = vrot.slane %v4147, 4
    %v4149 = vadd.f32 %v4147, %v4148
    %v4150 = vrot.slane %v4149, 2
    %v4151 = vadd.f32 %v4149, %v4150
    %v4152 = vrot.slane %v4151, 1
    %v4153 = vadd.f32 %v4151, %v4152
    %s4154 = vtos %v4153
    %v4155 = vrcp.pop 8.0
    %s4156 = vtos %v4155
    %s4157 = smul.f32 %s4154, %s4156
    %s4158 = smul.f32 %s4157, 0.2
    %s4159 = sadd.f32 %s4052, %s4158
    %s4160 = scalar_lea.smem [#allocation10], 0
    %4161 = sst [smem:[%s4160]] %s4159
    // Predicated region
    $region78: #{hyperbolic_forward.1} parent=1 // pred_check
      _
    $region79: #{hyperbolic_forward.1} parent=1 // pred_check_branch
      %4163 = sbr.rel (0) target = $region81
    $region80: #{hyperbolic_forward.1} parent=1 // pred_region
      %s4165 = ssub.s32 16, 16
      %4166 = vsyncadd [#allocation4], %s4165
      %4169 = dma.smem_to_hbm [#allocation10], 16, %s15, [#allocation4]
    $region81: #{hyperbolic_forward.1} parent=1 // pred_fallthru
      _
    // Predicated region
    $region82: #{hyperbolic_forward.1} parent=1 // pred_check
      _
    $region83: #{hyperbolic_forward.1} parent=1 // pred_check_branch
      %4171 = sbr.rel (0) target = $region85
    $region84: #{hyperbolic_forward.1} parent=1 // pred_region
      %4172 = dma.done [#allocation4], 16
    $region85: #{hyperbolic_forward.1} parent=1 // pred_fallthru
      _
    %4173 = sfence
    %4174 = vsyncpa [#allocation3], 1
    %4175 = vsyncpa [#allocation8], 1
    %4176 = vsyncpa [#allocation4], 1
    %4177 = vsyncpa [#allocation5], 1

</llo_original>
